<compile_context>
chip_gen: v5e
topology: v5e:2x2
jax: 0.10.0
libtpu: 0.0.40
codegen_flags: <defaults>
</compile_context>

<pallas_src>
import functools
import math

import jax
import jax.numpy as jnp
from jax import lax
from jax.experimental import pallas as pl
from jax.experimental.pallas import tpu as pltpu

_EPS_ATTN = 1e-6
_EPS_LN = 1e-5
# Approximate EUP reciprocal for the attention normalizer (small relative error
# vs the exact divide of the PyTorch reference). Set False for exact parity.
_APPROX_RECIPROCAL = True
_VMEM_LIMIT_BYTES = 32 * 1024 * 1024


# ----------------------------------------------------------------------------
# In-kernel helpers (operate on traced values inside the fused kernel)
# ----------------------------------------------------------------------------

def _elu_feature_map(x):
    # elu(x) + 1  (fast_transformers linear-attention feature map)
    return jnp.where(x > 0, x + 1.0, jnp.exp(x))


def _layernorm(x, w, b, eps=_EPS_LN):
    # x: (M, D); w, b: (1, D)
    mean = jnp.mean(x, axis=-1, keepdims=True)
    var = jnp.mean((x - mean) ** 2, axis=-1, keepdims=True)
    return (x - mean) * lax.rsqrt(var + eps) * w + b


def _linear_attention_proj(q, kf, v, wo, n_heads, mask=None):
    """Multi-head linear attention fused with its output projection.

    q:  (B, L, D)  raw queries (feature map applied here, once)
    kf: (B, S, D)  feature-mapped keys  (elu(k)+1, precomputed by caller)
    v:  (B, S, D)  values
    wo: (D, D)     output projection weight
    mask: optional (L, S) float mask (1/0), identical for every head.
    Returns (B*L, D) == concat_heads(attention) @ wo   (no bias).
    """
    B, L, D = q.shape
    dh = D // n_heads
    qf = _elu_feature_map(q)
    out = None
    for h in range(n_heads):
        lo, hi = h * dh, (h + 1) * dh
        s = jnp.einsum("bld,bsd->bls", qf[:, :, lo:hi], kf[:, :, lo:hi],
                       preferred_element_type=jnp.float32)      # (B, L, S)
        if mask is not None:
            s = s * mask
        denom = jnp.sum(s, axis=-1, keepdims=True) + _EPS_ATTN
        if _APPROX_RECIPROCAL:
            s = s * pl.reciprocal(denom, approx=True)
        else:
            s = s / denom
        o_h = jnp.einsum("bls,bsm->blm", s, v[:, :, lo:hi],
                         preferred_element_type=jnp.float32)     # (B, L, dh)
        # Per-head slice of the output projection: equivalent to
        # concat(heads) @ wo, without the lane-sparse concatenate.
        part = jnp.dot(o_h.reshape(B * L, dh), wo[lo:hi, :],
                       preferred_element_type=jnp.float32)       # (B*L, D)
        out = part if out is None else out + part
    return out


def _encoder_layer(x, B, L, lp, n_heads):
    """One fast_transformers TransformerEncoderLayer. x: (B*L, D)."""
    D = x.shape[1]
    at = lp["attn"]
    # fused QKV projection
    qkv = jnp.dot(x, at["wqkv"], preferred_element_type=jnp.float32) + at["bqkv"]
    q = qkv[:, 0:D].reshape(B, L, D)
    kf = _elu_feature_map(qkv[:, D:2 * D]).reshape(B, L, D)
    v = qkv[:, 2 * D:3 * D].reshape(B, L, D)
    attn = _linear_attention_proj(q, kf, v, at["wo"], n_heads, mask=None)
    x = _layernorm(x + attn + at["bo"], lp["n1w"], lp["n1b"])
    # feed-forward
    y = jnp.maximum(
        jnp.dot(x, lp["ff1w"], preferred_element_type=jnp.float32) + lp["ff1b"],
        0.0)
    y = jnp.dot(y, lp["ff2w"], preferred_element_type=jnp.float32) + lp["ff2b"]
    return _layernorm(x + y, lp["n2w"], lp["n2b"])


def _decoder_layer(x, B, L, lp, cross_kf, cross_v, causal_mask, n_heads):
    """One fast_transformers TransformerDecoderLayer. x: (B*L, D)."""
    D = x.shape[1]
    sa, ca = lp["self_attn"], lp["cross_attn"]

    # causal linear self attention (fused QKV)
    qkv = jnp.dot(x, sa["wqkv"], preferred_element_type=jnp.float32) + sa["bqkv"]
    q = qkv[:, 0:D].reshape(B, L, D)
    kf = _elu_feature_map(qkv[:, D:2 * D]).reshape(B, L, D)
    v = qkv[:, 2 * D:3 * D].reshape(B, L, D)
    attn = _linear_attention_proj(q, kf, v, sa["wo"], n_heads, mask=causal_mask)
    x = _layernorm(x + attn + sa["bo"], lp["n1w"], lp["n1b"])

    # cross linear attention: K/V features of memory precomputed per layer
    q = (jnp.dot(x, ca["wq"], preferred_element_type=jnp.float32)
         + ca["bq"]).reshape(B, L, D)
    attn = _linear_attention_proj(q, cross_kf, cross_v, ca["wo"], n_heads,
                                  mask=None)
    x = _layernorm(x + attn + ca["bo"], lp["n2w"], lp["n2b"])

    # feed-forward
    y = jnp.maximum(
        jnp.dot(x, lp["ff1w"], preferred_element_type=jnp.float32) + lp["ff1b"],
        0.0)
    y = jnp.dot(y, lp["ff2w"], preferred_element_type=jnp.float32) + lp["ff2b"]
    return _layernorm(x + y, lp["n3w"], lp["n3b"])


# ----------------------------------------------------------------------------
# The single fused forward kernel
# ----------------------------------------------------------------------------

def _forward_kernel(*refs, treedef, n_params, n_heads, tf_depth, n_layers):
    src_ref, tgt_ref = refs[0], refs[1]
    o_ref = refs[2 + n_params]
    # Rebuild the parameter pytree from the flat ref list (values now in VMEM).
    p = jax.tree_util.tree_unflatten(
        treedef, [r[...] for r in refs[2:2 + n_params]])

    B, Ls, Fi = src_ref.shape
    _, Lt, Fo = tgt_ref.shape
    D = p["src_embed_w"].shape[1]

    # ===================== encoder =====================
    x = (jnp.dot(src_ref[...].reshape(B * Ls, Fi), p["src_embed_w"],
                 preferred_element_type=jnp.float32) + p["src_embed_b"])
    x = (x.reshape(B, Ls, D) + p["pe_src"][None, :, :]).reshape(B * Ls, D)
    for _ in range(tf_depth):
        for li in range(n_layers):
            x = _encoder_layer(x, B, Ls, p["encoder_layers"][li], n_heads)
        x = _layernorm(x, p["enc_norm_w"], p["enc_norm_b"])   # per-pass stack norm
    memory = x                                                # (B*Ls, D)

    # ===== cross-attention K/V of memory: once per decoder layer, reused =====
    cross_kv = []
    for li in range(n_layers):
        ca = p["decoder_layers"][li]["cross_attn"]
        kv = (jnp.dot(memory, ca["wkv"], preferred_element_type=jnp.float32)
              + ca["bkv"])
        cross_kv.append((_elu_feature_map(kv[:, 0:D]).reshape(B, Ls, D),
                         kv[:, D:2 * D].reshape(B, Ls, D)))

    # ===== causal mask (computed exactly once per forward) =====
    row = lax.broadcasted_iota(jnp.int32, (Lt, Lt), 0)
    col = lax.broadcasted_iota(jnp.int32, (Lt, Lt), 1)
    causal_mask = (col <= row).astype(jnp.float32)

    # ===================== decoder =====================
    x = (jnp.dot(tgt_ref[...].reshape(B * Lt, Fo), p["tgt_embed_w"],
                 preferred_element_type=jnp.float32) + p["tgt_embed_b"])
    x = (x.reshape(B, Lt, D) + p["pe_tgt"][None, :, :]).reshape(B * Lt, D)
    for _ in range(tf_depth):
        for li in range(n_layers):
            x = _decoder_layer(x, B, Lt, p["decoder_layers"][li],
                               cross_kv[li][0], cross_kv[li][1],
                               causal_mask, n_heads)
        x = _layernorm(x, p["dec_norm_w"], p["dec_norm_b"])   # per-pass stack norm

    # ===================== final projection =====================
    out = (jnp.dot(x, p["final_w"], preferred_element_type=jnp.float32)
           + p["final_b"])
    o_ref[...] = out.reshape(B, Lt, Fo).astype(o_ref.dtype)


# ----------------------------------------------------------------------------
# Host wrapper: ONE pallas_call for the whole forward pass
# ----------------------------------------------------------------------------

def forward(params, src, tgt, cfg):
    B, Ls, _ = src.shape
    _, Lt, Fo = tgt.shape

    kp = {k: v for k, v in params.items() if k != "pe"}
    kp["pe_src"] = params["pe"][:Ls]
    kp["pe_tgt"] = params["pe"][:Lt]
    flat, treedef = jax.tree_util.tree_flatten(kp)

    kern = functools.partial(
        _forward_kernel, treedef=treedef, n_params=len(flat),
        n_heads=cfg["n_heads"], tf_depth=cfg["tf_depth"],
        n_layers=cfg["n_layers"])

    return pl.pallas_call(
        kern,
        out_shape=jax.ShapeDtypeStruct((B, Lt, Fo), jnp.float32),
        compiler_params=pltpu.CompilerParams(
            vmem_limit_bytes=_VMEM_LIMIT_BYTES),
    )(src, tgt, *flat)


# ----------------------------------------------------------------------------
# Deterministic parameter init (weights stored in fused/kernel-ready layout)
# ----------------------------------------------------------------------------

def make_positional_encoding(max_len, d_model):
    position = jnp.arange(max_len, dtype=jnp.float32)[:, None]
    div_term = jnp.exp(jnp.arange(0, d_model, 2, dtype=jnp.float32)
                       * (-math.log(10000.0) / d_model))
    pe = jnp.zeros((max_len, d_model), jnp.float32)
    pe = pe.at[:, 0::2].set(jnp.sin(position * div_term))
    pe = pe.at[:, 1::2].set(jnp.cos(position * div_term))
    return pe


def _linear_init(key, fan_in, fan_out, scale=0.05):
    w = scale * jax.random.normal(key, (fan_in, fan_out), jnp.float32)
    b = jnp.zeros((1, fan_out), jnp.float32)
    return w, b


def _attn_self_init(key, d_model):
    ks = jax.random.split(key, 4)
    wq, _ = _linear_init(ks[0], d_model, d_model)
    wk, _ = _linear_init(ks[1], d_model, d_model)
    wv, _ = _linear_init(ks[2], d_model, d_model)
    wo, bo = _linear_init(ks[3], d_model, d_model)
    return dict(wqkv=jnp.concatenate([wq, wk, wv], axis=1),
                bqkv=jnp.zeros((1, 3 * d_model), jnp.float32),
                wo=wo, bo=bo)


def _attn_cross_init(key, d_model):
    ks = jax.random.split(key, 4)
    wq, bq = _linear_init(ks[0], d_model, d_model)
    wk, _ = _linear_init(ks[1], d_model, d_model)
    wv, _ = _linear_init(ks[2], d_model, d_model)
    wo, bo = _linear_init(ks[3], d_model, d_model)
    return dict(wq=wq, bq=bq,
                wkv=jnp.concatenate([wk, wv], axis=1),
                bkv=jnp.zeros((1, 2 * d_model), jnp.float32),
                wo=wo, bo=bo)


def _ln_init(d_model):
    return (jnp.ones((1, d_model), jnp.float32),
            jnp.zeros((1, d_model), jnp.float32))


def init_params(key, cfg):
    d_model = cfg["n_heads"] * cfg["hidden_dim"]
    ff_dim = cfg["ff_dim"]
    keys = jax.random.split(key, 8)

    src_w, src_b = _linear_init(keys[0], cfg["input_feats"], d_model)
    tgt_w, tgt_b = _linear_init(keys[1], cfg["output_feats"], d_model)
    fin_w, fin_b = _linear_init(keys[2], d_model, cfg["output_feats"])

    enc_layers = []
    for lk in jax.random.split(keys[3], cfg["n_layers"]):
        sk = jax.random.split(lk, 3)
        ff1w, ff1b = _linear_init(sk[1], d_model, ff_dim)
        ff2w, ff2b = _linear_init(sk[2], ff_dim, d_model)
        n1w, n1b = _ln_init(d_model)
        n2w, n2b = _ln_init(d_model)
        enc_layers.append(dict(attn=_attn_self_init(sk[0], d_model),
                               ff1w=ff1w, ff1b=ff1b, ff2w=ff2w, ff2b=ff2b,
                               n1w=n1w, n1b=n1b, n2w=n2w, n2b=n2b))

    dec_layers = []
    for lk in jax.random.split(keys[4], cfg["n_layers"]):
        sk = jax.random.split(lk, 4)
        ff1w, ff1b = _linear_init(sk[2], d_model, ff_dim)
        ff2w, ff2b = _linear_init(sk[3], ff_dim, d_model)
        n1w, n1b = _ln_init(d_model)
        n2w, n2b = _ln_init(d_model)
        n3w, n3b = _ln_init(d_model)
        dec_layers.append(dict(self_attn=_attn_self_init(sk[0], d_model),
                               cross_attn=_attn_cross_init(sk[1], d_model),
                               ff1w=ff1w, ff1b=ff1b, ff2w=ff2w, ff2b=ff2b,
                               n1w=n1w, n1b=n1b, n2w=n2w, n2b=n2b,
                               n3w=n3w, n3b=n3b))

    enc_nw, enc_nb = _ln_init(d_model)
    dec_nw, dec_nb = _ln_init(d_model)

    return dict(
        src_embed_w=src_w, src_embed_b=src_b,
        tgt_embed_w=tgt_w, tgt_embed_b=tgt_b,
        final_w=fin_w, final_b=fin_b,
        encoder_layers=enc_layers, decoder_layers=dec_layers,
        enc_norm_w=enc_nw, enc_norm_b=enc_nb,
        dec_norm_w=dec_nw, dec_norm_b=dec_nb,
        pe=make_positional_encoding(cfg["max_len"], d_model),
    )


# ----------------------------------------------------------------------------
# Main
# ----------------------------------------------------------------------------

if __name__ == "__main__":
    cfg = dict(input_feats=8, output_feats=8, n_layers=1, n_heads=2,
               hidden_dim=16, ff_dim=32, tf_depth=2, max_len=64)

    key = jax.random.PRNGKey(0)
    kp, ks, kt = jax.random.split(key, 3)
    params = init_params(kp, cfg)

    B, Ls, Lt = 2, 8, 8
    src = jax.random.normal(ks, (B, Ls, cfg["input_feats"]), jnp.float32)
    tgt = jax.random.normal(kt, (B, Lt, cfg["output_feats"]), jnp.float32)

    fwd = jax.jit(lambda p, s, t: forward(p, s, t, cfg))
    out = fwd(params, src, tgt)
    jax.block_until_ready(out)
    assert out.shape == (B, Lt, cfg["output_feats"])
    assert bool(jnp.all(jnp.isfinite(out)))
    print("KERNEL_OK")
</pallas_src>

<mosaic_0001>
module attributes {stable_mosaic.version = 11 : i64} {
  func.func @_forward_kernel(%arg0: memref<2x8x8xf32, #tpu.memory_space<vmem>>, %arg1: memref<2x8x8xf32, #tpu.memory_space<vmem>>, %arg2: memref<1x32xf32, #tpu.memory_space<vmem>>, %arg3: memref<1x32xf32, #tpu.memory_space<vmem>>, %arg4: memref<1x64xf32, #tpu.memory_space<vmem>>, %arg5: memref<1x32xf32, #tpu.memory_space<vmem>>, %arg6: memref<1x32xf32, #tpu.memory_space<vmem>>, %arg7: memref<32x64xf32, #tpu.memory_space<vmem>>, %arg8: memref<32x32xf32, #tpu.memory_space<vmem>>, %arg9: memref<32x32xf32, #tpu.memory_space<vmem>>, %arg10: memref<1x32xf32, #tpu.memory_space<vmem>>, %arg11: memref<32x32xf32, #tpu.memory_space<vmem>>, %arg12: memref<1x32xf32, #tpu.memory_space<vmem>>, %arg13: memref<32x32xf32, #tpu.memory_space<vmem>>, %arg14: memref<1x32xf32, #tpu.memory_space<vmem>>, %arg15: memref<1x32xf32, #tpu.memory_space<vmem>>, %arg16: memref<1x32xf32, #tpu.memory_space<vmem>>, %arg17: memref<1x32xf32, #tpu.memory_space<vmem>>, %arg18: memref<1x32xf32, #tpu.memory_space<vmem>>, %arg19: memref<1x32xf32, #tpu.memory_space<vmem>>, %arg20: memref<1x32xf32, #tpu.memory_space<vmem>>, %arg21: memref<1x96xf32, #tpu.memory_space<vmem>>, %arg22: memref<32x32xf32, #tpu.memory_space<vmem>>, %arg23: memref<32x96xf32, #tpu.memory_space<vmem>>, %arg24: memref<1x32xf32, #tpu.memory_space<vmem>>, %arg25: memref<1x32xf32, #tpu.memory_space<vmem>>, %arg26: memref<1x32xf32, #tpu.memory_space<vmem>>, %arg27: memref<1x96xf32, #tpu.memory_space<vmem>>, %arg28: memref<32x32xf32, #tpu.memory_space<vmem>>, %arg29: memref<32x96xf32, #tpu.memory_space<vmem>>, %arg30: memref<1x32xf32, #tpu.memory_space<vmem>>, %arg31: memref<32x32xf32, #tpu.memory_space<vmem>>, %arg32: memref<1x32xf32, #tpu.memory_space<vmem>>, %arg33: memref<32x32xf32, #tpu.memory_space<vmem>>, %arg34: memref<1x32xf32, #tpu.memory_space<vmem>>, %arg35: memref<1x32xf32, #tpu.memory_space<vmem>>, %arg36: memref<1x32xf32, #tpu.memory_space<vmem>>, %arg37: memref<1x32xf32, #tpu.memory_space<vmem>>, %arg38: memref<1x8xf32, #tpu.memory_space<vmem>>, %arg39: memref<32x8xf32, #tpu.memory_space<vmem>>, %arg40: memref<8x32xf32, #tpu.memory_space<vmem>>, %arg41: memref<8x32xf32, #tpu.memory_space<vmem>>, %arg42: memref<1x32xf32, #tpu.memory_space<vmem>>, %arg43: memref<8x32xf32, #tpu.memory_space<vmem>>, %arg44: memref<1x32xf32, #tpu.memory_space<vmem>>, %arg45: memref<8x32xf32, #tpu.memory_space<vmem>>, %arg46: memref<2x8x8xf32, #tpu.memory_space<vmem>>) attributes {dimension_semantics = [], scalar_prefetch = 0 : i64, scratch_operands = 0 : i64, tpu.core_type = #tpu.core_type<tc>} {
    %c0 = arith.constant 0 : index
    %c0_0 = arith.constant 0 : index
    %0 = vector.load %arg2[%c0, %c0_0] : memref<1x32xf32, #tpu.memory_space<vmem>>, vector<1x32xf32>
    %c0_1 = arith.constant 0 : index
    %c0_2 = arith.constant 0 : index
    %1 = vector.load %arg3[%c0_1, %c0_2] : memref<1x32xf32, #tpu.memory_space<vmem>>, vector<1x32xf32>
    %c0_3 = arith.constant 0 : index
    %c0_4 = arith.constant 0 : index
    %2 = vector.load %arg4[%c0_3, %c0_4] : memref<1x64xf32, #tpu.memory_space<vmem>>, vector<1x64xf32>
    %c0_5 = arith.constant 0 : index
    %c0_6 = arith.constant 0 : index
    %3 = vector.load %arg5[%c0_5, %c0_6] : memref<1x32xf32, #tpu.memory_space<vmem>>, vector<1x32xf32>
    %c0_7 = arith.constant 0 : index
    %c0_8 = arith.constant 0 : index
    %4 = vector.load %arg6[%c0_7, %c0_8] : memref<1x32xf32, #tpu.memory_space<vmem>>, vector<1x32xf32>
    %c0_9 = arith.constant 0 : index
    %c0_10 = arith.constant 0 : index
    %5 = vector.load %arg7[%c0_9, %c0_10] : memref<32x64xf32, #tpu.memory_space<vmem>>, vector<32x64xf32>
    %c0_11 = arith.constant 0 : index
    %c0_12 = arith.constant 0 : index
    %6 = vector.load %arg8[%c0_11, %c0_12] : memref<32x32xf32, #tpu.memory_space<vmem>>, vector<32x32xf32>
    %c0_13 = arith.constant 0 : index
    %c0_14 = arith.constant 0 : index
    %7 = vector.load %arg9[%c0_13, %c0_14] : memref<32x32xf32, #tpu.memory_space<vmem>>, vector<32x32xf32>
    %c0_15 = arith.constant 0 : index
    %c0_16 = arith.constant 0 : index
    %8 = vector.load %arg10[%c0_15, %c0_16] : memref<1x32xf32, #tpu.memory_space<vmem>>, vector<1x32xf32>
    %c0_17 = arith.constant 0 : index
    %c0_18 = arith.constant 0 : index
    %9 = vector.load %arg11[%c0_17, %c0_18] : memref<32x32xf32, #tpu.memory_space<vmem>>, vector<32x32xf32>
    %c0_19 = arith.constant 0 : index
    %c0_20 = arith.constant 0 : index
    %10 = vector.load %arg12[%c0_19, %c0_20] : memref<1x32xf32, #tpu.memory_space<vmem>>, vector<1x32xf32>
    %c0_21 = arith.constant 0 : index
    %c0_22 = arith.constant 0 : index
    %11 = vector.load %arg13[%c0_21, %c0_22] : memref<32x32xf32, #tpu.memory_space<vmem>>, vector<32x32xf32>
    %c0_23 = arith.constant 0 : index
    %c0_24 = arith.constant 0 : index
    %12 = vector.load %arg14[%c0_23, %c0_24] : memref<1x32xf32, #tpu.memory_space<vmem>>, vector<1x32xf32>
    %c0_25 = arith.constant 0 : index
    %c0_26 = arith.constant 0 : index
    %13 = vector.load %arg15[%c0_25, %c0_26] : memref<1x32xf32, #tpu.memory_space<vmem>>, vector<1x32xf32>
    %c0_27 = arith.constant 0 : index
    %c0_28 = arith.constant 0 : index
    %14 = vector.load %arg16[%c0_27, %c0_28] : memref<1x32xf32, #tpu.memory_space<vmem>>, vector<1x32xf32>
    %c0_29 = arith.constant 0 : index
    %c0_30 = arith.constant 0 : index
    %15 = vector.load %arg17[%c0_29, %c0_30] : memref<1x32xf32, #tpu.memory_space<vmem>>, vector<1x32xf32>
    %c0_31 = arith.constant 0 : index
    %c0_32 = arith.constant 0 : index
    %16 = vector.load %arg18[%c0_31, %c0_32] : memref<1x32xf32, #tpu.memory_space<vmem>>, vector<1x32xf32>
    %c0_33 = arith.constant 0 : index
    %c0_34 = arith.constant 0 : index
    %17 = vector.load %arg19[%c0_33, %c0_34] : memref<1x32xf32, #tpu.memory_space<vmem>>, vector<1x32xf32>
    %c0_35 = arith.constant 0 : index
    %c0_36 = arith.constant 0 : index
    %18 = vector.load %arg20[%c0_35, %c0_36] : memref<1x32xf32, #tpu.memory_space<vmem>>, vector<1x32xf32>
    %c0_37 = arith.constant 0 : index
    %c0_38 = arith.constant 0 : index
    %19 = vector.load %arg21[%c0_37, %c0_38] : memref<1x96xf32, #tpu.memory_space<vmem>>, vector<1x96xf32>
    %c0_39 = arith.constant 0 : index
    %c0_40 = arith.constant 0 : index
    %20 = vector.load %arg22[%c0_39, %c0_40] : memref<32x32xf32, #tpu.memory_space<vmem>>, vector<32x32xf32>
    %c0_41 = arith.constant 0 : index
    %c0_42 = arith.constant 0 : index
    %21 = vector.load %arg23[%c0_41, %c0_42] : memref<32x96xf32, #tpu.memory_space<vmem>>, vector<32x96xf32>
    %c0_43 = arith.constant 0 : index
    %c0_44 = arith.constant 0 : index
    %22 = vector.load %arg24[%c0_43, %c0_44] : memref<1x32xf32, #tpu.memory_space<vmem>>, vector<1x32xf32>
    %c0_45 = arith.constant 0 : index
    %c0_46 = arith.constant 0 : index
    %23 = vector.load %arg25[%c0_45, %c0_46] : memref<1x32xf32, #tpu.memory_space<vmem>>, vector<1x32xf32>
    %c0_47 = arith.constant 0 : index
    %c0_48 = arith.constant 0 : index
    %24 = vector.load %arg26[%c0_47, %c0_48] : memref<1x32xf32, #tpu.memory_space<vmem>>, vector<1x32xf32>
    %c0_49 = arith.constant 0 : index
    %c0_50 = arith.constant 0 : index
    %25 = vector.load %arg27[%c0_49, %c0_50] : memref<1x96xf32, #tpu.memory_space<vmem>>, vector<1x96xf32>
    %c0_51 = arith.constant 0 : index
    %c0_52 = arith.constant 0 : index
    %26 = vector.load %arg28[%c0_51, %c0_52] : memref<32x32xf32, #tpu.memory_space<vmem>>, vector<32x32xf32>
    %c0_53 = arith.constant 0 : index
    %c0_54 = arith.constant 0 : index
    %27 = vector.load %arg29[%c0_53, %c0_54] : memref<32x96xf32, #tpu.memory_space<vmem>>, vector<32x96xf32>
    %c0_55 = arith.constant 0 : index
    %c0_56 = arith.constant 0 : index
    %28 = vector.load %arg30[%c0_55, %c0_56] : memref<1x32xf32, #tpu.memory_space<vmem>>, vector<1x32xf32>
    %c0_57 = arith.constant 0 : index
    %c0_58 = arith.constant 0 : index
    %29 = vector.load %arg31[%c0_57, %c0_58] : memref<32x32xf32, #tpu.memory_space<vmem>>, vector<32x32xf32>
    %c0_59 = arith.constant 0 : index
    %c0_60 = arith.constant 0 : index
    %30 = vector.load %arg32[%c0_59, %c0_60] : memref<1x32xf32, #tpu.memory_space<vmem>>, vector<1x32xf32>
    %c0_61 = arith.constant 0 : index
    %c0_62 = arith.constant 0 : index
    %31 = vector.load %arg33[%c0_61, %c0_62] : memref<32x32xf32, #tpu.memory_space<vmem>>, vector<32x32xf32>
    %c0_63 = arith.constant 0 : index
    %c0_64 = arith.constant 0 : index
    %32 = vector.load %arg34[%c0_63, %c0_64] : memref<1x32xf32, #tpu.memory_space<vmem>>, vector<1x32xf32>
    %c0_65 = arith.constant 0 : index
    %c0_66 = arith.constant 0 : index
    %33 = vector.load %arg35[%c0_65, %c0_66] : memref<1x32xf32, #tpu.memory_space<vmem>>, vector<1x32xf32>
    %c0_67 = arith.constant 0 : index
    %c0_68 = arith.constant 0 : index
    %34 = vector.load %arg36[%c0_67, %c0_68] : memref<1x32xf32, #tpu.memory_space<vmem>>, vector<1x32xf32>
    %c0_69 = arith.constant 0 : index
    %c0_70 = arith.constant 0 : index
    %35 = vector.load %arg37[%c0_69, %c0_70] : memref<1x32xf32, #tpu.memory_space<vmem>>, vector<1x32xf32>
    %c0_71 = arith.constant 0 : index
    %c0_72 = arith.constant 0 : index
    %36 = vector.load %arg38[%c0_71, %c0_72] : memref<1x8xf32, #tpu.memory_space<vmem>>, vector<1x8xf32>
    %c0_73 = arith.constant 0 : index
    %c0_74 = arith.constant 0 : index
    %37 = vector.load %arg39[%c0_73, %c0_74] : memref<32x8xf32, #tpu.memory_space<vmem>>, vector<32x8xf32>
    %c0_75 = arith.constant 0 : index
    %c0_76 = arith.constant 0 : index
    %38 = vector.load %arg40[%c0_75, %c0_76] : memref<8x32xf32, #tpu.memory_space<vmem>>, vector<8x32xf32>
    %c0_77 = arith.constant 0 : index
    %c0_78 = arith.constant 0 : index
    %39 = vector.load %arg41[%c0_77, %c0_78] : memref<8x32xf32, #tpu.memory_space<vmem>>, vector<8x32xf32>
    %c0_79 = arith.constant 0 : index
    %c0_80 = arith.constant 0 : index
    %40 = vector.load %arg42[%c0_79, %c0_80] : memref<1x32xf32, #tpu.memory_space<vmem>>, vector<1x32xf32>
    %c0_81 = arith.constant 0 : index
    %c0_82 = arith.constant 0 : index
    %41 = vector.load %arg43[%c0_81, %c0_82] : memref<8x32xf32, #tpu.memory_space<vmem>>, vector<8x32xf32>
    %c0_83 = arith.constant 0 : index
    %c0_84 = arith.constant 0 : index
    %42 = vector.load %arg44[%c0_83, %c0_84] : memref<1x32xf32, #tpu.memory_space<vmem>>, vector<1x32xf32>
    %c0_85 = arith.constant 0 : index
    %c0_86 = arith.constant 0 : index
    %43 = vector.load %arg45[%c0_85, %c0_86] : memref<8x32xf32, #tpu.memory_space<vmem>>, vector<8x32xf32>
    %c0_87 = arith.constant 0 : index
    %c0_88 = arith.constant 0 : index
    %c0_89 = arith.constant 0 : index
    %44 = vector.load %arg0[%c0_87, %c0_88, %c0_89] : memref<2x8x8xf32, #tpu.memory_space<vmem>>, vector<2x8x8xf32>
    %45 = vector.shape_cast %44 : vector<2x8x8xf32> to vector<16x8xf32>
    %cst = arith.constant dense<0.000000e+00> : vector<16x32xf32>
    %46 = tpu.matmul %45, %41, %cst {dimension_numbers = #tpu.dot_dimension_numbers<[1], [0], [0], [1], [0, 0, 1, 1], [], []>} : vector<16x8xf32>, vector<8x32xf32>, vector<16x32xf32> -> vector<16x32xf32>
    %47 = vector.broadcast %40 : vector<1x32xf32> to vector<16x32xf32>
    %48 = arith.addf %46, %47 : vector<16x32xf32>
    %49 = vector.shape_cast %48 : vector<16x32xf32> to vector<2x8x32xf32>
    %50 = vector.shape_cast %38 : vector<8x32xf32> to vector<1x8x32xf32>
    %51 = vector.broadcast %50 : vector<1x8x32xf32> to vector<2x8x32xf32>
    %52 = arith.addf %49, %51 : vector<2x8x32xf32>
    %53 = vector.shape_cast %52 : vector<2x8x32xf32> to vector<16x32xf32>
    %cst_90 = arith.constant dense<0.000000e+00> : vector<16x96xf32>
    %54 = tpu.matmul %53, %27, %cst_90 {dimension_numbers = #tpu.dot_dimension_numbers<[1], [0], [0], [1], [0, 0, 1, 1], [], []>} : vector<16x32xf32>, vector<32x96xf32>, vector<16x96xf32> -> vector<16x96xf32>
    %55 = vector.broadcast %25 : vector<1x96xf32> to vector<16x96xf32>
    %56 = arith.addf %54, %55 : vector<16x96xf32>
    %57 = vector.extract_strided_slice %56 {offsets = [0, 0], sizes = [16, 32], strides = [1, 1]} : vector<16x96xf32> to vector<16x32xf32>
    %58 = vector.shape_cast %57 : vector<16x32xf32> to vector<2x8x32xf32>
    %59 = vector.extract_strided_slice %56 {offsets = [0, 32], sizes = [16, 32], strides = [1, 1]} : vector<16x96xf32> to vector<16x32xf32>
    %cst_91 = arith.constant 0.000000e+00 : f32
    %60 = vector.broadcast %cst_91 : f32 to vector<16x32xf32>
    %61 = arith.cmpf ogt, %59, %60 : vector<16x32xf32>
    %cst_92 = arith.constant 1.000000e+00 : f32
    %62 = vector.broadcast %cst_92 : f32 to vector<16x32xf32>
    %63 = arith.addf %59, %62 : vector<16x32xf32>
    %64 = math.exp %59 : vector<16x32xf32>
    %65 = arith.select %61, %63, %64 : vector<16x32xi1>, vector<16x32xf32>
    %66 = vector.shape_cast %65 : vector<16x32xf32> to vector<2x8x32xf32>
    %67 = vector.extract_strided_slice %56 {offsets = [0, 64], sizes = [16, 32], strides = [1, 1]} : vector<16x96xf32> to vector<16x32xf32>
    %68 = vector.shape_cast %67 : vector<16x32xf32> to vector<2x8x32xf32>
    %cst_93 = arith.constant 0.000000e+00 : f32
    %69 = vector.broadcast %cst_93 : f32 to vector<2x8x32xf32>
    %70 = arith.cmpf ogt, %58, %69 : vector<2x8x32xf32>
    %cst_94 = arith.constant 1.000000e+00 : f32
    %71 = vector.broadcast %cst_94 : f32 to vector<2x8x32xf32>
    %72 = arith.addf %58, %71 : vector<2x8x32xf32>
    %73 = math.exp %58 : vector<2x8x32xf32>
    %74 = arith.select %70, %72, %73 : vector<2x8x32xi1>, vector<2x8x32xf32>
    %75 = vector.extract_strided_slice %74 {offsets = [0, 0, 0], sizes = [2, 8, 16], strides = [1, 1, 1]} : vector<2x8x32xf32> to vector<2x8x16xf32>
    %76 = vector.extract_strided_slice %66 {offsets = [0, 0, 0], sizes = [2, 8, 16], strides = [1, 1, 1]} : vector<2x8x32xf32> to vector<2x8x16xf32>
    "tpu.trace_start"() <{level = 10 : i32, message = "bld,bsd->bls"}> : () -> ()
    %cst_95 = arith.constant dense<0.000000e+00> : vector<2x8x8xf32>
    %77 = tpu.matmul %75, %76, %cst_95 {dimension_numbers = #tpu.dot_dimension_numbers<[2], [2], [1], [1], [0, 0, 0, 1, 1, 1], [0], [0]>} : vector<2x8x16xf32>, vector<2x8x16xf32>, vector<2x8x8xf32> -> vector<2x8x8xf32>
    "tpu.trace_stop"() : () -> ()
    %cst_96 = arith.constant dense<0.000000e+00> : vector<2x8xf32>
    %78 = vector.multi_reduction <add>, %77, %cst_96 [2] : vector<2x8x8xf32> to vector<2x8xf32>
    %79 = vector.shape_cast %78 : vector<2x8xf32> to vector<2x8x1xf32>
    %cst_97 = arith.constant 9.99999997E-7 : f32
    %80 = vector.broadcast %cst_97 : f32 to vector<2x8x1xf32>
    %81 = arith.addf %79, %80 : vector<2x8x1xf32>
    %82 = tpu.reciprocal %81 {approx = true} : vector<2x8x1xf32> -> vector<2x8x1xf32>
    %83 = vector.broadcast %82 : vector<2x8x1xf32> to vector<2x8x8xf32>
    %84 = arith.mulf %77, %83 : vector<2x8x8xf32>
    %85 = vector.extract_strided_slice %68 {offsets = [0, 0, 0], sizes = [2, 8, 16], strides = [1, 1, 1]} : vector<2x8x32xf32> to vector<2x8x16xf32>
    "tpu.trace_start"() <{level = 10 : i32, message = "bls,bsm->blm"}> : () -> ()
    %cst_98 = arith.constant dense<0.000000e+00> : vector<2x8x16xf32>
    %86 = tpu.matmul %84, %85, %cst_98 {dimension_numbers = #tpu.dot_dimension_numbers<[2], [1], [1], [2], [0, 0, 0, 1, 1, 2], [0], [0]>} : vector<2x8x8xf32>, vector<2x8x16xf32>, vector<2x8x16xf32> -> vector<2x8x16xf32>
    "tpu.trace_stop"() : () -> ()
    %87 = vector.shape_cast %86 : vector<2x8x16xf32> to vector<16x16xf32>
    %88 = vector.extract_strided_slice %26 {offsets = [0, 0], sizes = [16, 32], strides = [1, 1]} : vector<32x32xf32> to vector<16x32xf32>
    %cst_99 = arith.constant dense<0.000000e+00> : vector<16x32xf32>
    %89 = tpu.matmul %87, %88, %cst_99 {dimension_numbers = #tpu.dot_dimension_numbers<[1], [0], [0], [1], [0, 0, 1, 1], [], []>} : vector<16x16xf32>, vector<16x32xf32>, vector<16x32xf32> -> vector<16x32xf32>
    %90 = vector.extract_strided_slice %74 {offsets = [0, 0, 16], sizes = [2, 8, 16], strides = [1, 1, 1]} : vector<2x8x32xf32> to vector<2x8x16xf32>
    %91 = vector.extract_strided_slice %66 {offsets = [0, 0, 16], sizes = [2, 8, 16], strides = [1, 1, 1]} : vector<2x8x32xf32> to vector<2x8x16xf32>
    "tpu.trace_start"() <{level = 10 : i32, message = "bld,bsd->bls"}> : () -> ()
    %cst_100 = arith.constant dense<0.000000e+00> : vector<2x8x8xf32>
    %92 = tpu.matmul %90, %91, %cst_100 {dimension_numbers = #tpu.dot_dimension_numbers<[2], [2], [1], [1], [0, 0, 0, 1, 1, 1], [0], [0]>} : vector<2x8x16xf32>, vector<2x8x16xf32>, vector<2x8x8xf32> -> vector<2x8x8xf32>
    "tpu.trace_stop"() : () -> ()
    %cst_101 = arith.constant dense<0.000000e+00> : vector<2x8xf32>
    %93 = vector.multi_reduction <add>, %92, %cst_101 [2] : vector<2x8x8xf32> to vector<2x8xf32>
    %94 = vector.shape_cast %93 : vector<2x8xf32> to vector<2x8x1xf32>
    %cst_102 = arith.constant 9.99999997E-7 : f32
    %95 = vector.broadcast %cst_102 : f32 to vector<2x8x1xf32>
    %96 = arith.addf %94, %95 : vector<2x8x1xf32>
    %97 = tpu.reciprocal %96 {approx = true} : vector<2x8x1xf32> -> vector<2x8x1xf32>
    %98 = vector.broadcast %97 : vector<2x8x1xf32> to vector<2x8x8xf32>
    %99 = arith.mulf %92, %98 : vector<2x8x8xf32>
    %100 = vector.extract_strided_slice %68 {offsets = [0, 0, 16], sizes = [2, 8, 16], strides = [1, 1, 1]} : vector<2x8x32xf32> to vector<2x8x16xf32>
    "tpu.trace_start"() <{level = 10 : i32, message = "bls,bsm->blm"}> : () -> ()
    %cst_103 = arith.constant dense<0.000000e+00> : vector<2x8x16xf32>
    %101 = tpu.matmul %99, %100, %cst_103 {dimension_numbers = #tpu.dot_dimension_numbers<[2], [1], [1], [2], [0, 0, 0, 1, 1, 2], [0], [0]>} : vector<2x8x8xf32>, vector<2x8x16xf32>, vector<2x8x16xf32> -> vector<2x8x16xf32>
    "tpu.trace_stop"() : () -> ()
    %102 = vector.shape_cast %101 : vector<2x8x16xf32> to vector<16x16xf32>
    %103 = vector.extract_strided_slice %26 {offsets = [16, 0], sizes = [16, 32], strides = [1, 1]} : vector<32x32xf32> to vector<16x32xf32>
    %cst_104 = arith.constant dense<0.000000e+00> : vector<16x32xf32>
    %104 = tpu.matmul %102, %103, %cst_104 {dimension_numbers = #tpu.dot_dimension_numbers<[1], [0], [0], [1], [0, 0, 1, 1], [], []>} : vector<16x16xf32>, vector<16x32xf32>, vector<16x32xf32> -> vector<16x32xf32>
    %105 = arith.addf %89, %104 : vector<16x32xf32>
    %106 = arith.addf %53, %105 : vector<16x32xf32>
    %107 = vector.broadcast %24 : vector<1x32xf32> to vector<16x32xf32>
    %108 = arith.addf %106, %107 : vector<16x32xf32>
    %cst_105 = arith.constant dense<0.000000e+00> : vector<16xf32>
    %109 = vector.multi_reduction <add>, %108, %cst_105 [1] : vector<16x32xf32> to vector<16xf32>
    %110 = vector.shape_cast %109 : vector<16xf32> to vector<16x1xf32>
    %cst_106 = arith.constant 3.200000e+01 : f32
    %111 = vector.broadcast %cst_106 : f32 to vector<16x1xf32>
    %112 = arith.divf %110, %111 : vector<16x1xf32>
    %113 = vector.broadcast %112 : vector<16x1xf32> to vector<16x32xf32>
    %114 = arith.subf %108, %113 : vector<16x32xf32>
    %115 = arith.mulf %114, %114 : vector<16x32xf32>
    %cst_107 = arith.constant dense<0.000000e+00> : vector<16xf32>
    %116 = vector.multi_reduction <add>, %115, %cst_107 [1] : vector<16x32xf32> to vector<16xf32>
    %117 = vector.shape_cast %116 : vector<16xf32> to vector<16x1xf32>
    %cst_108 = arith.constant 3.200000e+01 : f32
    %118 = vector.broadcast %cst_108 : f32 to vector<16x1xf32>
    %119 = arith.divf %117, %118 : vector<16x1xf32>
    %120 = vector.broadcast %112 : vector<16x1xf32> to vector<16x32xf32>
    %121 = arith.subf %108, %120 : vector<16x32xf32>
    %cst_109 = arith.constant 9.99999974E-6 : f32
    %122 = vector.broadcast %cst_109 : f32 to vector<16x1xf32>
    %123 = arith.addf %119, %122 : vector<16x1xf32>
    %124 = math.rsqrt %123 : vector<16x1xf32>
    %125 = vector.broadcast %124 : vector<16x1xf32> to vector<16x32xf32>
    %126 = arith.mulf %121, %125 : vector<16x32xf32>
    %127 = vector.broadcast %33 : vector<1x32xf32> to vector<16x32xf32>
    %128 = arith.mulf %126, %127 : vector<16x32xf32>
    %129 = vector.broadcast %32 : vector<1x32xf32> to vector<16x32xf32>
    %130 = arith.addf %128, %129 : vector<16x32xf32>
    %cst_110 = arith.constant dense<0.000000e+00> : vector<16x32xf32>
    %131 = tpu.matmul %130, %29, %cst_110 {dimension_numbers = #tpu.dot_dimension_numbers<[1], [0], [0], [1], [0, 0, 1, 1], [], []>} : vector<16x32xf32>, vector<32x32xf32>, vector<16x32xf32> -> vector<16x32xf32>
    %132 = vector.broadcast %28 : vector<1x32xf32> to vector<16x32xf32>
    %133 = arith.addf %131, %132 : vector<16x32xf32>
    %cst_111 = arith.constant 0.000000e+00 : f32
    %134 = vector.broadcast %cst_111 : f32 to vector<16x32xf32>
    %135 = arith.maximumf %133, %134 : vector<16x32xf32>
    %cst_112 = arith.constant dense<0.000000e+00> : vector<16x32xf32>
    %136 = tpu.matmul %135, %31, %cst_112 {dimension_numbers = #tpu.dot_dimension_numbers<[1], [0], [0], [1], [0, 0, 1, 1], [], []>} : vector<16x32xf32>, vector<32x32xf32>, vector<16x32xf32> -> vector<16x32xf32>
    %137 = vector.broadcast %30 : vector<1x32xf32> to vector<16x32xf32>
    %138 = arith.addf %136, %137 : vector<16x32xf32>
    %139 = arith.addf %130, %138 : vector<16x32xf32>
    %cst_113 = arith.constant dense<0.000000e+00> : vector<16xf32>
    %140 = vector.multi_reduction <add>, %139, %cst_113 [1] : vector<16x32xf32> to vector<16xf32>
    %141 = vector.shape_cast %140 : vector<16xf32> to vector<16x1xf32>
    %cst_114 = arith.constant 3.200000e+01 : f32
    %142 = vector.broadcast %cst_114 : f32 to vector<16x1xf32>
    %143 = arith.divf %141, %142 : vector<16x1xf32>
    %144 = vector.broadcast %143 : vector<16x1xf32> to vector<16x32xf32>
    %145 = arith.subf %139, %144 : vector<16x32xf32>
    %146 = arith.mulf %145, %145 : vector<16x32xf32>
    %cst_115 = arith.constant dense<0.000000e+00> : vector<16xf32>
    %147 = vector.multi_reduction <add>, %146, %cst_115 [1] : vector<16x32xf32> to vector<16xf32>
    %148 = vector.shape_cast %147 : vector<16xf32> to vector<16x1xf32>
    %cst_116 = arith.constant 3.200000e+01 : f32
    %149 = vector.broadcast %cst_116 : f32 to vector<16x1xf32>
    %150 = arith.divf %148, %149 : vector<16x1xf32>
    %151 = vector.broadcast %143 : vector<16x1xf32> to vector<16x32xf32>
    %152 = arith.subf %139, %151 : vector<16x32xf32>
    %cst_117 = arith.constant 9.99999974E-6 : f32
    %153 = vector.broadcast %cst_117 : f32 to vector<16x1xf32>
    %154 = arith.addf %150, %153 : vector<16x1xf32>
    %155 = math.rsqrt %154 : vector<16x1xf32>
    %156 = vector.broadcast %155 : vector<16x1xf32> to vector<16x32xf32>
    %157 = arith.mulf %152, %156 : vector<16x32xf32>
    %158 = vector.broadcast %35 : vector<1x32xf32> to vector<16x32xf32>
    %159 = arith.mulf %157, %158 : vector<16x32xf32>
    %160 = vector.broadcast %34 : vector<1x32xf32> to vector<16x32xf32>
    %161 = arith.addf %159, %160 : vector<16x32xf32>
    %cst_118 = arith.constant dense<0.000000e+00> : vector<16xf32>
    %162 = vector.multi_reduction <add>, %161, %cst_118 [1] : vector<16x32xf32> to vector<16xf32>
    %163 = vector.shape_cast %162 : vector<16xf32> to vector<16x1xf32>
    %cst_119 = arith.constant 3.200000e+01 : f32
    %164 = vector.broadcast %cst_119 : f32 to vector<16x1xf32>
    %165 = arith.divf %163, %164 : vector<16x1xf32>
    %166 = vector.broadcast %165 : vector<16x1xf32> to vector<16x32xf32>
    %167 = arith.subf %161, %166 : vector<16x32xf32>
    %168 = arith.mulf %167, %167 : vector<16x32xf32>
    %cst_120 = arith.constant dense<0.000000e+00> : vector<16xf32>
    %169 = vector.multi_reduction <add>, %168, %cst_120 [1] : vector<16x32xf32> to vector<16xf32>
    %170 = vector.shape_cast %169 : vector<16xf32> to vector<16x1xf32>
    %cst_121 = arith.constant 3.200000e+01 : f32
    %171 = vector.broadcast %cst_121 : f32 to vector<16x1xf32>
    %172 = arith.divf %170, %171 : vector<16x1xf32>
    %173 = vector.broadcast %165 : vector<16x1xf32> to vector<16x32xf32>
    %174 = arith.subf %161, %173 : vector<16x32xf32>
    %cst_122 = arith.constant 9.99999974E-6 : f32
    %175 = vector.broadcast %cst_122 : f32 to vector<16x1xf32>
    %176 = arith.addf %172, %175 : vector<16x1xf32>
    %177 = math.rsqrt %176 : vector<16x1xf32>
    %178 = vector.broadcast %177 : vector<16x1xf32> to vector<16x32xf32>
    %179 = arith.mulf %174, %178 : vector<16x32xf32>
    %180 = vector.broadcast %23 : vector<1x32xf32> to vector<16x32xf32>
    %181 = arith.mulf %179, %180 : vector<16x32xf32>
    %182 = vector.broadcast %22 : vector<1x32xf32> to vector<16x32xf32>
    %183 = arith.addf %181, %182 : vector<16x32xf32>
    %cst_123 = arith.constant dense<0.000000e+00> : vector<16x96xf32>
    %184 = tpu.matmul %183, %27, %cst_123 {dimension_numbers = #tpu.dot_dimension_numbers<[1], [0], [0], [1], [0, 0, 1, 1], [], []>} : vector<16x32xf32>, vector<32x96xf32>, vector<16x96xf32> -> vector<16x96xf32>
    %185 = vector.broadcast %25 : vector<1x96xf32> to vector<16x96xf32>
    %186 = arith.addf %184, %185 : vector<16x96xf32>
    %187 = vector.extract_strided_slice %186 {offsets = [0, 0], sizes = [16, 32], strides = [1, 1]} : vector<16x96xf32> to vector<16x32xf32>
    %188 = vector.shape_cast %187 : vector<16x32xf32> to vector<2x8x32xf32>
    %189 = vector.extract_strided_slice %186 {offsets = [0, 32], sizes = [16, 32], strides = [1, 1]} : vector<16x96xf32> to vector<16x32xf32>
    %cst_124 = arith.constant 0.000000e+00 : f32
    %190 = vector.broadcast %cst_124 : f32 to vector<16x32xf32>
    %191 = arith.cmpf ogt, %189, %190 : vector<16x32xf32>
    %cst_125 = arith.constant 1.000000e+00 : f32
    %192 = vector.broadcast %cst_125 : f32 to vector<16x32xf32>
    %193 = arith.addf %189, %192 : vector<16x32xf32>
    %194 = math.exp %189 : vector<16x32xf32>
    %195 = arith.select %191, %193, %194 : vector<16x32xi1>, vector<16x32xf32>
    %196 = vector.shape_cast %195 : vector<16x32xf32> to vector<2x8x32xf32>
    %197 = vector.extract_strided_slice %186 {offsets = [0, 64], sizes = [16, 32], strides = [1, 1]} : vector<16x96xf32> to vector<16x32xf32>
    %198 = vector.shape_cast %197 : vector<16x32xf32> to vector<2x8x32xf32>
    %cst_126 = arith.constant 0.000000e+00 : f32
    %199 = vector.broadcast %cst_126 : f32 to vector<2x8x32xf32>
    %200 = arith.cmpf ogt, %188, %199 : vector<2x8x32xf32>
    %cst_127 = arith.constant 1.000000e+00 : f32
    %201 = vector.broadcast %cst_127 : f32 to vector<2x8x32xf32>
    %202 = arith.addf %188, %201 : vector<2x8x32xf32>
    %203 = math.exp %188 : vector<2x8x32xf32>
    %204 = arith.select %200, %202, %203 : vector<2x8x32xi1>, vector<2x8x32xf32>
    %205 = vector.extract_strided_slice %204 {offsets = [0, 0, 0], sizes = [2, 8, 16], strides = [1, 1, 1]} : vector<2x8x32xf32> to vector<2x8x16xf32>
    %206 = vector.extract_strided_slice %196 {offsets = [0, 0, 0], sizes = [2, 8, 16], strides = [1, 1, 1]} : vector<2x8x32xf32> to vector<2x8x16xf32>
    "tpu.trace_start"() <{level = 10 : i32, message = "bld,bsd->bls"}> : () -> ()
    %cst_128 = arith.constant dense<0.000000e+00> : vector<2x8x8xf32>
    %207 = tpu.matmul %205, %206, %cst_128 {dimension_numbers = #tpu.dot_dimension_numbers<[2], [2], [1], [1], [0, 0, 0, 1, 1, 1], [0], [0]>} : vector<2x8x16xf32>, vector<2x8x16xf32>, vector<2x8x8xf32> -> vector<2x8x8xf32>
    "tpu.trace_stop"() : () -> ()
    %cst_129 = arith.constant dense<0.000000e+00> : vector<2x8xf32>
    %208 = vector.multi_reduction <add>, %207, %cst_129 [2] : vector<2x8x8xf32> to vector<2x8xf32>
    %209 = vector.shape_cast %208 : vector<2x8xf32> to vector<2x8x1xf32>
    %cst_130 = arith.constant 9.99999997E-7 : f32
    %210 = vector.broadcast %cst_130 : f32 to vector<2x8x1xf32>
    %211 = arith.addf %209, %210 : vector<2x8x1xf32>
    %212 = tpu.reciprocal %211 {approx = true} : vector<2x8x1xf32> -> vector<2x8x1xf32>
    %213 = vector.broadcast %212 : vector<2x8x1xf32> to vector<2x8x8xf32>
    %214 = arith.mulf %207, %213 : vector<2x8x8xf32>
    %215 = vector.extract_strided_slice %198 {offsets = [0, 0, 0], sizes = [2, 8, 16], strides = [1, 1, 1]} : vector<2x8x32xf32> to vector<2x8x16xf32>
    "tpu.trace_start"() <{level = 10 : i32, message = "bls,bsm->blm"}> : () -> ()
    %cst_131 = arith.constant dense<0.000000e+00> : vector<2x8x16xf32>
    %216 = tpu.matmul %214, %215, %cst_131 {dimension_numbers = #tpu.dot_dimension_numbers<[2], [1], [1], [2], [0, 0, 0, 1, 1, 2], [0], [0]>} : vector<2x8x8xf32>, vector<2x8x16xf32>, vector<2x8x16xf32> -> vector<2x8x16xf32>
    "tpu.trace_stop"() : () -> ()
    %217 = vector.shape_cast %216 : vector<2x8x16xf32> to vector<16x16xf32>
    %218 = vector.extract_strided_slice %26 {offsets = [0, 0], sizes = [16, 32], strides = [1, 1]} : vector<32x32xf32> to vector<16x32xf32>
    %cst_132 = arith.constant dense<0.000000e+00> : vector<16x32xf32>
    %219 = tpu.matmul %217, %218, %cst_132 {dimension_numbers = #tpu.dot_dimension_numbers<[1], [0], [0], [1], [0, 0, 1, 1], [], []>} : vector<16x16xf32>, vector<16x32xf32>, vector<16x32xf32> -> vector<16x32xf32>
    %220 = vector.extract_strided_slice %204 {offsets = [0, 0, 16], sizes = [2, 8, 16], strides = [1, 1, 1]} : vector<2x8x32xf32> to vector<2x8x16xf32>
    %221 = vector.extract_strided_slice %196 {offsets = [0, 0, 16], sizes = [2, 8, 16], strides = [1, 1, 1]} : vector<2x8x32xf32> to vector<2x8x16xf32>
    "tpu.trace_start"() <{level = 10 : i32, message = "bld,bsd->bls"}> : () -> ()
    %cst_133 = arith.constant dense<0.000000e+00> : vector<2x8x8xf32>
    %222 = tpu.matmul %220, %221, %cst_133 {dimension_numbers = #tpu.dot_dimension_numbers<[2], [2], [1], [1], [0, 0, 0, 1, 1, 1], [0], [0]>} : vector<2x8x16xf32>, vector<2x8x16xf32>, vector<2x8x8xf32> -> vector<2x8x8xf32>
    "tpu.trace_stop"() : () -> ()
    %cst_134 = arith.constant dense<0.000000e+00> : vector<2x8xf32>
    %223 = vector.multi_reduction <add>, %222, %cst_134 [2] : vector<2x8x8xf32> to vector<2x8xf32>
    %224 = vector.shape_cast %223 : vector<2x8xf32> to vector<2x8x1xf32>
    %cst_135 = arith.constant 9.99999997E-7 : f32
    %225 = vector.broadcast %cst_135 : f32 to vector<2x8x1xf32>
    %226 = arith.addf %224, %225 : vector<2x8x1xf32>
    %227 = tpu.reciprocal %226 {approx = true} : vector<2x8x1xf32> -> vector<2x8x1xf32>
    %228 = vector.broadcast %227 : vector<2x8x1xf32> to vector<2x8x8xf32>
    %229 = arith.mulf %222, %228 : vector<2x8x8xf32>
    %230 = vector.extract_strided_slice %198 {offsets = [0, 0, 16], sizes = [2, 8, 16], strides = [1, 1, 1]} : vector<2x8x32xf32> to vector<2x8x16xf32>
    "tpu.trace_start"() <{level = 10 : i32, message = "bls,bsm->blm"}> : () -> ()
    %cst_136 = arith.constant dense<0.000000e+00> : vector<2x8x16xf32>
    %231 = tpu.matmul %229, %230, %cst_136 {dimension_numbers = #tpu.dot_dimension_numbers<[2], [1], [1], [2], [0, 0, 0, 1, 1, 2], [0], [0]>} : vector<2x8x8xf32>, vector<2x8x16xf32>, vector<2x8x16xf32> -> vector<2x8x16xf32>
    "tpu.trace_stop"() : () -> ()
    %232 = vector.shape_cast %231 : vector<2x8x16xf32> to vector<16x16xf32>
    %233 = vector.extract_strided_slice %26 {offsets = [16, 0], sizes = [16, 32], strides = [1, 1]} : vector<32x32xf32> to vector<16x32xf32>
    %cst_137 = arith.constant dense<0.000000e+00> : vector<16x32xf32>
    %234 = tpu.matmul %232, %233, %cst_137 {dimension_numbers = #tpu.dot_dimension_numbers<[1], [0], [0], [1], [0, 0, 1, 1], [], []>} : vector<16x16xf32>, vector<16x32xf32>, vector<16x32xf32> -> vector<16x32xf32>
    %235 = arith.addf %219, %234 : vector<16x32xf32>
    %236 = arith.addf %183, %235 : vector<16x32xf32>
    %237 = vector.broadcast %24 : vector<1x32xf32> to vector<16x32xf32>
    %238 = arith.addf %236, %237 : vector<16x32xf32>
    %cst_138 = arith.constant dense<0.000000e+00> : vector<16xf32>
    %239 = vector.multi_reduction <add>, %238, %cst_138 [1] : vector<16x32xf32> to vector<16xf32>
    %240 = vector.shape_cast %239 : vector<16xf32> to vector<16x1xf32>
    %cst_139 = arith.constant 3.200000e+01 : f32
    %241 = vector.broadcast %cst_139 : f32 to vector<16x1xf32>
    %242 = arith.divf %240, %241 : vector<16x1xf32>
    %243 = vector.broadcast %242 : vector<16x1xf32> to vector<16x32xf32>
    %244 = arith.subf %238, %243 : vector<16x32xf32>
    %245 = arith.mulf %244, %244 : vector<16x32xf32>
    %cst_140 = arith.constant dense<0.000000e+00> : vector<16xf32>
    %246 = vector.multi_reduction <add>, %245, %cst_140 [1] : vector<16x32xf32> to vector<16xf32>
    %247 = vector.shape_cast %246 : vector<16xf32> to vector<16x1xf32>
    %cst_141 = arith.constant 3.200000e+01 : f32
    %248 = vector.broadcast %cst_141 : f32 to vector<16x1xf32>
    %249 = arith.divf %247, %248 : vector<16x1xf32>
    %250 = vector.broadcast %242 : vector<16x1xf32> to vector<16x32xf32>
    %251 = arith.subf %238, %250 : vector<16x32xf32>
    %cst_142 = arith.constant 9.99999974E-6 : f32
    %252 = vector.broadcast %cst_142 : f32 to vector<16x1xf32>
    %253 = arith.addf %249, %252 : vector<16x1xf32>
    %254 = math.rsqrt %253 : vector<16x1xf32>
    %255 = vector.broadcast %254 : vector<16x1xf32> to vector<16x32xf32>
    %256 = arith.mulf %251, %255 : vector<16x32xf32>
    %257 = vector.broadcast %33 : vector<1x32xf32> to vector<16x32xf32>
    %258 = arith.mulf %256, %257 : vector<16x32xf32>
    %259 = vector.broadcast %32 : vector<1x32xf32> to vector<16x32xf32>
    %260 = arith.addf %258, %259 : vector<16x32xf32>
    %cst_143 = arith.constant dense<0.000000e+00> : vector<16x32xf32>
    %261 = tpu.matmul %260, %29, %cst_143 {dimension_numbers = #tpu.dot_dimension_numbers<[1], [0], [0], [1], [0, 0, 1, 1], [], []>} : vector<16x32xf32>, vector<32x32xf32>, vector<16x32xf32> -> vector<16x32xf32>
    %262 = vector.broadcast %28 : vector<1x32xf32> to vector<16x32xf32>
    %263 = arith.addf %261, %262 : vector<16x32xf32>
    %cst_144 = arith.constant 0.000000e+00 : f32
    %264 = vector.broadcast %cst_144 : f32 to vector<16x32xf32>
    %265 = arith.maximumf %263, %264 : vector<16x32xf32>
    %cst_145 = arith.constant dense<0.000000e+00> : vector<16x32xf32>
    %266 = tpu.matmul %265, %31, %cst_145 {dimension_numbers = #tpu.dot_dimension_numbers<[1], [0], [0], [1], [0, 0, 1, 1], [], []>} : vector<16x32xf32>, vector<32x32xf32>, vector<16x32xf32> -> vector<16x32xf32>
    %267 = vector.broadcast %30 : vector<1x32xf32> to vector<16x32xf32>
    %268 = arith.addf %266, %267 : vector<16x32xf32>
    %269 = arith.addf %260, %268 : vector<16x32xf32>
    %cst_146 = arith.constant dense<0.000000e+00> : vector<16xf32>
    %270 = vector.multi_reduction <add>, %269, %cst_146 [1] : vector<16x32xf32> to vector<16xf32>
    %271 = vector.shape_cast %270 : vector<16xf32> to vector<16x1xf32>
    %cst_147 = arith.constant 3.200000e+01 : f32
    %272 = vector.broadcast %cst_147 : f32 to vector<16x1xf32>
    %273 = arith.divf %271, %272 : vector<16x1xf32>
    %274 = vector.broadcast %273 : vector<16x1xf32> to vector<16x32xf32>
    %275 = arith.subf %269, %274 : vector<16x32xf32>
    %276 = arith.mulf %275, %275 : vector<16x32xf32>
    %cst_148 = arith.constant dense<0.000000e+00> : vector<16xf32>
    %277 = vector.multi_reduction <add>, %276, %cst_148 [1] : vector<16x32xf32> to vector<16xf32>
    %278 = vector.shape_cast %277 : vector<16xf32> to vector<16x1xf32>
    %cst_149 = arith.constant 3.200000e+01 : f32
    %279 = vector.broadcast %cst_149 : f32 to vector<16x1xf32>
    %280 = arith.divf %278, %279 : vector<16x1xf32>
    %281 = vector.broadcast %273 : vector<16x1xf32> to vector<16x32xf32>
    %282 = arith.subf %269, %281 : vector<16x32xf32>
    %cst_150 = arith.constant 9.99999974E-6 : f32
    %283 = vector.broadcast %cst_150 : f32 to vector<16x1xf32>
    %284 = arith.addf %280, %283 : vector<16x1xf32>
    %285 = math.rsqrt %284 : vector<16x1xf32>
    %286 = vector.broadcast %285 : vector<16x1xf32> to vector<16x32xf32>
    %287 = arith.mulf %282, %286 : vector<16x32xf32>
    %288 = vector.broadcast %35 : vector<1x32xf32> to vector<16x32xf32>
    %289 = arith.mulf %287, %288 : vector<16x32xf32>
    %290 = vector.broadcast %34 : vector<1x32xf32> to vector<16x32xf32>
    %291 = arith.addf %289, %290 : vector<16x32xf32>
    %cst_151 = arith.constant dense<0.000000e+00> : vector<16xf32>
    %292 = vector.multi_reduction <add>, %291, %cst_151 [1] : vector<16x32xf32> to vector<16xf32>
    %293 = vector.shape_cast %292 : vector<16xf32> to vector<16x1xf32>
    %cst_152 = arith.constant 3.200000e+01 : f32
    %294 = vector.broadcast %cst_152 : f32 to vector<16x1xf32>
    %295 = arith.divf %293, %294 : vector<16x1xf32>
    %296 = vector.broadcast %295 : vector<16x1xf32> to vector<16x32xf32>
    %297 = arith.subf %291, %296 : vector<16x32xf32>
    %298 = arith.mulf %297, %297 : vector<16x32xf32>
    %cst_153 = arith.constant dense<0.000000e+00> : vector<16xf32>
    %299 = vector.multi_reduction <add>, %298, %cst_153 [1] : vector<16x32xf32> to vector<16xf32>
    %300 = vector.shape_cast %299 : vector<16xf32> to vector<16x1xf32>
    %cst_154 = arith.constant 3.200000e+01 : f32
    %301 = vector.broadcast %cst_154 : f32 to vector<16x1xf32>
    %302 = arith.divf %300, %301 : vector<16x1xf32>
    %303 = vector.broadcast %295 : vector<16x1xf32> to vector<16x32xf32>
    %304 = arith.subf %291, %303 : vector<16x32xf32>
    %cst_155 = arith.constant 9.99999974E-6 : f32
    %305 = vector.broadcast %cst_155 : f32 to vector<16x1xf32>
    %306 = arith.addf %302, %305 : vector<16x1xf32>
    %307 = math.rsqrt %306 : vector<16x1xf32>
    %308 = vector.broadcast %307 : vector<16x1xf32> to vector<16x32xf32>
    %309 = arith.mulf %304, %308 : vector<16x32xf32>
    %310 = vector.broadcast %23 : vector<1x32xf32> to vector<16x32xf32>
    %311 = arith.mulf %309, %310 : vector<16x32xf32>
    %312 = vector.broadcast %22 : vector<1x32xf32> to vector<16x32xf32>
    %313 = arith.addf %311, %312 : vector<16x32xf32>
    %cst_156 = arith.constant dense<0.000000e+00> : vector<16x64xf32>
    %314 = tpu.matmul %313, %5, %cst_156 {dimension_numbers = #tpu.dot_dimension_numbers<[1], [0], [0], [1], [0, 0, 1, 1], [], []>} : vector<16x32xf32>, vector<32x64xf32>, vector<16x64xf32> -> vector<16x64xf32>
    %315 = vector.broadcast %2 : vector<1x64xf32> to vector<16x64xf32>
    %316 = arith.addf %314, %315 : vector<16x64xf32>
    %317 = vector.extract_strided_slice %316 {offsets = [0, 0], sizes = [16, 32], strides = [1, 1]} : vector<16x64xf32> to vector<16x32xf32>
    %cst_157 = arith.constant 0.000000e+00 : f32
    %318 = vector.broadcast %cst_157 : f32 to vector<16x32xf32>
    %319 = arith.cmpf ogt, %317, %318 : vector<16x32xf32>
    %cst_158 = arith.constant 1.000000e+00 : f32
    %320 = vector.broadcast %cst_158 : f32 to vector<16x32xf32>
    %321 = arith.addf %317, %320 : vector<16x32xf32>
    %322 = math.exp %317 : vector<16x32xf32>
    %323 = arith.select %319, %321, %322 : vector<16x32xi1>, vector<16x32xf32>
    %324 = vector.shape_cast %323 : vector<16x32xf32> to vector<2x8x32xf32>
    %325 = vector.extract_strided_slice %316 {offsets = [0, 32], sizes = [16, 32], strides = [1, 1]} : vector<16x64xf32> to vector<16x32xf32>
    %326 = vector.shape_cast %325 : vector<16x32xf32> to vector<2x8x32xf32>
    %327 = tpu.iota {dimensions = array<i32: 0>} : vector<8x8xi32>
    %328 = tpu.iota {dimensions = array<i32: 1>} : vector<8x8xi32>
    %329 = arith.cmpi sle, %328, %327 : vector<8x8xi32>
    %330 = arith.extui %329 : vector<8x8xi1> to vector<8x8xi32>
    %331 = arith.sitofp %330 : vector<8x8xi32> to vector<8x8xf32>
    %c0_159 = arith.constant 0 : index
    %c0_160 = arith.constant 0 : index
    %c0_161 = arith.constant 0 : index
    %332 = vector.load %arg1[%c0_159, %c0_160, %c0_161] : memref<2x8x8xf32, #tpu.memory_space<vmem>>, vector<2x8x8xf32>
    %333 = vector.shape_cast %332 : vector<2x8x8xf32> to vector<16x8xf32>
    %cst_162 = arith.constant dense<0.000000e+00> : vector<16x32xf32>
    %334 = tpu.matmul %333, %43, %cst_162 {dimension_numbers = #tpu.dot_dimension_numbers<[1], [0], [0], [1], [0, 0, 1, 1], [], []>} : vector<16x8xf32>, vector<8x32xf32>, vector<16x32xf32> -> vector<16x32xf32>
    %335 = vector.broadcast %42 : vector<1x32xf32> to vector<16x32xf32>
    %336 = arith.addf %334, %335 : vector<16x32xf32>
    %337 = vector.shape_cast %336 : vector<16x32xf32> to vector<2x8x32xf32>
    %338 = vector.shape_cast %39 : vector<8x32xf32> to vector<1x8x32xf32>
    %339 = vector.broadcast %338 : vector<1x8x32xf32> to vector<2x8x32xf32>
    %340 = arith.addf %337, %339 : vector<2x8x32xf32>
    %341 = vector.shape_cast %340 : vector<2x8x32xf32> to vector<16x32xf32>
    %cst_163 = arith.constant dense<0.000000e+00> : vector<16x96xf32>
    %342 = tpu.matmul %341, %21, %cst_163 {dimension_numbers = #tpu.dot_dimension_numbers<[1], [0], [0], [1], [0, 0, 1, 1], [], []>} : vector<16x32xf32>, vector<32x96xf32>, vector<16x96xf32> -> vector<16x96xf32>
    %343 = vector.broadcast %19 : vector<1x96xf32> to vector<16x96xf32>
    %344 = arith.addf %342, %343 : vector<16x96xf32>
    %345 = vector.extract_strided_slice %344 {offsets = [0, 0], sizes = [16, 32], strides = [1, 1]} : vector<16x96xf32> to vector<16x32xf32>
    %346 = vector.shape_cast %345 : vector<16x32xf32> to vector<2x8x32xf32>
    %347 = vector.extract_strided_slice %344 {offsets = [0, 32], sizes = [16, 32], strides = [1, 1]} : vector<16x96xf32> to vector<16x32xf32>
    %cst_164 = arith.constant 0.000000e+00 : f32
    %348 = vector.broadcast %cst_164 : f32 to vector<16x32xf32>
    %349 = arith.cmpf ogt, %347, %348 : vector<16x32xf32>
    %cst_165 = arith.constant 1.000000e+00 : f32
    %350 = vector.broadcast %cst_165 : f32 to vector<16x32xf32>
    %351 = arith.addf %347, %350 : vector<16x32xf32>
    %352 = math.exp %347 : vector<16x32xf32>
    %353 = arith.select %349, %351, %352 : vector<16x32xi1>, vector<16x32xf32>
    %354 = vector.shape_cast %353 : vector<16x32xf32> to vector<2x8x32xf32>
    %355 = vector.extract_strided_slice %344 {offsets = [0, 64], sizes = [16, 32], strides = [1, 1]} : vector<16x96xf32> to vector<16x32xf32>
    %356 = vector.shape_cast %355 : vector<16x32xf32> to vector<2x8x32xf32>
    %cst_166 = arith.constant 0.000000e+00 : f32
    %357 = vector.broadcast %cst_166 : f32 to vector<2x8x32xf32>
    %358 = arith.cmpf ogt, %346, %357 : vector<2x8x32xf32>
    %cst_167 = arith.constant 1.000000e+00 : f32
    %359 = vector.broadcast %cst_167 : f32 to vector<2x8x32xf32>
    %360 = arith.addf %346, %359 : vector<2x8x32xf32>
    %361 = math.exp %346 : vector<2x8x32xf32>
    %362 = arith.select %358, %360, %361 : vector<2x8x32xi1>, vector<2x8x32xf32>
    %363 = vector.extract_strided_slice %362 {offsets = [0, 0, 0], sizes = [2, 8, 16], strides = [1, 1, 1]} : vector<2x8x32xf32> to vector<2x8x16xf32>
    %364 = vector.extract_strided_slice %354 {offsets = [0, 0, 0], sizes = [2, 8, 16], strides = [1, 1, 1]} : vector<2x8x32xf32> to vector<2x8x16xf32>
    "tpu.trace_start"() <{level = 10 : i32, message = "bld,bsd->bls"}> : () -> ()
    %cst_168 = arith.constant dense<0.000000e+00> : vector<2x8x8xf32>
    %365 = tpu.matmul %363, %364, %cst_168 {dimension_numbers = #tpu.dot_dimension_numbers<[2], [2], [1], [1], [0, 0, 0, 1, 1, 1], [0], [0]>} : vector<2x8x16xf32>, vector<2x8x16xf32>, vector<2x8x8xf32> -> vector<2x8x8xf32>
    "tpu.trace_stop"() : () -> ()
    %366 = vector.shape_cast %331 : vector<8x8xf32> to vector<1x8x8xf32>
    %367 = vector.broadcast %366 : vector<1x8x8xf32> to vector<2x8x8xf32>
    %368 = arith.mulf %365, %367 : vector<2x8x8xf32>
    %cst_169 = arith.constant dense<0.000000e+00> : vector<2x8xf32>
    %369 = vector.multi_reduction <add>, %368, %cst_169 [2] : vector<2x8x8xf32> to vector<2x8xf32>
    %370 = vector.shape_cast %369 : vector<2x8xf32> to vector<2x8x1xf32>
    %cst_170 = arith.constant 9.99999997E-7 : f32
    %371 = vector.broadcast %cst_170 : f32 to vector<2x8x1xf32>
    %372 = arith.addf %370, %371 : vector<2x8x1xf32>
    %373 = tpu.reciprocal %372 {approx = true} : vector<2x8x1xf32> -> vector<2x8x1xf32>
    %374 = vector.broadcast %373 : vector<2x8x1xf32> to vector<2x8x8xf32>
    %375 = arith.mulf %368, %374 : vector<2x8x8xf32>
    %376 = vector.extract_strided_slice %356 {offsets = [0, 0, 0], sizes = [2, 8, 16], strides = [1, 1, 1]} : vector<2x8x32xf32> to vector<2x8x16xf32>
    "tpu.trace_start"() <{level = 10 : i32, message = "bls,bsm->blm"}> : () -> ()
    %cst_171 = arith.constant dense<0.000000e+00> : vector<2x8x16xf32>
    %377 = tpu.matmul %375, %376, %cst_171 {dimension_numbers = #tpu.dot_dimension_numbers<[2], [1], [1], [2], [0, 0, 0, 1, 1, 2], [0], [0]>} : vector<2x8x8xf32>, vector<2x8x16xf32>, vector<2x8x16xf32> -> vector<2x8x16xf32>
    "tpu.trace_stop"() : () -> ()
    %378 = vector.shape_cast %377 : vector<2x8x16xf32> to vector<16x16xf32>
    %379 = vector.extract_strided_slice %20 {offsets = [0, 0], sizes = [16, 32], strides = [1, 1]} : vector<32x32xf32> to vector<16x32xf32>
    %cst_172 = arith.constant dense<0.000000e+00> : vector<16x32xf32>
    %380 = tpu.matmul %378, %379, %cst_172 {dimension_numbers = #tpu.dot_dimension_numbers<[1], [0], [0], [1], [0, 0, 1, 1], [], []>} : vector<16x16xf32>, vector<16x32xf32>, vector<16x32xf32> -> vector<16x32xf32>
    %381 = vector.extract_strided_slice %362 {offsets = [0, 0, 16], sizes = [2, 8, 16], strides = [1, 1, 1]} : vector<2x8x32xf32> to vector<2x8x16xf32>
    %382 = vector.extract_strided_slice %354 {offsets = [0, 0, 16], sizes = [2, 8, 16], strides = [1, 1, 1]} : vector<2x8x32xf32> to vector<2x8x16xf32>
    "tpu.trace_start"() <{level = 10 : i32, message = "bld,bsd->bls"}> : () -> ()
    %cst_173 = arith.constant dense<0.000000e+00> : vector<2x8x8xf32>
    %383 = tpu.matmul %381, %382, %cst_173 {dimension_numbers = #tpu.dot_dimension_numbers<[2], [2], [1], [1], [0, 0, 0, 1, 1, 1], [0], [0]>} : vector<2x8x16xf32>, vector<2x8x16xf32>, vector<2x8x8xf32> -> vector<2x8x8xf32>
    "tpu.trace_stop"() : () -> ()
    %384 = vector.shape_cast %331 : vector<8x8xf32> to vector<1x8x8xf32>
    %385 = vector.broadcast %384 : vector<1x8x8xf32> to vector<2x8x8xf32>
    %386 = arith.mulf %383, %385 : vector<2x8x8xf32>
    %cst_174 = arith.constant dense<0.000000e+00> : vector<2x8xf32>
    %387 = vector.multi_reduction <add>, %386, %cst_174 [2] : vector<2x8x8xf32> to vector<2x8xf32>
    %388 = vector.shape_cast %387 : vector<2x8xf32> to vector<2x8x1xf32>
    %cst_175 = arith.constant 9.99999997E-7 : f32
    %389 = vector.broadcast %cst_175 : f32 to vector<2x8x1xf32>
    %390 = arith.addf %388, %389 : vector<2x8x1xf32>
    %391 = tpu.reciprocal %390 {approx = true} : vector<2x8x1xf32> -> vector<2x8x1xf32>
    %392 = vector.broadcast %391 : vector<2x8x1xf32> to vector<2x8x8xf32>
    %393 = arith.mulf %386, %392 : vector<2x8x8xf32>
    %394 = vector.extract_strided_slice %356 {offsets = [0, 0, 16], sizes = [2, 8, 16], strides = [1, 1, 1]} : vector<2x8x32xf32> to vector<2x8x16xf32>
    "tpu.trace_start"() <{level = 10 : i32, message = "bls,bsm->blm"}> : () -> ()
    %cst_176 = arith.constant dense<0.000000e+00> : vector<2x8x16xf32>
    %395 = tpu.matmul %393, %394, %cst_176 {dimension_numbers = #tpu.dot_dimension_numbers<[2], [1], [1], [2], [0, 0, 0, 1, 1, 2], [0], [0]>} : vector<2x8x8xf32>, vector<2x8x16xf32>, vector<2x8x16xf32> -> vector<2x8x16xf32>
    "tpu.trace_stop"() : () -> ()
    %396 = vector.shape_cast %395 : vector<2x8x16xf32> to vector<16x16xf32>
    %397 = vector.extract_strided_slice %20 {offsets = [16, 0], sizes = [16, 32], strides = [1, 1]} : vector<32x32xf32> to vector<16x32xf32>
    %cst_177 = arith.constant dense<0.000000e+00> : vector<16x32xf32>
    %398 = tpu.matmul %396, %397, %cst_177 {dimension_numbers = #tpu.dot_dimension_numbers<[1], [0], [0], [1], [0, 0, 1, 1], [], []>} : vector<16x16xf32>, vector<16x32xf32>, vector<16x32xf32> -> vector<16x32xf32>
    %399 = arith.addf %380, %398 : vector<16x32xf32>
    %400 = arith.addf %341, %399 : vector<16x32xf32>
    %401 = vector.broadcast %18 : vector<1x32xf32> to vector<16x32xf32>
    %402 = arith.addf %400, %401 : vector<16x32xf32>
    %cst_178 = arith.constant dense<0.000000e+00> : vector<16xf32>
    %403 = vector.multi_reduction <add>, %402, %cst_178 [1] : vector<16x32xf32> to vector<16xf32>
    %404 = vector.shape_cast %403 : vector<16xf32> to vector<16x1xf32>
    %cst_179 = arith.constant 3.200000e+01 : f32
    %405 = vector.broadcast %cst_179 : f32 to vector<16x1xf32>
    %406 = arith.divf %404, %405 : vector<16x1xf32>
    %407 = vector.broadcast %406 : vector<16x1xf32> to vector<16x32xf32>
    %408 = arith.subf %402, %407 : vector<16x32xf32>
    %409 = arith.mulf %408, %408 : vector<16x32xf32>
    %cst_180 = arith.constant dense<0.000000e+00> : vector<16xf32>
    %410 = vector.multi_reduction <add>, %409, %cst_180 [1] : vector<16x32xf32> to vector<16xf32>
    %411 = vector.shape_cast %410 : vector<16xf32> to vector<16x1xf32>
    %cst_181 = arith.constant 3.200000e+01 : f32
    %412 = vector.broadcast %cst_181 : f32 to vector<16x1xf32>
    %413 = arith.divf %411, %412 : vector<16x1xf32>
    %414 = vector.broadcast %406 : vector<16x1xf32> to vector<16x32xf32>
    %415 = arith.subf %402, %414 : vector<16x32xf32>
    %cst_182 = arith.constant 9.99999974E-6 : f32
    %416 = vector.broadcast %cst_182 : f32 to vector<16x1xf32>
    %417 = arith.addf %413, %416 : vector<16x1xf32>
    %418 = math.rsqrt %417 : vector<16x1xf32>
    %419 = vector.broadcast %418 : vector<16x1xf32> to vector<16x32xf32>
    %420 = arith.mulf %415, %419 : vector<16x32xf32>
    %421 = vector.broadcast %13 : vector<1x32xf32> to vector<16x32xf32>
    %422 = arith.mulf %420, %421 : vector<16x32xf32>
    %423 = vector.broadcast %12 : vector<1x32xf32> to vector<16x32xf32>
    %424 = arith.addf %422, %423 : vector<16x32xf32>
    %cst_183 = arith.constant dense<0.000000e+00> : vector<16x32xf32>
    %425 = tpu.matmul %424, %7, %cst_183 {dimension_numbers = #tpu.dot_dimension_numbers<[1], [0], [0], [1], [0, 0, 1, 1], [], []>} : vector<16x32xf32>, vector<32x32xf32>, vector<16x32xf32> -> vector<16x32xf32>
    %426 = vector.broadcast %4 : vector<1x32xf32> to vector<16x32xf32>
    %427 = arith.addf %425, %426 : vector<16x32xf32>
    %428 = vector.shape_cast %427 : vector<16x32xf32> to vector<2x8x32xf32>
    %cst_184 = arith.constant 0.000000e+00 : f32
    %429 = vector.broadcast %cst_184 : f32 to vector<2x8x32xf32>
    %430 = arith.cmpf ogt, %428, %429 : vector<2x8x32xf32>
    %cst_185 = arith.constant 1.000000e+00 : f32
    %431 = vector.broadcast %cst_185 : f32 to vector<2x8x32xf32>
    %432 = arith.addf %428, %431 : vector<2x8x32xf32>
    %433 = math.exp %428 : vector<2x8x32xf32>
    %434 = arith.select %430, %432, %433 : vector<2x8x32xi1>, vector<2x8x32xf32>
    %435 = vector.extract_strided_slice %434 {offsets = [0, 0, 0], sizes = [2, 8, 16], strides = [1, 1, 1]} : vector<2x8x32xf32> to vector<2x8x16xf32>
    %436 = vector.extract_strided_slice %324 {offsets = [0, 0, 0], sizes = [2, 8, 16], strides = [1, 1, 1]} : vector<2x8x32xf32> to vector<2x8x16xf32>
    "tpu.trace_start"() <{level = 10 : i32, message = "bld,bsd->bls"}> : () -> ()
    %cst_186 = arith.constant dense<0.000000e+00> : vector<2x8x8xf32>
    %437 = tpu.matmul %435, %436, %cst_186 {dimension_numbers = #tpu.dot_dimension_numbers<[2], [2], [1], [1], [0, 0, 0, 1, 1, 1], [0], [0]>} : vector<2x8x16xf32>, vector<2x8x16xf32>, vector<2x8x8xf32> -> vector<2x8x8xf32>
    "tpu.trace_stop"() : () -> ()
    %cst_187 = arith.constant dense<0.000000e+00> : vector<2x8xf32>
    %438 = vector.multi_reduction <add>, %437, %cst_187 [2] : vector<2x8x8xf32> to vector<2x8xf32>
    %439 = vector.shape_cast %438 : vector<2x8xf32> to vector<2x8x1xf32>
    %cst_188 = arith.constant 9.99999997E-7 : f32
    %440 = vector.broadcast %cst_188 : f32 to vector<2x8x1xf32>
    %441 = arith.addf %439, %440 : vector<2x8x1xf32>
    %442 = tpu.reciprocal %441 {approx = true} : vector<2x8x1xf32> -> vector<2x8x1xf32>
    %443 = vector.broadcast %442 : vector<2x8x1xf32> to vector<2x8x8xf32>
    %444 = arith.mulf %437, %443 : vector<2x8x8xf32>
    %445 = vector.extract_strided_slice %326 {offsets = [0, 0, 0], sizes = [2, 8, 16], strides = [1, 1, 1]} : vector<2x8x32xf32> to vector<2x8x16xf32>
    "tpu.trace_start"() <{level = 10 : i32, message = "bls,bsm->blm"}> : () -> ()
    %cst_189 = arith.constant dense<0.000000e+00> : vector<2x8x16xf32>
    %446 = tpu.matmul %444, %445, %cst_189 {dimension_numbers = #tpu.dot_dimension_numbers<[2], [1], [1], [2], [0, 0, 0, 1, 1, 2], [0], [0]>} : vector<2x8x8xf32>, vector<2x8x16xf32>, vector<2x8x16xf32> -> vector<2x8x16xf32>
    "tpu.trace_stop"() : () -> ()
    %447 = vector.shape_cast %446 : vector<2x8x16xf32> to vector<16x16xf32>
    %448 = vector.extract_strided_slice %6 {offsets = [0, 0], sizes = [16, 32], strides = [1, 1]} : vector<32x32xf32> to vector<16x32xf32>
    %cst_190 = arith.constant dense<0.000000e+00> : vector<16x32xf32>
    %449 = tpu.matmul %447, %448, %cst_190 {dimension_numbers = #tpu.dot_dimension_numbers<[1], [0], [0], [1], [0, 0, 1, 1], [], []>} : vector<16x16xf32>, vector<16x32xf32>, vector<16x32xf32> -> vector<16x32xf32>
    %450 = vector.extract_strided_slice %434 {offsets = [0, 0, 16], sizes = [2, 8, 16], strides = [1, 1, 1]} : vector<2x8x32xf32> to vector<2x8x16xf32>
    %451 = vector.extract_strided_slice %324 {offsets = [0, 0, 16], sizes = [2, 8, 16], strides = [1, 1, 1]} : vector<2x8x32xf32> to vector<2x8x16xf32>
    "tpu.trace_start"() <{level = 10 : i32, message = "bld,bsd->bls"}> : () -> ()
    %cst_191 = arith.constant dense<0.000000e+00> : vector<2x8x8xf32>
    %452 = tpu.matmul %450, %451, %cst_191 {dimension_numbers = #tpu.dot_dimension_numbers<[2], [2], [1], [1], [0, 0, 0, 1, 1, 1], [0], [0]>} : vector<2x8x16xf32>, vector<2x8x16xf32>, vector<2x8x8xf32> -> vector<2x8x8xf32>
    "tpu.trace_stop"() : () -> ()
    %cst_192 = arith.constant dense<0.000000e+00> : vector<2x8xf32>
    %453 = vector.multi_reduction <add>, %452, %cst_192 [2] : vector<2x8x8xf32> to vector<2x8xf32>
    %454 = vector.shape_cast %453 : vector<2x8xf32> to vector<2x8x1xf32>
    %cst_193 = arith.constant 9.99999997E-7 : f32
    %455 = vector.broadcast %cst_193 : f32 to vector<2x8x1xf32>
    %456 = arith.addf %454, %455 : vector<2x8x1xf32>
    %457 = tpu.reciprocal %456 {approx = true} : vector<2x8x1xf32> -> vector<2x8x1xf32>
    %458 = vector.broadcast %457 : vector<2x8x1xf32> to vector<2x8x8xf32>
    %459 = arith.mulf %452, %458 : vector<2x8x8xf32>
    %460 = vector.extract_strided_slice %326 {offsets = [0, 0, 16], sizes = [2, 8, 16], strides = [1, 1, 1]} : vector<2x8x32xf32> to vector<2x8x16xf32>
    "tpu.trace_start"() <{level = 10 : i32, message = "bls,bsm->blm"}> : () -> ()
    %cst_194 = arith.constant dense<0.000000e+00> : vector<2x8x16xf32>
    %461 = tpu.matmul %459, %460, %cst_194 {dimension_numbers = #tpu.dot_dimension_numbers<[2], [1], [1], [2], [0, 0, 0, 1, 1, 2], [0], [0]>} : vector<2x8x8xf32>, vector<2x8x16xf32>, vector<2x8x16xf32> -> vector<2x8x16xf32>
    "tpu.trace_stop"() : () -> ()
    %462 = vector.shape_cast %461 : vector<2x8x16xf32> to vector<16x16xf32>
    %463 = vector.extract_strided_slice %6 {offsets = [16, 0], sizes = [16, 32], strides = [1, 1]} : vector<32x32xf32> to vector<16x32xf32>
    %cst_195 = arith.constant dense<0.000000e+00> : vector<16x32xf32>
    %464 = tpu.matmul %462, %463, %cst_195 {dimension_numbers = #tpu.dot_dimension_numbers<[1], [0], [0], [1], [0, 0, 1, 1], [], []>} : vector<16x16xf32>, vector<16x32xf32>, vector<16x32xf32> -> vector<16x32xf32>
    %465 = arith.addf %449, %464 : vector<16x32xf32>
    %466 = arith.addf %424, %465 : vector<16x32xf32>
    %467 = vector.broadcast %3 : vector<1x32xf32> to vector<16x32xf32>
    %468 = arith.addf %466, %467 : vector<16x32xf32>
    %cst_196 = arith.constant dense<0.000000e+00> : vector<16xf32>
    %469 = vector.multi_reduction <add>, %468, %cst_196 [1] : vector<16x32xf32> to vector<16xf32>
    %470 = vector.shape_cast %469 : vector<16xf32> to vector<16x1xf32>
    %cst_197 = arith.constant 3.200000e+01 : f32
    %471 = vector.broadcast %cst_197 : f32 to vector<16x1xf32>
    %472 = arith.divf %470, %471 : vector<16x1xf32>
    %473 = vector.broadcast %472 : vector<16x1xf32> to vector<16x32xf32>
    %474 = arith.subf %468, %473 : vector<16x32xf32>
    %475 = arith.mulf %474, %474 : vector<16x32xf32>
    %cst_198 = arith.constant dense<0.000000e+00> : vector<16xf32>
    %476 = vector.multi_reduction <add>, %475, %cst_198 [1] : vector<16x32xf32> to vector<16xf32>
    %477 = vector.shape_cast %476 : vector<16xf32> to vector<16x1xf32>
    %cst_199 = arith.constant 3.200000e+01 : f32
    %478 = vector.broadcast %cst_199 : f32 to vector<16x1xf32>
    %479 = arith.divf %477, %478 : vector<16x1xf32>
    %480 = vector.broadcast %472 : vector<16x1xf32> to vector<16x32xf32>
    %481 = arith.subf %468, %480 : vector<16x32xf32>
    %cst_200 = arith.constant 9.99999974E-6 : f32
    %482 = vector.broadcast %cst_200 : f32 to vector<16x1xf32>
    %483 = arith.addf %479, %482 : vector<16x1xf32>
    %484 = math.rsqrt %483 : vector<16x1xf32>
    %485 = vector.broadcast %484 : vector<16x1xf32> to vector<16x32xf32>
    %486 = arith.mulf %481, %485 : vector<16x32xf32>
    %487 = vector.broadcast %15 : vector<1x32xf32> to vector<16x32xf32>
    %488 = arith.mulf %486, %487 : vector<16x32xf32>
    %489 = vector.broadcast %14 : vector<1x32xf32> to vector<16x32xf32>
    %490 = arith.addf %488, %489 : vector<16x32xf32>
    %cst_201 = arith.constant dense<0.000000e+00> : vector<16x32xf32>
    %491 = tpu.matmul %490, %9, %cst_201 {dimension_numbers = #tpu.dot_dimension_numbers<[1], [0], [0], [1], [0, 0, 1, 1], [], []>} : vector<16x32xf32>, vector<32x32xf32>, vector<16x32xf32> -> vector<16x32xf32>
    %492 = vector.broadcast %8 : vector<1x32xf32> to vector<16x32xf32>
    %493 = arith.addf %491, %492 : vector<16x32xf32>
    %cst_202 = arith.constant 0.000000e+00 : f32
    %494 = vector.broadcast %cst_202 : f32 to vector<16x32xf32>
    %495 = arith.maximumf %493, %494 : vector<16x32xf32>
    %cst_203 = arith.constant dense<0.000000e+00> : vector<16x32xf32>
    %496 = tpu.matmul %495, %11, %cst_203 {dimension_numbers = #tpu.dot_dimension_numbers<[1], [0], [0], [1], [0, 0, 1, 1], [], []>} : vector<16x32xf32>, vector<32x32xf32>, vector<16x32xf32> -> vector<16x32xf32>
    %497 = vector.broadcast %10 : vector<1x32xf32> to vector<16x32xf32>
    %498 = arith.addf %496, %497 : vector<16x32xf32>
    %499 = arith.addf %490, %498 : vector<16x32xf32>
    %cst_204 = arith.constant dense<0.000000e+00> : vector<16xf32>
    %500 = vector.multi_reduction <add>, %499, %cst_204 [1] : vector<16x32xf32> to vector<16xf32>
    %501 = vector.shape_cast %500 : vector<16xf32> to vector<16x1xf32>
    %cst_205 = arith.constant 3.200000e+01 : f32
    %502 = vector.broadcast %cst_205 : f32 to vector<16x1xf32>
    %503 = arith.divf %501, %502 : vector<16x1xf32>
    %504 = vector.broadcast %503 : vector<16x1xf32> to vector<16x32xf32>
    %505 = arith.subf %499, %504 : vector<16x32xf32>
    %506 = arith.mulf %505, %505 : vector<16x32xf32>
    %cst_206 = arith.constant dense<0.000000e+00> : vector<16xf32>
    %507 = vector.multi_reduction <add>, %506, %cst_206 [1] : vector<16x32xf32> to vector<16xf32>
    %508 = vector.shape_cast %507 : vector<16xf32> to vector<16x1xf32>
    %cst_207 = arith.constant 3.200000e+01 : f32
    %509 = vector.broadcast %cst_207 : f32 to vector<16x1xf32>
    %510 = arith.divf %508, %509 : vector<16x1xf32>
    %511 = vector.broadcast %503 : vector<16x1xf32> to vector<16x32xf32>
    %512 = arith.subf %499, %511 : vector<16x32xf32>
    %cst_208 = arith.constant 9.99999974E-6 : f32
    %513 = vector.broadcast %cst_208 : f32 to vector<16x1xf32>
    %514 = arith.addf %510, %513 : vector<16x1xf32>
    %515 = math.rsqrt %514 : vector<16x1xf32>
    %516 = vector.broadcast %515 : vector<16x1xf32> to vector<16x32xf32>
    %517 = arith.mulf %512, %516 : vector<16x32xf32>
    %518 = vector.broadcast %17 : vector<1x32xf32> to vector<16x32xf32>
    %519 = arith.mulf %517, %518 : vector<16x32xf32>
    %520 = vector.broadcast %16 : vector<1x32xf32> to vector<16x32xf32>
    %521 = arith.addf %519, %520 : vector<16x32xf32>
    %cst_209 = arith.constant dense<0.000000e+00> : vector<16xf32>
    %522 = vector.multi_reduction <add>, %521, %cst_209 [1] : vector<16x32xf32> to vector<16xf32>
    %523 = vector.shape_cast %522 : vector<16xf32> to vector<16x1xf32>
    %cst_210 = arith.constant 3.200000e+01 : f32
    %524 = vector.broadcast %cst_210 : f32 to vector<16x1xf32>
    %525 = arith.divf %523, %524 : vector<16x1xf32>
    %526 = vector.broadcast %525 : vector<16x1xf32> to vector<16x32xf32>
    %527 = arith.subf %521, %526 : vector<16x32xf32>
    %528 = arith.mulf %527, %527 : vector<16x32xf32>
    %cst_211 = arith.constant dense<0.000000e+00> : vector<16xf32>
    %529 = vector.multi_reduction <add>, %528, %cst_211 [1] : vector<16x32xf32> to vector<16xf32>
    %530 = vector.shape_cast %529 : vector<16xf32> to vector<16x1xf32>
    %cst_212 = arith.constant 3.200000e+01 : f32
    %531 = vector.broadcast %cst_212 : f32 to vector<16x1xf32>
    %532 = arith.divf %530, %531 : vector<16x1xf32>
    %533 = vector.broadcast %525 : vector<16x1xf32> to vector<16x32xf32>
    %534 = arith.subf %521, %533 : vector<16x32xf32>
    %cst_213 = arith.constant 9.99999974E-6 : f32
    %535 = vector.broadcast %cst_213 : f32 to vector<16x1xf32>
    %536 = arith.addf %532, %535 : vector<16x1xf32>
    %537 = math.rsqrt %536 : vector<16x1xf32>
    %538 = vector.broadcast %537 : vector<16x1xf32> to vector<16x32xf32>
    %539 = arith.mulf %534, %538 : vector<16x32xf32>
    %540 = vector.broadcast %1 : vector<1x32xf32> to vector<16x32xf32>
    %541 = arith.mulf %539, %540 : vector<16x32xf32>
    %542 = vector.broadcast %0 : vector<1x32xf32> to vector<16x32xf32>
    %543 = arith.addf %541, %542 : vector<16x32xf32>
    %cst_214 = arith.constant dense<0.000000e+00> : vector<16x96xf32>
    %544 = tpu.matmul %543, %21, %cst_214 {dimension_numbers = #tpu.dot_dimension_numbers<[1], [0], [0], [1], [0, 0, 1, 1], [], []>} : vector<16x32xf32>, vector<32x96xf32>, vector<16x96xf32> -> vector<16x96xf32>
    %545 = vector.broadcast %19 : vector<1x96xf32> to vector<16x96xf32>
    %546 = arith.addf %544, %545 : vector<16x96xf32>
    %547 = vector.extract_strided_slice %546 {offsets = [0, 0], sizes = [16, 32], strides = [1, 1]} : vector<16x96xf32> to vector<16x32xf32>
    %548 = vector.shape_cast %547 : vector<16x32xf32> to vector<2x8x32xf32>
    %549 = vector.extract_strided_slice %546 {offsets = [0, 32], sizes = [16, 32], strides = [1, 1]} : vector<16x96xf32> to vector<16x32xf32>
    %cst_215 = arith.constant 0.000000e+00 : f32
    %550 = vector.broadcast %cst_215 : f32 to vector<16x32xf32>
    %551 = arith.cmpf ogt, %549, %550 : vector<16x32xf32>
    %cst_216 = arith.constant 1.000000e+00 : f32
    %552 = vector.broadcast %cst_216 : f32 to vector<16x32xf32>
    %553 = arith.addf %549, %552 : vector<16x32xf32>
    %554 = math.exp %549 : vector<16x32xf32>
    %555 = arith.select %551, %553, %554 : vector<16x32xi1>, vector<16x32xf32>
    %556 = vector.shape_cast %555 : vector<16x32xf32> to vector<2x8x32xf32>
    %557 = vector.extract_strided_slice %546 {offsets = [0, 64], sizes = [16, 32], strides = [1, 1]} : vector<16x96xf32> to vector<16x32xf32>
    %558 = vector.shape_cast %557 : vector<16x32xf32> to vector<2x8x32xf32>
    %cst_217 = arith.constant 0.000000e+00 : f32
    %559 = vector.broadcast %cst_217 : f32 to vector<2x8x32xf32>
    %560 = arith.cmpf ogt, %548, %559 : vector<2x8x32xf32>
    %cst_218 = arith.constant 1.000000e+00 : f32
    %561 = vector.broadcast %cst_218 : f32 to vector<2x8x32xf32>
    %562 = arith.addf %548, %561 : vector<2x8x32xf32>
    %563 = math.exp %548 : vector<2x8x32xf32>
    %564 = arith.select %560, %562, %563 : vector<2x8x32xi1>, vector<2x8x32xf32>
    %565 = vector.extract_strided_slice %564 {offsets = [0, 0, 0], sizes = [2, 8, 16], strides = [1, 1, 1]} : vector<2x8x32xf32> to vector<2x8x16xf32>
    %566 = vector.extract_strided_slice %556 {offsets = [0, 0, 0], sizes = [2, 8, 16], strides = [1, 1, 1]} : vector<2x8x32xf32> to vector<2x8x16xf32>
    "tpu.trace_start"() <{level = 10 : i32, message = "bld,bsd->bls"}> : () -> ()
    %cst_219 = arith.constant dense<0.000000e+00> : vector<2x8x8xf32>
    %567 = tpu.matmul %565, %566, %cst_219 {dimension_numbers = #tpu.dot_dimension_numbers<[2], [2], [1], [1], [0, 0, 0, 1, 1, 1], [0], [0]>} : vector<2x8x16xf32>, vector<2x8x16xf32>, vector<2x8x8xf32> -> vector<2x8x8xf32>
    "tpu.trace_stop"() : () -> ()
    %568 = vector.shape_cast %331 : vector<8x8xf32> to vector<1x8x8xf32>
    %569 = vector.broadcast %568 : vector<1x8x8xf32> to vector<2x8x8xf32>
    %570 = arith.mulf %567, %569 : vector<2x8x8xf32>
    %cst_220 = arith.constant dense<0.000000e+00> : vector<2x8xf32>
    %571 = vector.multi_reduction <add>, %570, %cst_220 [2] : vector<2x8x8xf32> to vector<2x8xf32>
    %572 = vector.shape_cast %571 : vector<2x8xf32> to vector<2x8x1xf32>
    %cst_221 = arith.constant 9.99999997E-7 : f32
    %573 = vector.broadcast %cst_221 : f32 to vector<2x8x1xf32>
    %574 = arith.addf %572, %573 : vector<2x8x1xf32>
    %575 = tpu.reciprocal %574 {approx = true} : vector<2x8x1xf32> -> vector<2x8x1xf32>
    %576 = vector.broadcast %575 : vector<2x8x1xf32> to vector<2x8x8xf32>
    %577 = arith.mulf %570, %576 : vector<2x8x8xf32>
    %578 = vector.extract_strided_slice %558 {offsets = [0, 0, 0], sizes = [2, 8, 16], strides = [1, 1, 1]} : vector<2x8x32xf32> to vector<2x8x16xf32>
    "tpu.trace_start"() <{level = 10 : i32, message = "bls,bsm->blm"}> : () -> ()
    %cst_222 = arith.constant dense<0.000000e+00> : vector<2x8x16xf32>
    %579 = tpu.matmul %577, %578, %cst_222 {dimension_numbers = #tpu.dot_dimension_numbers<[2], [1], [1], [2], [0, 0, 0, 1, 1, 2], [0], [0]>} : vector<2x8x8xf32>, vector<2x8x16xf32>, vector<2x8x16xf32> -> vector<2x8x16xf32>
    "tpu.trace_stop"() : () -> ()
    %580 = vector.shape_cast %579 : vector<2x8x16xf32> to vector<16x16xf32>
    %581 = vector.extract_strided_slice %20 {offsets = [0, 0], sizes = [16, 32], strides = [1, 1]} : vector<32x32xf32> to vector<16x32xf32>
    %cst_223 = arith.constant dense<0.000000e+00> : vector<16x32xf32>
    %582 = tpu.matmul %580, %581, %cst_223 {dimension_numbers = #tpu.dot_dimension_numbers<[1], [0], [0], [1], [0, 0, 1, 1], [], []>} : vector<16x16xf32>, vector<16x32xf32>, vector<16x32xf32> -> vector<16x32xf32>
    %583 = vector.extract_strided_slice %564 {offsets = [0, 0, 16], sizes = [2, 8, 16], strides = [1, 1, 1]} : vector<2x8x32xf32> to vector<2x8x16xf32>
    %584 = vector.extract_strided_slice %556 {offsets = [0, 0, 16], sizes = [2, 8, 16], strides = [1, 1, 1]} : vector<2x8x32xf32> to vector<2x8x16xf32>
    "tpu.trace_start"() <{level = 10 : i32, message = "bld,bsd->bls"}> : () -> ()
    %cst_224 = arith.constant dense<0.000000e+00> : vector<2x8x8xf32>
    %585 = tpu.matmul %583, %584, %cst_224 {dimension_numbers = #tpu.dot_dimension_numbers<[2], [2], [1], [1], [0, 0, 0, 1, 1, 1], [0], [0]>} : vector<2x8x16xf32>, vector<2x8x16xf32>, vector<2x8x8xf32> -> vector<2x8x8xf32>
    "tpu.trace_stop"() : () -> ()
    %586 = vector.shape_cast %331 : vector<8x8xf32> to vector<1x8x8xf32>
    %587 = vector.broadcast %586 : vector<1x8x8xf32> to vector<2x8x8xf32>
    %588 = arith.mulf %585, %587 : vector<2x8x8xf32>
    %cst_225 = arith.constant dense<0.000000e+00> : vector<2x8xf32>
    %589 = vector.multi_reduction <add>, %588, %cst_225 [2] : vector<2x8x8xf32> to vector<2x8xf32>
    %590 = vector.shape_cast %589 : vector<2x8xf32> to vector<2x8x1xf32>
    %cst_226 = arith.constant 9.99999997E-7 : f32
    %591 = vector.broadcast %cst_226 : f32 to vector<2x8x1xf32>
    %592 = arith.addf %590, %591 : vector<2x8x1xf32>
    %593 = tpu.reciprocal %592 {approx = true} : vector<2x8x1xf32> -> vector<2x8x1xf32>
    %594 = vector.broadcast %593 : vector<2x8x1xf32> to vector<2x8x8xf32>
    %595 = arith.mulf %588, %594 : vector<2x8x8xf32>
    %596 = vector.extract_strided_slice %558 {offsets = [0, 0, 16], sizes = [2, 8, 16], strides = [1, 1, 1]} : vector<2x8x32xf32> to vector<2x8x16xf32>
    "tpu.trace_start"() <{level = 10 : i32, message = "bls,bsm->blm"}> : () -> ()
    %cst_227 = arith.constant dense<0.000000e+00> : vector<2x8x16xf32>
    %597 = tpu.matmul %595, %596, %cst_227 {dimension_numbers = #tpu.dot_dimension_numbers<[2], [1], [1], [2], [0, 0, 0, 1, 1, 2], [0], [0]>} : vector<2x8x8xf32>, vector<2x8x16xf32>, vector<2x8x16xf32> -> vector<2x8x16xf32>
    "tpu.trace_stop"() : () -> ()
    %598 = vector.shape_cast %597 : vector<2x8x16xf32> to vector<16x16xf32>
    %599 = vector.extract_strided_slice %20 {offsets = [16, 0], sizes = [16, 32], strides = [1, 1]} : vector<32x32xf32> to vector<16x32xf32>
    %cst_228 = arith.constant dense<0.000000e+00> : vector<16x32xf32>
    %600 = tpu.matmul %598, %599, %cst_228 {dimension_numbers = #tpu.dot_dimension_numbers<[1], [0], [0], [1], [0, 0, 1, 1], [], []>} : vector<16x16xf32>, vector<16x32xf32>, vector<16x32xf32> -> vector<16x32xf32>
    %601 = arith.addf %582, %600 : vector<16x32xf32>
    %602 = arith.addf %543, %601 : vector<16x32xf32>
    %603 = vector.broadcast %18 : vector<1x32xf32> to vector<16x32xf32>
    %604 = arith.addf %602, %603 : vector<16x32xf32>
    %cst_229 = arith.constant dense<0.000000e+00> : vector<16xf32>
    %605 = vector.multi_reduction <add>, %604, %cst_229 [1] : vector<16x32xf32> to vector<16xf32>
    %606 = vector.shape_cast %605 : vector<16xf32> to vector<16x1xf32>
    %cst_230 = arith.constant 3.200000e+01 : f32
    %607 = vector.broadcast %cst_230 : f32 to vector<16x1xf32>
    %608 = arith.divf %606, %607 : vector<16x1xf32>
    %609 = vector.broadcast %608 : vector<16x1xf32> to vector<16x32xf32>
    %610 = arith.subf %604, %609 : vector<16x32xf32>
    %611 = arith.mulf %610, %610 : vector<16x32xf32>
    %cst_231 = arith.constant dense<0.000000e+00> : vector<16xf32>
    %612 = vector.multi_reduction <add>, %611, %cst_231 [1] : vector<16x32xf32> to vector<16xf32>
    %613 = vector.shape_cast %612 : vector<16xf32> to vector<16x1xf32>
    %cst_232 = arith.constant 3.200000e+01 : f32
    %614 = vector.broadcast %cst_232 : f32 to vector<16x1xf32>
    %615 = arith.divf %613, %614 : vector<16x1xf32>
    %616 = vector.broadcast %608 : vector<16x1xf32> to vector<16x32xf32>
    %617 = arith.subf %604, %616 : vector<16x32xf32>
    %cst_233 = arith.constant 9.99999974E-6 : f32
    %618 = vector.broadcast %cst_233 : f32 to vector<16x1xf32>
    %619 = arith.addf %615, %618 : vector<16x1xf32>
    %620 = math.rsqrt %619 : vector<16x1xf32>
    %621 = vector.broadcast %620 : vector<16x1xf32> to vector<16x32xf32>
    %622 = arith.mulf %617, %621 : vector<16x32xf32>
    %623 = vector.broadcast %13 : vector<1x32xf32> to vector<16x32xf32>
    %624 = arith.mulf %622, %623 : vector<16x32xf32>
    %625 = vector.broadcast %12 : vector<1x32xf32> to vector<16x32xf32>
    %626 = arith.addf %624, %625 : vector<16x32xf32>
    %cst_234 = arith.constant dense<0.000000e+00> : vector<16x32xf32>
    %627 = tpu.matmul %626, %7, %cst_234 {dimension_numbers = #tpu.dot_dimension_numbers<[1], [0], [0], [1], [0, 0, 1, 1], [], []>} : vector<16x32xf32>, vector<32x32xf32>, vector<16x32xf32> -> vector<16x32xf32>
    %628 = vector.broadcast %4 : vector<1x32xf32> to vector<16x32xf32>
    %629 = arith.addf %627, %628 : vector<16x32xf32>
    %630 = vector.shape_cast %629 : vector<16x32xf32> to vector<2x8x32xf32>
    %cst_235 = arith.constant 0.000000e+00 : f32
    %631 = vector.broadcast %cst_235 : f32 to vector<2x8x32xf32>
    %632 = arith.cmpf ogt, %630, %631 : vector<2x8x32xf32>
    %cst_236 = arith.constant 1.000000e+00 : f32
    %633 = vector.broadcast %cst_236 : f32 to vector<2x8x32xf32>
    %634 = arith.addf %630, %633 : vector<2x8x32xf32>
    %635 = math.exp %630 : vector<2x8x32xf32>
    %636 = arith.select %632, %634, %635 : vector<2x8x32xi1>, vector<2x8x32xf32>
    %637 = vector.extract_strided_slice %636 {offsets = [0, 0, 0], sizes = [2, 8, 16], strides = [1, 1, 1]} : vector<2x8x32xf32> to vector<2x8x16xf32>
    %638 = vector.extract_strided_slice %324 {offsets = [0, 0, 0], sizes = [2, 8, 16], strides = [1, 1, 1]} : vector<2x8x32xf32> to vector<2x8x16xf32>
    "tpu.trace_start"() <{level = 10 : i32, message = "bld,bsd->bls"}> : () -> ()
    %cst_237 = arith.constant dense<0.000000e+00> : vector<2x8x8xf32>
    %639 = tpu.matmul %637, %638, %cst_237 {dimension_numbers = #tpu.dot_dimension_numbers<[2], [2], [1], [1], [0, 0, 0, 1, 1, 1], [0], [0]>} : vector<2x8x16xf32>, vector<2x8x16xf32>, vector<2x8x8xf32> -> vector<2x8x8xf32>
    "tpu.trace_stop"() : () -> ()
    %cst_238 = arith.constant dense<0.000000e+00> : vector<2x8xf32>
    %640 = vector.multi_reduction <add>, %639, %cst_238 [2] : vector<2x8x8xf32> to vector<2x8xf32>
    %641 = vector.shape_cast %640 : vector<2x8xf32> to vector<2x8x1xf32>
    %cst_239 = arith.constant 9.99999997E-7 : f32
    %642 = vector.broadcast %cst_239 : f32 to vector<2x8x1xf32>
    %643 = arith.addf %641, %642 : vector<2x8x1xf32>
    %644 = tpu.reciprocal %643 {approx = true} : vector<2x8x1xf32> -> vector<2x8x1xf32>
    %645 = vector.broadcast %644 : vector<2x8x1xf32> to vector<2x8x8xf32>
    %646 = arith.mulf %639, %645 : vector<2x8x8xf32>
    %647 = vector.extract_strided_slice %326 {offsets = [0, 0, 0], sizes = [2, 8, 16], strides = [1, 1, 1]} : vector<2x8x32xf32> to vector<2x8x16xf32>
    "tpu.trace_start"() <{level = 10 : i32, message = "bls,bsm->blm"}> : () -> ()
    %cst_240 = arith.constant dense<0.000000e+00> : vector<2x8x16xf32>
    %648 = tpu.matmul %646, %647, %cst_240 {dimension_numbers = #tpu.dot_dimension_numbers<[2], [1], [1], [2], [0, 0, 0, 1, 1, 2], [0], [0]>} : vector<2x8x8xf32>, vector<2x8x16xf32>, vector<2x8x16xf32> -> vector<2x8x16xf32>
    "tpu.trace_stop"() : () -> ()
    %649 = vector.shape_cast %648 : vector<2x8x16xf32> to vector<16x16xf32>
    %650 = vector.extract_strided_slice %6 {offsets = [0, 0], sizes = [16, 32], strides = [1, 1]} : vector<32x32xf32> to vector<16x32xf32>
    %cst_241 = arith.constant dense<0.000000e+00> : vector<16x32xf32>
    %651 = tpu.matmul %649, %650, %cst_241 {dimension_numbers = #tpu.dot_dimension_numbers<[1], [0], [0], [1], [0, 0, 1, 1], [], []>} : vector<16x16xf32>, vector<16x32xf32>, vector<16x32xf32> -> vector<16x32xf32>
    %652 = vector.extract_strided_slice %636 {offsets = [0, 0, 16], sizes = [2, 8, 16], strides = [1, 1, 1]} : vector<2x8x32xf32> to vector<2x8x16xf32>
    %653 = vector.extract_strided_slice %324 {offsets = [0, 0, 16], sizes = [2, 8, 16], strides = [1, 1, 1]} : vector<2x8x32xf32> to vector<2x8x16xf32>
    "tpu.trace_start"() <{level = 10 : i32, message = "bld,bsd->bls"}> : () -> ()
    %cst_242 = arith.constant dense<0.000000e+00> : vector<2x8x8xf32>
    %654 = tpu.matmul %652, %653, %cst_242 {dimension_numbers = #tpu.dot_dimension_numbers<[2], [2], [1], [1], [0, 0, 0, 1, 1, 1], [0], [0]>} : vector<2x8x16xf32>, vector<2x8x16xf32>, vector<2x8x8xf32> -> vector<2x8x8xf32>
    "tpu.trace_stop"() : () -> ()
    %cst_243 = arith.constant dense<0.000000e+00> : vector<2x8xf32>
    %655 = vector.multi_reduction <add>, %654, %cst_243 [2] : vector<2x8x8xf32> to vector<2x8xf32>
    %656 = vector.shape_cast %655 : vector<2x8xf32> to vector<2x8x1xf32>
    %cst_244 = arith.constant 9.99999997E-7 : f32
    %657 = vector.broadcast %cst_244 : f32 to vector<2x8x1xf32>
    %658 = arith.addf %656, %657 : vector<2x8x1xf32>
    %659 = tpu.reciprocal %658 {approx = true} : vector<2x8x1xf32> -> vector<2x8x1xf32>
    %660 = vector.broadcast %659 : vector<2x8x1xf32> to vector<2x8x8xf32>
    %661 = arith.mulf %654, %660 : vector<2x8x8xf32>
    %662 = vector.extract_strided_slice %326 {offsets = [0, 0, 16], sizes = [2, 8, 16], strides = [1, 1, 1]} : vector<2x8x32xf32> to vector<2x8x16xf32>
    "tpu.trace_start"() <{level = 10 : i32, message = "bls,bsm->blm"}> : () -> ()
    %cst_245 = arith.constant dense<0.000000e+00> : vector<2x8x16xf32>
    %663 = tpu.matmul %661, %662, %cst_245 {dimension_numbers = #tpu.dot_dimension_numbers<[2], [1], [1], [2], [0, 0, 0, 1, 1, 2], [0], [0]>} : vector<2x8x8xf32>, vector<2x8x16xf32>, vector<2x8x16xf32> -> vector<2x8x16xf32>
    "tpu.trace_stop"() : () -> ()
    %664 = vector.shape_cast %663 : vector<2x8x16xf32> to vector<16x16xf32>
    %665 = vector.extract_strided_slice %6 {offsets = [16, 0], sizes = [16, 32], strides = [1, 1]} : vector<32x32xf32> to vector<16x32xf32>
    %cst_246 = arith.constant dense<0.000000e+00> : vector<16x32xf32>
    %666 = tpu.matmul %664, %665, %cst_246 {dimension_numbers = #tpu.dot_dimension_numbers<[1], [0], [0], [1], [0, 0, 1, 1], [], []>} : vector<16x16xf32>, vector<16x32xf32>, vector<16x32xf32> -> vector<16x32xf32>
    %667 = arith.addf %651, %666 : vector<16x32xf32>
    %668 = arith.addf %626, %667 : vector<16x32xf32>
    %669 = vector.broadcast %3 : vector<1x32xf32> to vector<16x32xf32>
    %670 = arith.addf %668, %669 : vector<16x32xf32>
    %cst_247 = arith.constant dense<0.000000e+00> : vector<16xf32>
    %671 = vector.multi_reduction <add>, %670, %cst_247 [1] : vector<16x32xf32> to vector<16xf32>
    %672 = vector.shape_cast %671 : vector<16xf32> to vector<16x1xf32>
    %cst_248 = arith.constant 3.200000e+01 : f32
    %673 = vector.broadcast %cst_248 : f32 to vector<16x1xf32>
    %674 = arith.divf %672, %673 : vector<16x1xf32>
    %675 = vector.broadcast %674 : vector<16x1xf32> to vector<16x32xf32>
    %676 = arith.subf %670, %675 : vector<16x32xf32>
    %677 = arith.mulf %676, %676 : vector<16x32xf32>
    %cst_249 = arith.constant dense<0.000000e+00> : vector<16xf32>
    %678 = vector.multi_reduction <add>, %677, %cst_249 [1] : vector<16x32xf32> to vector<16xf32>
    %679 = vector.shape_cast %678 : vector<16xf32> to vector<16x1xf32>
    %cst_250 = arith.constant 3.200000e+01 : f32
    %680 = vector.broadcast %cst_250 : f32 to vector<16x1xf32>
    %681 = arith.divf %679, %680 : vector<16x1xf32>
    %682 = vector.broadcast %674 : vector<16x1xf32> to vector<16x32xf32>
    %683 = arith.subf %670, %682 : vector<16x32xf32>
    %cst_251 = arith.constant 9.99999974E-6 : f32
    %684 = vector.broadcast %cst_251 : f32 to vector<16x1xf32>
    %685 = arith.addf %681, %684 : vector<16x1xf32>
    %686 = math.rsqrt %685 : vector<16x1xf32>
    %687 = vector.broadcast %686 : vector<16x1xf32> to vector<16x32xf32>
    %688 = arith.mulf %683, %687 : vector<16x32xf32>
    %689 = vector.broadcast %15 : vector<1x32xf32> to vector<16x32xf32>
    %690 = arith.mulf %688, %689 : vector<16x32xf32>
    %691 = vector.broadcast %14 : vector<1x32xf32> to vector<16x32xf32>
    %692 = arith.addf %690, %691 : vector<16x32xf32>
    %cst_252 = arith.constant dense<0.000000e+00> : vector<16x32xf32>
    %693 = tpu.matmul %692, %9, %cst_252 {dimension_numbers = #tpu.dot_dimension_numbers<[1], [0], [0], [1], [0, 0, 1, 1], [], []>} : vector<16x32xf32>, vector<32x32xf32>, vector<16x32xf32> -> vector<16x32xf32>
    %694 = vector.broadcast %8 : vector<1x32xf32> to vector<16x32xf32>
    %695 = arith.addf %693, %694 : vector<16x32xf32>
    %cst_253 = arith.constant 0.000000e+00 : f32
    %696 = vector.broadcast %cst_253 : f32 to vector<16x32xf32>
    %697 = arith.maximumf %695, %696 : vector<16x32xf32>
    %cst_254 = arith.constant dense<0.000000e+00> : vector<16x32xf32>
    %698 = tpu.matmul %697, %11, %cst_254 {dimension_numbers = #tpu.dot_dimension_numbers<[1], [0], [0], [1], [0, 0, 1, 1], [], []>} : vector<16x32xf32>, vector<32x32xf32>, vector<16x32xf32> -> vector<16x32xf32>
    %699 = vector.broadcast %10 : vector<1x32xf32> to vector<16x32xf32>
    %700 = arith.addf %698, %699 : vector<16x32xf32>
    %701 = arith.addf %692, %700 : vector<16x32xf32>
    %cst_255 = arith.constant dense<0.000000e+00> : vector<16xf32>
    %702 = vector.multi_reduction <add>, %701, %cst_255 [1] : vector<16x32xf32> to vector<16xf32>
    %703 = vector.shape_cast %702 : vector<16xf32> to vector<16x1xf32>
    %cst_256 = arith.constant 3.200000e+01 : f32
    %704 = vector.broadcast %cst_256 : f32 to vector<16x1xf32>
    %705 = arith.divf %703, %704 : vector<16x1xf32>
    %706 = vector.broadcast %705 : vector<16x1xf32> to vector<16x32xf32>
    %707 = arith.subf %701, %706 : vector<16x32xf32>
    %708 = arith.mulf %707, %707 : vector<16x32xf32>
    %cst_257 = arith.constant dense<0.000000e+00> : vector<16xf32>
    %709 = vector.multi_reduction <add>, %708, %cst_257 [1] : vector<16x32xf32> to vector<16xf32>
    %710 = vector.shape_cast %709 : vector<16xf32> to vector<16x1xf32>
    %cst_258 = arith.constant 3.200000e+01 : f32
    %711 = vector.broadcast %cst_258 : f32 to vector<16x1xf32>
    %712 = arith.divf %710, %711 : vector<16x1xf32>
    %713 = vector.broadcast %705 : vector<16x1xf32> to vector<16x32xf32>
    %714 = arith.subf %701, %713 : vector<16x32xf32>
    %cst_259 = arith.constant 9.99999974E-6 : f32
    %715 = vector.broadcast %cst_259 : f32 to vector<16x1xf32>
    %716 = arith.addf %712, %715 : vector<16x1xf32>
    %717 = math.rsqrt %716 : vector<16x1xf32>
    %718 = vector.broadcast %717 : vector<16x1xf32> to vector<16x32xf32>
    %719 = arith.mulf %714, %718 : vector<16x32xf32>
    %720 = vector.broadcast %17 : vector<1x32xf32> to vector<16x32xf32>
    %721 = arith.mulf %719, %720 : vector<16x32xf32>
    %722 = vector.broadcast %16 : vector<1x32xf32> to vector<16x32xf32>
    %723 = arith.addf %721, %722 : vector<16x32xf32>
    %cst_260 = arith.constant dense<0.000000e+00> : vector<16xf32>
    %724 = vector.multi_reduction <add>, %723, %cst_260 [1] : vector<16x32xf32> to vector<16xf32>
    %725 = vector.shape_cast %724 : vector<16xf32> to vector<16x1xf32>
    %cst_261 = arith.constant 3.200000e+01 : f32
    %726 = vector.broadcast %cst_261 : f32 to vector<16x1xf32>
    %727 = arith.divf %725, %726 : vector<16x1xf32>
    %728 = vector.broadcast %727 : vector<16x1xf32> to vector<16x32xf32>
    %729 = arith.subf %723, %728 : vector<16x32xf32>
    %730 = arith.mulf %729, %729 : vector<16x32xf32>
    %cst_262 = arith.constant dense<0.000000e+00> : vector<16xf32>
    %731 = vector.multi_reduction <add>, %730, %cst_262 [1] : vector<16x32xf32> to vector<16xf32>
    %732 = vector.shape_cast %731 : vector<16xf32> to vector<16x1xf32>
    %cst_263 = arith.constant 3.200000e+01 : f32
    %733 = vector.broadcast %cst_263 : f32 to vector<16x1xf32>
    %734 = arith.divf %732, %733 : vector<16x1xf32>
    %735 = vector.broadcast %727 : vector<16x1xf32> to vector<16x32xf32>
    %736 = arith.subf %723, %735 : vector<16x32xf32>
    %cst_264 = arith.constant 9.99999974E-6 : f32
    %737 = vector.broadcast %cst_264 : f32 to vector<16x1xf32>
    %738 = arith.addf %734, %737 : vector<16x1xf32>
    %739 = math.rsqrt %738 : vector<16x1xf32>
    %740 = vector.broadcast %739 : vector<16x1xf32> to vector<16x32xf32>
    %741 = arith.mulf %736, %740 : vector<16x32xf32>
    %742 = vector.broadcast %1 : vector<1x32xf32> to vector<16x32xf32>
    %743 = arith.mulf %741, %742 : vector<16x32xf32>
    %744 = vector.broadcast %0 : vector<1x32xf32> to vector<16x32xf32>
    %745 = arith.addf %743, %744 : vector<16x32xf32>
    %cst_265 = arith.constant dense<0.000000e+00> : vector<16x8xf32>
    %746 = tpu.matmul %745, %37, %cst_265 {dimension_numbers = #tpu.dot_dimension_numbers<[1], [0], [0], [1], [0, 0, 1, 1], [], []>} : vector<16x32xf32>, vector<32x8xf32>, vector<16x8xf32> -> vector<16x8xf32>
    %747 = vector.broadcast %36 : vector<1x8xf32> to vector<16x8xf32>
    %748 = arith.addf %746, %747 : vector<16x8xf32>
    %749 = vector.shape_cast %748 : vector<16x8xf32> to vector<2x8x8xf32>
    %c0_266 = arith.constant 0 : index
    %c0_267 = arith.constant 0 : index
    %c0_268 = arith.constant 0 : index
    %750 = vector.load %arg46[%c0_266, %c0_267, %c0_268] : memref<2x8x8xf32, #tpu.memory_space<vmem>>, vector<2x8x8xf32>
    tpu.vector_store %arg46[%c0_266, %c0_267, %c0_268], %749 {strides = array<i32>} : memref<2x8x8xf32, #tpu.memory_space<vmem>>, vector<2x8x8xf32>,
    return
  }
}

</mosaic_0001>

<llo_original>
// kernel: _lambda_.1
$region0: #{_lambda_.1}
  #allocation0 [shape = 'u32[]', space=smem, size = 0x4, offset = 0x4, fixed_abs, tag = 'smem constant byte address 0x4 - core index']
  #allocation1 [shape = 'u32[72,128]{1,0:T(1,128)}', space=vmem, size = 0x9000, scoped, tag = 'internal scratch']
  %s0 = inlined_call_operand.smem [shape: u32[47], index: -1, kind: input, shape index: {}]
  %s1 = sld [smem:[%s0]]
  %s2 = scalar_lea.smem %s0, 1
  %s3 = sld [smem:[%s2]]
  %s4 = scalar_lea.smem %s0, 2
  %s5 = sld [smem:[%s4]]
  %s6 = scalar_lea.smem %s0, 3
  %s7 = sld [smem:[%s6]]
  %s8 = scalar_lea.smem %s0, 4
  %s9 = sld [smem:[%s8]]
  %s10 = scalar_lea.smem %s0, 5
  %s11 = sld [smem:[%s10]]
  %s12 = scalar_lea.smem %s0, 6
  %s13 = sld [smem:[%s12]]
  %s14 = scalar_lea.smem %s0, 7
  %s15 = sld [smem:[%s14]]
  %s16 = scalar_lea.smem %s0, 8
  %s17 = sld [smem:[%s16]]
  %s18 = scalar_lea.smem %s0, 9
  %s19 = sld [smem:[%s18]]
  %s20 = scalar_lea.smem %s0, 10
  %s21 = sld [smem:[%s20]]
  %s22 = scalar_lea.smem %s0, 11
  %s23 = sld [smem:[%s22]]
  %s24 = scalar_lea.smem %s0, 12
  %s25 = sld [smem:[%s24]]
  %s26 = scalar_lea.smem %s0, 13
  %s27 = sld [smem:[%s26]]
  %s28 = scalar_lea.smem %s0, 14
  %s29 = sld [smem:[%s28]]
  %s30 = scalar_lea.smem %s0, 15
  %s31 = sld [smem:[%s30]]
  %s32 = scalar_lea.smem %s0, 16
  %s33 = sld [smem:[%s32]]
  %s34 = scalar_lea.smem %s0, 17
  %s35 = sld [smem:[%s34]]
  %s36 = scalar_lea.smem %s0, 18
  %s37 = sld [smem:[%s36]]
  %s38 = scalar_lea.smem %s0, 19
  %s39 = sld [smem:[%s38]]
  %s40 = scalar_lea.smem %s0, 20
  %s41 = sld [smem:[%s40]]
  %s42 = scalar_lea.smem %s0, 21
  %s43 = sld [smem:[%s42]]
  %s44 = scalar_lea.smem %s0, 22
  %s45 = sld [smem:[%s44]]
  %s46 = scalar_lea.smem %s0, 23
  %s47 = sld [smem:[%s46]]
  %s48 = scalar_lea.smem %s0, 24
  %s49 = sld [smem:[%s48]]
  %s50 = scalar_lea.smem %s0, 25
  %s51 = sld [smem:[%s50]]
  %s52 = scalar_lea.smem %s0, 26
  %s53 = sld [smem:[%s52]]
  %s54 = scalar_lea.smem %s0, 27
  %s55 = sld [smem:[%s54]]
  %s56 = scalar_lea.smem %s0, 28
  %s57 = sld [smem:[%s56]]
  %s58 = scalar_lea.smem %s0, 29
  %s59 = sld [smem:[%s58]]
  %s60 = scalar_lea.smem %s0, 30
  %s61 = sld [smem:[%s60]]
  %s62 = scalar_lea.smem %s0, 31
  %s63 = sld [smem:[%s62]]
  %s64 = scalar_lea.smem %s0, 32
  %s65 = sld [smem:[%s64]]
  %s66 = scalar_lea.smem %s0, 33
  %s67 = sld [smem:[%s66]]
  %s68 = scalar_lea.smem %s0, 34
  %s69 = sld [smem:[%s68]]
  %s70 = scalar_lea.smem %s0, 35
  %s71 = sld [smem:[%s70]]
  %s72 = scalar_lea.smem %s0, 36
  %s73 = sld [smem:[%s72]]
  %s74 = scalar_lea.smem %s0, 37
  %s75 = sld [smem:[%s74]]
  %s76 = scalar_lea.smem %s0, 38
  %s77 = sld [smem:[%s76]]
  %s78 = scalar_lea.smem %s0, 39
  %s79 = sld [smem:[%s78]]
  %s80 = scalar_lea.smem %s0, 40
  %s81 = sld [smem:[%s80]]
  %s82 = scalar_lea.smem %s0, 41
  %s83 = sld [smem:[%s82]]
  %s84 = scalar_lea.smem %s0, 42
  %s85 = sld [smem:[%s84]]
  %s86 = scalar_lea.smem %s0, 43
  %s87 = sld [smem:[%s86]]
  %s88 = scalar_lea.smem %s0, 44
  %s89 = sld [smem:[%s88]]
  %s90 = scalar_lea.smem %s0, 45
  %s91 = sld [smem:[%s90]]
  %s92 = scalar_lea.smem %s0, 46
  %s93 = sld [smem:[%s92]]
  %s94 = sld [smem:[#allocation0]]
  $region350: #{_lambda_.1} parent=0
    _
  %s96 = ssub.s32 1, %s94
  %s97 = scalar_select 0, %s96, %s94
  $region1: #{_lambda_.1} parent=0
    #allocation2 [shape = 'u8[8192]{0}', space=vmem, size = 0x2000, scoped, tag = 'input window, operand 0, single buffered']
    #allocation3 [shape = 's32[1]{0}', space=sflag, size = 0x4, scoped, tag = 'scoped memory for _lambda_.1']
    #allocation4 [shape = 's32[1]{0}', space=sflag, size = 0x4, scoped, tag = 'scoped memory for _lambda_.1']
    #allocation5 [shape = 'u8[8192]{0}', space=vmem, size = 0x2000, scoped, tag = 'input window, operand 1, single buffered']
    #allocation6 [shape = 's32[1]{0}', space=sflag, size = 0x4, scoped, tag = 'scoped memory for _lambda_.1']
    #allocation7 [shape = 'u8[512]{0}', space=vmem, size = 0x400, scoped, tag = 'input window, operand 2, single buffered']
    #allocation8 [shape = 'u8[512]{0}', space=vmem, size = 0x400, scoped, tag = 'input window, operand 3, single buffered']
    #allocation9 [shape = 's32[1]{0}', space=sflag, size = 0x4, scoped, tag = 'scoped memory for _lambda_.1']
    #allocation10 [shape = 'u8[512]{0}', space=vmem, size = 0x400, scoped, tag = 'input window, operand 4, single buffered']
    #allocation11 [shape = 'u8[512]{0}', space=vmem, size = 0x400, scoped, tag = 'input window, operand 5, single buffered']
    #allocation12 [shape = 's32[1]{0}', space=sflag, size = 0x4, scoped, tag = 'scoped memory for _lambda_.1']
    #allocation13 [shape = 'u8[512]{0}', space=vmem, size = 0x400, scoped, tag = 'input window, operand 6, single buffered']
    #allocation14 [shape = 'u8[16384]{0}', space=vmem, size = 0x4000, scoped, tag = 'input window, operand 9, single buffered']
    #allocation15 [shape = 's32[1]{0}', space=sflag, size = 0x4, scoped, tag = 'scoped memory for _lambda_.1']
    #allocation16 [shape = 'u8[512]{0}', space=vmem, size = 0x400, scoped, tag = 'input window, operand 10, single buffered']
    #allocation17 [shape = 'u8[16384]{0}', space=vmem, size = 0x4000, scoped, tag = 'input window, operand 11, single buffered']
    #allocation18 [shape = 's32[1]{0}', space=sflag, size = 0x4, scoped, tag = 'scoped memory for _lambda_.1']
    #allocation19 [shape = 'u8[512]{0}', space=vmem, size = 0x400, scoped, tag = 'input window, operand 12, single buffered']
    #allocation20 [shape = 'u8[16384]{0}', space=vmem, size = 0x4000, scoped, tag = 'input window, operand 13, single buffered']
    #allocation21 [shape = 's32[1]{0}', space=sflag, size = 0x4, scoped, tag = 'scoped memory for _lambda_.1']
    #allocation22 [shape = 'u8[512]{0}', space=vmem, size = 0x400, scoped, tag = 'input window, operand 14, single buffered']
    #allocation23 [shape = 'u8[512]{0}', space=vmem, size = 0x400, scoped, tag = 'input window, operand 15, single buffered']
    #allocation24 [shape = 's32[1]{0}', space=sflag, size = 0x4, scoped, tag = 'scoped memory for _lambda_.1']
    #allocation25 [shape = 'u8[512]{0}', space=vmem, size = 0x400, scoped, tag = 'input window, operand 16, single buffered']
    #allocation26 [shape = 'u8[512]{0}', space=vmem, size = 0x400, scoped, tag = 'input window, operand 17, single buffered']
    #allocation27 [shape = 's32[1]{0}', space=sflag, size = 0x4, scoped, tag = 'scoped memory for _lambda_.1']
    #allocation28 [shape = 'u8[512]{0}', space=vmem, size = 0x400, scoped, tag = 'input window, operand 18, single buffered']
    #allocation29 [shape = 'u8[512]{0}', space=vmem, size = 0x400, scoped, tag = 'input window, operand 19, single buffered']
    #allocation30 [shape = 's32[1]{0}', space=sflag, size = 0x4, scoped, tag = 'scoped memory for _lambda_.1']
    #allocation31 [shape = 'u8[512]{0}', space=vmem, size = 0x400, scoped, tag = 'input window, operand 20, single buffered']
    #allocation32 [shape = 'u8[512]{0}', space=vmem, size = 0x400, scoped, tag = 'input window, operand 21, single buffered']
    #allocation33 [shape = 's32[1]{0}', space=sflag, size = 0x4, scoped, tag = 'scoped memory for _lambda_.1']
    #allocation34 [shape = 'u8[16384]{0}', space=vmem, size = 0x4000, scoped, tag = 'input window, operand 22, single buffered']
    #allocation35 [shape = 'u8[16384]{0}', space=vmem, size = 0x4000, scoped, tag = 'input window, operand 23, single buffered']
    #allocation36 [shape = 's32[1]{0}', space=sflag, size = 0x4, scoped, tag = 'scoped memory for _lambda_.1']
    #allocation37 [shape = 'u8[512]{0}', space=vmem, size = 0x400, scoped, tag = 'input window, operand 24, single buffered']
    #allocation38 [shape = 'u8[512]{0}', space=vmem, size = 0x400, scoped, tag = 'input window, operand 25, single buffered']
    #allocation39 [shape = 's32[1]{0}', space=sflag, size = 0x4, scoped, tag = 'scoped memory for _lambda_.1']
    #allocation40 [shape = 'u8[512]{0}', space=vmem, size = 0x400, scoped, tag = 'input window, operand 26, single buffered']
    #allocation41 [shape = 'u8[512]{0}', space=vmem, size = 0x400, scoped, tag = 'input window, operand 27, single buffered']
    #allocation42 [shape = 's32[1]{0}', space=sflag, size = 0x4, scoped, tag = 'scoped memory for _lambda_.1']
    #allocation43 [shape = 'u8[16384]{0}', space=vmem, size = 0x4000, scoped, tag = 'input window, operand 28, single buffered']
    #allocation44 [shape = 'u8[16384]{0}', space=vmem, size = 0x4000, scoped, tag = 'input window, operand 29, single buffered']
    #allocation45 [shape = 's32[1]{0}', space=sflag, size = 0x4, scoped, tag = 'scoped memory for _lambda_.1']
    #allocation46 [shape = 'u8[512]{0}', space=vmem, size = 0x400, scoped, tag = 'input window, operand 30, single buffered']
    #allocation47 [shape = 'u8[16384]{0}', space=vmem, size = 0x4000, scoped, tag = 'input window, operand 31, single buffered']
    #allocation48 [shape = 's32[1]{0}', space=sflag, size = 0x4, scoped, tag = 'scoped memory for _lambda_.1']
    #allocation49 [shape = 'u8[512]{0}', space=vmem, size = 0x400, scoped, tag = 'input window, operand 32, single buffered']
    #allocation50 [shape = 'u8[16384]{0}', space=vmem, size = 0x4000, scoped, tag = 'input window, operand 33, single buffered']
    #allocation51 [shape = 's32[1]{0}', space=sflag, size = 0x4, scoped, tag = 'scoped memory for _lambda_.1']
    #allocation52 [shape = 'u8[512]{0}', space=vmem, size = 0x400, scoped, tag = 'input window, operand 34, single buffered']
    #allocation53 [shape = 'u8[512]{0}', space=vmem, size = 0x400, scoped, tag = 'input window, operand 35, single buffered']
    #allocation54 [shape = 's32[1]{0}', space=sflag, size = 0x4, scoped, tag = 'scoped memory for _lambda_.1']
    #allocation55 [shape = 'u8[512]{0}', space=vmem, size = 0x400, scoped, tag = 'input window, operand 36, single buffered']
    #allocation56 [shape = 'u8[512]{0}', space=vmem, size = 0x400, scoped, tag = 'input window, operand 37, single buffered']
    #allocation57 [shape = 's32[1]{0}', space=sflag, size = 0x4, scoped, tag = 'scoped memory for _lambda_.1']
    #allocation58 [shape = 'u8[512]{0}', space=vmem, size = 0x400, scoped, tag = 'input window, operand 38, single buffered']
    #allocation59 [shape = 'u8[512]{0}', space=vmem, size = 0x400, scoped, tag = 'input window, operand 42, single buffered']
    #allocation60 [shape = 's32[1]{0}', space=sflag, size = 0x4, scoped, tag = 'scoped memory for _lambda_.1']
    #allocation61 [shape = 'u8[512]{0}', space=vmem, size = 0x400, scoped, tag = 'input window, operand 44, single buffered']
    #allocation62 [shape = 'u8[8192]{0}', space=vmem, size = 0x2000, scoped, tag = 'output window, operand 0, single buffered']
    %98 = vsyncpa [#allocation3], 0
    %99 = vsyncpa [#allocation6], 0
    %100 = vsyncpa [#allocation9], 0
    %101 = vsyncpa [#allocation12], 0
    %102 = vsyncpa [#allocation15], 0
    %103 = vsyncpa [#allocation18], 0
    %104 = vsyncpa [#allocation21], 0
    %105 = vsyncpa [#allocation24], 0
    %106 = vsyncpa [#allocation27], 0
    %107 = vsyncpa [#allocation30], 0
    %108 = vsyncpa [#allocation33], 0
    %109 = vsyncpa [#allocation36], 0
    %110 = vsyncpa [#allocation39], 0
    %111 = vsyncpa [#allocation42], 0
    %112 = vsyncpa [#allocation45], 0
    %113 = vsyncpa [#allocation48], 0
    %114 = vsyncpa [#allocation51], 0
    %115 = vsyncpa [#allocation54], 0
    %116 = vsyncpa [#allocation57], 0
    %117 = vsyncpa [#allocation60], 0
    %118 = vsyncpa [#allocation4], 0
    // Predicated region
    $region2: #{_lambda_.1} parent=1 // pred_check
      _
    $region3: #{_lambda_.1} parent=1 // pred_check_branch
      %120 = sbr.rel (0) target = $region5
    $region4: #{_lambda_.1} parent=1 // pred_region
      %122 = vsyncadd [#allocation3], 0
      %s123 = sshll.u32 %s1, 4
      %s124 = int_to_ptr.hbm [resolvable:$true] %s123
      %s125 = sshll.u32 [#allocation2], 4
      %s126 = int_to_ptr.vmem [resolvable:$true] %s125
      %131 = dma.hbm_to_vmem [thread:$0]  %s124, 256, %s126, [#allocation3], 128, 128, 8
    $region5: #{_lambda_.1} parent=1 // pred_fallthru
      _
    // Predicated region
    $region6: #{_lambda_.1} parent=1 // pred_check
      _
    $region7: #{_lambda_.1} parent=1 // pred_check_branch
      %133 = sbr.rel (0) target = $region9
    $region8: #{_lambda_.1} parent=1 // pred_region
      %135 = vsyncadd [#allocation6], 0
      %s136 = sshll.u32 %s3, 4
      %s137 = int_to_ptr.hbm [resolvable:$true] %s136
      %s138 = sshll.u32 [#allocation5], 4
      %s139 = int_to_ptr.vmem [resolvable:$true] %s138
      %144 = dma.hbm_to_vmem [thread:$0]  %s137, 256, %s139, [#allocation6], 128, 128, 8
    $region9: #{_lambda_.1} parent=1 // pred_fallthru
      _
    // Predicated region
    $region10: #{_lambda_.1} parent=1 // pred_check
      _
    $region11: #{_lambda_.1} parent=1 // pred_check_branch
      %146 = sbr.rel (0) target = $region13
    $region12: #{_lambda_.1} parent=1 // pred_region
      %148 = vsyncadd [#allocation6], 0
      %s150 = sshll.u32 %s5, 4
      %s151 = int_to_ptr.hbm [resolvable:$true] %s150
      %s152 = sshll.u32 [#allocation7], 4
      %s153 = int_to_ptr.vmem [resolvable:$true] %s152
      %155 = dma.hbm_to_vmem [thread:$0]  %s151, 16, %s153, [#allocation6]
    $region13: #{_lambda_.1} parent=1 // pred_fallthru
      _
    // Predicated region
    $region14: #{_lambda_.1} parent=1 // pred_check
      _
    $region15: #{_lambda_.1} parent=1 // pred_check_branch
      %157 = sbr.rel (0) target = $region17
    $region16: #{_lambda_.1} parent=1 // pred_region
      %159 = vsyncadd [#allocation9], 0
      %s161 = sshll.u32 %s7, 4
      %s162 = int_to_ptr.hbm [resolvable:$true] %s161
      %s163 = sshll.u32 [#allocation8], 4
      %s164 = int_to_ptr.vmem [resolvable:$true] %s163
      %166 = dma.hbm_to_vmem [thread:$0]  %s162, 16, %s164, [#allocation9]
    $region17: #{_lambda_.1} parent=1 // pred_fallthru
      _
    // Predicated region
    $region18: #{_lambda_.1} parent=1 // pred_check
      _
    $region19: #{_lambda_.1} parent=1 // pred_check_branch
      %168 = sbr.rel (0) target = $region21
    $region20: #{_lambda_.1} parent=1 // pred_region
      %170 = vsyncadd [#allocation9], 0
      %s172 = sshll.u32 %s9, 4
      %s173 = int_to_ptr.hbm [resolvable:$true] %s172
      %s174 = sshll.u32 [#allocation10], 4
      %s175 = int_to_ptr.vmem [resolvable:$true] %s174
      %177 = dma.hbm_to_vmem [thread:$0]  %s173, 16, %s175, [#allocation9]
    $region21: #{_lambda_.1} parent=1 // pred_fallthru
      _
    // Predicated region
    $region22: #{_lambda_.1} parent=1 // pred_check
      _
    $region23: #{_lambda_.1} parent=1 // pred_check_branch
      %179 = sbr.rel (0) target = $region25
    $region24: #{_lambda_.1} parent=1 // pred_region
      %181 = vsyncadd [#allocation12], 0
      %s183 = sshll.u32 %s11, 4
      %s184 = int_to_ptr.hbm [resolvable:$true] %s183
      %s185 = sshll.u32 [#allocation11], 4
      %s186 = int_to_ptr.vmem [resolvable:$true] %s185
      %188 = dma.hbm_to_vmem [thread:$0]  %s184, 16, %s186, [#allocation12]
    $region25: #{_lambda_.1} parent=1 // pred_fallthru
      _
    // Predicated region
    $region26: #{_lambda_.1} parent=1 // pred_check
      _
    $region27: #{_lambda_.1} parent=1 // pred_check_branch
      %190 = sbr.rel (0) target = $region29
    $region28: #{_lambda_.1} parent=1 // pred_region
      %192 = vsyncadd [#allocation12], 0
      %s194 = sshll.u32 %s13, 4
      %s195 = int_to_ptr.hbm [resolvable:$true] %s194
      %s196 = sshll.u32 [#allocation13], 4
      %s197 = int_to_ptr.vmem [resolvable:$true] %s196
      %199 = dma.hbm_to_vmem [thread:$0]  %s195, 16, %s197, [#allocation12]
    $region29: #{_lambda_.1} parent=1 // pred_fallthru
      _
    // Predicated region
    $region30: #{_lambda_.1} parent=1 // pred_check
      _
    $region31: #{_lambda_.1} parent=1 // pred_check_branch
      %201 = sbr.rel (0) target = $region33
    $region32: #{_lambda_.1} parent=1 // pred_region
      _
    $region33: #{_lambda_.1} parent=1 // pred_fallthru
      _
    // Predicated region
    $region34: #{_lambda_.1} parent=1 // pred_check
      _
    $region35: #{_lambda_.1} parent=1 // pred_check_branch
      %203 = sbr.rel (0) target = $region37
    $region36: #{_lambda_.1} parent=1 // pred_region
      _
    $region37: #{_lambda_.1} parent=1 // pred_fallthru
      _
    // Predicated region
    $region38: #{_lambda_.1} parent=1 // pred_check
      _
    $region39: #{_lambda_.1} parent=1 // pred_check_branch
      %205 = sbr.rel (0) target = $region41
    $region40: #{_lambda_.1} parent=1 // pred_region
      %207 = vsyncadd [#allocation15], 0
      %s208 = sshll.u32 %s19, 4
      %s209 = int_to_ptr.hbm [resolvable:$true] %s208
      %s210 = sshll.u32 [#allocation14], 4
      %s211 = int_to_ptr.vmem [resolvable:$true] %s210
      %216 = dma.hbm_to_vmem [thread:$0]  %s209, 512, %s211, [#allocation15], 128, 128, 8
    $region41: #{_lambda_.1} parent=1 // pred_fallthru
      _
    // Predicated region
    $region42: #{_lambda_.1} parent=1 // pred_check
      _
    $region43: #{_lambda_.1} parent=1 // pred_check_branch
      %218 = sbr.rel (0) target = $region45
    $region44: #{_lambda_.1} parent=1 // pred_region
      %220 = vsyncadd [#allocation15], 0
      %s222 = sshll.u32 %s21, 4
      %s223 = int_to_ptr.hbm [resolvable:$true] %s222
      %s224 = sshll.u32 [#allocation16], 4
      %s225 = int_to_ptr.vmem [resolvable:$true] %s224
      %227 = dma.hbm_to_vmem [thread:$0]  %s223, 16, %s225, [#allocation15]
    $region45: #{_lambda_.1} parent=1 // pred_fallthru
      _
    // Predicated region
    $region46: #{_lambda_.1} parent=1 // pred_check
      _
    $region47: #{_lambda_.1} parent=1 // pred_check_branch
      %229 = sbr.rel (0) target = $region49
    $region48: #{_lambda_.1} parent=1 // pred_region
      %231 = vsyncadd [#allocation18], 0
      %s232 = sshll.u32 %s23, 4
      %s233 = int_to_ptr.hbm [resolvable:$true] %s232
      %s234 = sshll.u32 [#allocation17], 4
      %s235 = int_to_ptr.vmem [resolvable:$true] %s234
      %240 = dma.hbm_to_vmem [thread:$0]  %s233, 512, %s235, [#allocation18], 128, 128, 8
    $region49: #{_lambda_.1} parent=1 // pred_fallthru
      _
    // Predicated region
    $region50: #{_lambda_.1} parent=1 // pred_check
      _
    $region51: #{_lambda_.1} parent=1 // pred_check_branch
      %242 = sbr.rel (0) target = $region53
    $region52: #{_lambda_.1} parent=1 // pred_region
      %244 = vsyncadd [#allocation18], 0
      %s246 = sshll.u32 %s25, 4
      %s247 = int_to_ptr.hbm [resolvable:$true] %s246
      %s248 = sshll.u32 [#allocation19], 4
      %s249 = int_to_ptr.vmem [resolvable:$true] %s248
      %251 = dma.hbm_to_vmem [thread:$0]  %s247, 16, %s249, [#allocation18]
    $region53: #{_lambda_.1} parent=1 // pred_fallthru
      _
    // Predicated region
    $region54: #{_lambda_.1} parent=1 // pred_check
      _
    $region55: #{_lambda_.1} parent=1 // pred_check_branch
      %253 = sbr.rel (0) target = $region57
    $region56: #{_lambda_.1} parent=1 // pred_region
      %255 = vsyncadd [#allocation21], 0
      %s256 = sshll.u32 %s27, 4
      %s257 = int_to_ptr.hbm [resolvable:$true] %s256
      %s258 = sshll.u32 [#allocation20], 4
      %s259 = int_to_ptr.vmem [resolvable:$true] %s258
      %264 = dma.hbm_to_vmem [thread:$0]  %s257, 512, %s259, [#allocation21], 128, 128, 8
    $region57: #{_lambda_.1} parent=1 // pred_fallthru
      _
    // Predicated region
    $region58: #{_lambda_.1} parent=1 // pred_check
      _
    $region59: #{_lambda_.1} parent=1 // pred_check_branch
      %266 = sbr.rel (0) target = $region61
    $region60: #{_lambda_.1} parent=1 // pred_region
      %268 = vsyncadd [#allocation21], 0
      %s270 = sshll.u32 %s29, 4
      %s271 = int_to_ptr.hbm [resolvable:$true] %s270
      %s272 = sshll.u32 [#allocation22], 4
      %s273 = int_to_ptr.vmem [resolvable:$true] %s272
      %275 = dma.hbm_to_vmem [thread:$0]  %s271, 16, %s273, [#allocation21]
    $region61: #{_lambda_.1} parent=1 // pred_fallthru
      _
    // Predicated region
    $region62: #{_lambda_.1} parent=1 // pred_check
      _
    $region63: #{_lambda_.1} parent=1 // pred_check_branch
      %277 = sbr.rel (0) target = $region65
    $region64: #{_lambda_.1} parent=1 // pred_region
      %279 = vsyncadd [#allocation24], 0
      %s281 = sshll.u32 %s31, 4
      %s282 = int_to_ptr.hbm [resolvable:$true] %s281
      %s283 = sshll.u32 [#allocation23], 4
      %s284 = int_to_ptr.vmem [resolvable:$true] %s283
      %286 = dma.hbm_to_vmem [thread:$0]  %s282, 16, %s284, [#allocation24]
    $region65: #{_lambda_.1} parent=1 // pred_fallthru
      _
    // Predicated region
    $region66: #{_lambda_.1} parent=1 // pred_check
      _
    $region67: #{_lambda_.1} parent=1 // pred_check_branch
      %288 = sbr.rel (0) target = $region69
    $region68: #{_lambda_.1} parent=1 // pred_region
      %290 = vsyncadd [#allocation24], 0
      %s292 = sshll.u32 %s33, 4
      %s293 = int_to_ptr.hbm [resolvable:$true] %s292
      %s294 = sshll.u32 [#allocation25], 4
      %s295 = int_to_ptr.vmem [resolvable:$true] %s294
      %297 = dma.hbm_to_vmem [thread:$0]  %s293, 16, %s295, [#allocation24]
    $region69: #{_lambda_.1} parent=1 // pred_fallthru
      _
    // Predicated region
    $region70: #{_lambda_.1} parent=1 // pred_check
      _
    $region71: #{_lambda_.1} parent=1 // pred_check_branch
      %299 = sbr.rel (0) target = $region73
    $region72: #{_lambda_.1} parent=1 // pred_region
      %301 = vsyncadd [#allocation27], 0
      %s303 = sshll.u32 %s35, 4
      %s304 = int_to_ptr.hbm [resolvable:$true] %s303
      %s305 = sshll.u32 [#allocation26], 4
      %s306 = int_to_ptr.vmem [resolvable:$true] %s305
      %308 = dma.hbm_to_vmem [thread:$0]  %s304, 16, %s306, [#allocation27]
    $region73: #{_lambda_.1} parent=1 // pred_fallthru
      _
    // Predicated region
    $region74: #{_lambda_.1} parent=1 // pred_check
      _
    $region75: #{_lambda_.1} parent=1 // pred_check_branch
      %310 = sbr.rel (0) target = $region77
    $region76: #{_lambda_.1} parent=1 // pred_region
      %312 = vsyncadd [#allocation27], 0
      %s314 = sshll.u32 %s37, 4
      %s315 = int_to_ptr.hbm [resolvable:$true] %s314
      %s316 = sshll.u32 [#allocation28], 4
      %s317 = int_to_ptr.vmem [resolvable:$true] %s316
      %319 = dma.hbm_to_vmem [thread:$0]  %s315, 16, %s317, [#allocation27]
    $region77: #{_lambda_.1} parent=1 // pred_fallthru
      _
    // Predicated region
    $region78: #{_lambda_.1} parent=1 // pred_check
      _
    $region79: #{_lambda_.1} parent=1 // pred_check_branch
      %321 = sbr.rel (0) target = $region81
    $region80: #{_lambda_.1} parent=1 // pred_region
      %323 = vsyncadd [#allocation30], 0
      %s325 = sshll.u32 %s39, 4
      %s326 = int_to_ptr.hbm [resolvable:$true] %s325
      %s327 = sshll.u32 [#allocation29], 4
      %s328 = int_to_ptr.vmem [resolvable:$true] %s327
      %330 = dma.hbm_to_vmem [thread:$0]  %s326, 16, %s328, [#allocation30]
    $region81: #{_lambda_.1} parent=1 // pred_fallthru
      _
    // Predicated region
    $region82: #{_lambda_.1} parent=1 // pred_check
      _
    $region83: #{_lambda_.1} parent=1 // pred_check_branch
      %332 = sbr.rel (0) target = $region85
    $region84: #{_lambda_.1} parent=1 // pred_region
      %334 = vsyncadd [#allocation30], 0
      %s336 = sshll.u32 %s41, 4
      %s337 = int_to_ptr.hbm [resolvable:$true] %s336
      %s338 = sshll.u32 [#allocation31], 4
      %s339 = int_to_ptr.vmem [resolvable:$true] %s338
      %341 = dma.hbm_to_vmem [thread:$0]  %s337, 16, %s339, [#allocation30]
    $region85: #{_lambda_.1} parent=1 // pred_fallthru
      _
    // Predicated region
    $region86: #{_lambda_.1} parent=1 // pred_check
      _
    $region87: #{_lambda_.1} parent=1 // pred_check_branch
      %343 = sbr.rel (0) target = $region89
    $region88: #{_lambda_.1} parent=1 // pred_region
      %345 = vsyncadd [#allocation33], 0
      %s347 = sshll.u32 %s43, 4
      %s348 = int_to_ptr.hbm [resolvable:$true] %s347
      %s349 = sshll.u32 [#allocation32], 4
      %s350 = int_to_ptr.vmem [resolvable:$true] %s349
      %352 = dma.hbm_to_vmem [thread:$0]  %s348, 16, %s350, [#allocation33]
    $region89: #{_lambda_.1} parent=1 // pred_fallthru
      _
    // Predicated region
    $region90: #{_lambda_.1} parent=1 // pred_check
      _
    $region91: #{_lambda_.1} parent=1 // pred_check_branch
      %354 = sbr.rel (0) target = $region93
    $region92: #{_lambda_.1} parent=1 // pred_region
      %356 = vsyncadd [#allocation33], 0
      %s357 = sshll.u32 %s45, 4
      %s358 = int_to_ptr.hbm [resolvable:$true] %s357
      %s359 = sshll.u32 [#allocation34], 4
      %s360 = int_to_ptr.vmem [resolvable:$true] %s359
      %365 = dma.hbm_to_vmem [thread:$0]  %s358, 512, %s360, [#allocation33], 128, 128, 8
    $region93: #{_lambda_.1} parent=1 // pred_fallthru
      _
    // Predicated region
    $region94: #{_lambda_.1} parent=1 // pred_check
      _
    $region95: #{_lambda_.1} parent=1 // pred_check_branch
      %367 = sbr.rel (0) target = $region97
    $region96: #{_lambda_.1} parent=1 // pred_region
      %369 = vsyncadd [#allocation36], 0
      %s370 = sshll.u32 %s47, 4
      %s371 = int_to_ptr.hbm [resolvable:$true] %s370
      %s372 = sshll.u32 [#allocation35], 4
      %s373 = int_to_ptr.vmem [resolvable:$true] %s372
      %378 = dma.hbm_to_vmem [thread:$0]  %s371, 512, %s373, [#allocation36], 128, 128, 8
    $region97: #{_lambda_.1} parent=1 // pred_fallthru
      _
    // Predicated region
    $region98: #{_lambda_.1} parent=1 // pred_check
      _
    $region99: #{_lambda_.1} parent=1 // pred_check_branch
      %380 = sbr.rel (0) target = $region101
    $region100: #{_lambda_.1} parent=1 // pred_region
      %382 = vsyncadd [#allocation36], 0
      %s384 = sshll.u32 %s49, 4
      %s385 = int_to_ptr.hbm [resolvable:$true] %s384
      %s386 = sshll.u32 [#allocation37], 4
      %s387 = int_to_ptr.vmem [resolvable:$true] %s386
      %389 = dma.hbm_to_vmem [thread:$0]  %s385, 16, %s387, [#allocation36]
    $region101: #{_lambda_.1} parent=1 // pred_fallthru
      _
    // Predicated region
    $region102: #{_lambda_.1} parent=1 // pred_check
      _
    $region103: #{_lambda_.1} parent=1 // pred_check_branch
      %391 = sbr.rel (0) target = $region105
    $region104: #{_lambda_.1} parent=1 // pred_region
      %393 = vsyncadd [#allocation39], 0
      %s395 = sshll.u32 %s51, 4
      %s396 = int_to_ptr.hbm [resolvable:$true] %s395
      %s397 = sshll.u32 [#allocation38], 4
      %s398 = int_to_ptr.vmem [resolvable:$true] %s397
      %400 = dma.hbm_to_vmem [thread:$0]  %s396, 16, %s398, [#allocation39]
    $region105: #{_lambda_.1} parent=1 // pred_fallthru
      _
    // Predicated region
    $region106: #{_lambda_.1} parent=1 // pred_check
      _
    $region107: #{_lambda_.1} parent=1 // pred_check_branch
      %402 = sbr.rel (0) target = $region109
    $region108: #{_lambda_.1} parent=1 // pred_region
      %404 = vsyncadd [#allocation39], 0
      %s406 = sshll.u32 %s53, 4
      %s407 = int_to_ptr.hbm [resolvable:$true] %s406
      %s408 = sshll.u32 [#allocation40], 4
      %s409 = int_to_ptr.vmem [resolvable:$true] %s408
      %411 = dma.hbm_to_vmem [thread:$0]  %s407, 16, %s409, [#allocation39]
    $region109: #{_lambda_.1} parent=1 // pred_fallthru
      _
    // Predicated region
    $region110: #{_lambda_.1} parent=1 // pred_check
      _
    $region111: #{_lambda_.1} parent=1 // pred_check_branch
      %413 = sbr.rel (0) target = $region113
    $region112: #{_lambda_.1} parent=1 // pred_region
      %415 = vsyncadd [#allocation42], 0
      %s417 = sshll.u32 %s55, 4
      %s418 = int_to_ptr.hbm [resolvable:$true] %s417
      %s419 = sshll.u32 [#allocation41], 4
      %s420 = int_to_ptr.vmem [resolvable:$true] %s419
      %422 = dma.hbm_to_vmem [thread:$0]  %s418, 16, %s420, [#allocation42]
    $region113: #{_lambda_.1} parent=1 // pred_fallthru
      _
    // Predicated region
    $region114: #{_lambda_.1} parent=1 // pred_check
      _
    $region115: #{_lambda_.1} parent=1 // pred_check_branch
      %424 = sbr.rel (0) target = $region117
    $region116: #{_lambda_.1} parent=1 // pred_region
      %426 = vsyncadd [#allocation42], 0
      %s427 = sshll.u32 %s57, 4
      %s428 = int_to_ptr.hbm [resolvable:$true] %s427
      %s429 = sshll.u32 [#allocation43], 4
      %s430 = int_to_ptr.vmem [resolvable:$true] %s429
      %435 = dma.hbm_to_vmem [thread:$0]  %s428, 512, %s430, [#allocation42], 128, 128, 8
    $region117: #{_lambda_.1} parent=1 // pred_fallthru
      _
    // Predicated region
    $region118: #{_lambda_.1} parent=1 // pred_check
      _
    $region119: #{_lambda_.1} parent=1 // pred_check_branch
      %437 = sbr.rel (0) target = $region121
    $region120: #{_lambda_.1} parent=1 // pred_region
      %439 = vsyncadd [#allocation45], 0
      %s440 = sshll.u32 %s59, 4
      %s441 = int_to_ptr.hbm [resolvable:$true] %s440
      %s442 = sshll.u32 [#allocation44], 4
      %s443 = int_to_ptr.vmem [resolvable:$true] %s442
      %448 = dma.hbm_to_vmem [thread:$0]  %s441, 512, %s443, [#allocation45], 128, 128, 8
    $region121: #{_lambda_.1} parent=1 // pred_fallthru
      _
    // Predicated region
    $region122: #{_lambda_.1} parent=1 // pred_check
      _
    $region123: #{_lambda_.1} parent=1 // pred_check_branch
      %450 = sbr.rel (0) target = $region125
    $region124: #{_lambda_.1} parent=1 // pred_region
      %452 = vsyncadd [#allocation45], 0
      %s454 = sshll.u32 %s61, 4
      %s455 = int_to_ptr.hbm [resolvable:$true] %s454
      %s456 = sshll.u32 [#allocation46], 4
      %s457 = int_to_ptr.vmem [resolvable:$true] %s456
      %459 = dma.hbm_to_vmem [thread:$0]  %s455, 16, %s457, [#allocation45]
    $region125: #{_lambda_.1} parent=1 // pred_fallthru
      _
    // Predicated region
    $region126: #{_lambda_.1} parent=1 // pred_check
      _
    $region127: #{_lambda_.1} parent=1 // pred_check_branch
      %461 = sbr.rel (0) target = $region129
    $region128: #{_lambda_.1} parent=1 // pred_region
      %463 = vsyncadd [#allocation48], 0
      %s464 = sshll.u32 %s63, 4
      %s465 = int_to_ptr.hbm [resolvable:$true] %s464
      %s466 = sshll.u32 [#allocation47], 4
      %s467 = int_to_ptr.vmem [resolvable:$true] %s466
      %472 = dma.hbm_to_vmem [thread:$0]  %s465, 512, %s467, [#allocation48], 128, 128, 8
    $region129: #{_lambda_.1} parent=1 // pred_fallthru
      _
    // Predicated region
    $region130: #{_lambda_.1} parent=1 // pred_check
      _
    $region131: #{_lambda_.1} parent=1 // pred_check_branch
      %474 = sbr.rel (0) target = $region133
    $region132: #{_lambda_.1} parent=1 // pred_region
      %476 = vsyncadd [#allocation48], 0
      %s478 = sshll.u32 %s65, 4
      %s479 = int_to_ptr.hbm [resolvable:$true] %s478
      %s480 = sshll.u32 [#allocation49], 4
      %s481 = int_to_ptr.vmem [resolvable:$true] %s480
      %483 = dma.hbm_to_vmem [thread:$0]  %s479, 16, %s481, [#allocation48]
    $region133: #{_lambda_.1} parent=1 // pred_fallthru
      _
    // Predicated region
    $region134: #{_lambda_.1} parent=1 // pred_check
      _
    $region135: #{_lambda_.1} parent=1 // pred_check_branch
      %485 = sbr.rel (0) target = $region137
    $region136: #{_lambda_.1} parent=1 // pred_region
      %487 = vsyncadd [#allocation51], 0
      %s488 = sshll.u32 %s67, 4
      %s489 = int_to_ptr.hbm [resolvable:$true] %s488
      %s490 = sshll.u32 [#allocation50], 4
      %s491 = int_to_ptr.vmem [resolvable:$true] %s490
      %496 = dma.hbm_to_vmem [thread:$0]  %s489, 512, %s491, [#allocation51], 128, 128, 8
    $region137: #{_lambda_.1} parent=1 // pred_fallthru
      _
    // Predicated region
    $region138: #{_lambda_.1} parent=1 // pred_check
      _
    $region139: #{_lambda_.1} parent=1 // pred_check_branch
      %498 = sbr.rel (0) target = $region141
    $region140: #{_lambda_.1} parent=1 // pred_region
      %500 = vsyncadd [#allocation51], 0
      %s502 = sshll.u32 %s69, 4
      %s503 = int_to_ptr.hbm [resolvable:$true] %s502
      %s504 = sshll.u32 [#allocation52], 4
      %s505 = int_to_ptr.vmem [resolvable:$true] %s504
      %507 = dma.hbm_to_vmem [thread:$0]  %s503, 16, %s505, [#allocation51]
    $region141: #{_lambda_.1} parent=1 // pred_fallthru
      _
    // Predicated region
    $region142: #{_lambda_.1} parent=1 // pred_check
      _
    $region143: #{_lambda_.1} parent=1 // pred_check_branch
      %509 = sbr.rel (0) target = $region145
    $region144: #{_lambda_.1} parent=1 // pred_region
      %511 = vsyncadd [#allocation54], 0
      %s513 = sshll.u32 %s71, 4
      %s514 = int_to_ptr.hbm [resolvable:$true] %s513
      %s515 = sshll.u32 [#allocation53], 4
      %s516 = int_to_ptr.vmem [resolvable:$true] %s515
      %518 = dma.hbm_to_vmem [thread:$0]  %s514, 16, %s516, [#allocation54]
    $region145: #{_lambda_.1} parent=1 // pred_fallthru
      _
    // Predicated region
    $region146: #{_lambda_.1} parent=1 // pred_check
      _
    $region147: #{_lambda_.1} parent=1 // pred_check_branch
      %520 = sbr.rel (0) target = $region149
    $region148: #{_lambda_.1} parent=1 // pred_region
      %522 = vsyncadd [#allocation54], 0
      %s524 = sshll.u32 %s73, 4
      %s525 = int_to_ptr.hbm [resolvable:$true] %s524
      %s526 = sshll.u32 [#allocation55], 4
      %s527 = int_to_ptr.vmem [resolvable:$true] %s526
      %529 = dma.hbm_to_vmem [thread:$0]  %s525, 16, %s527, [#allocation54]
    $region149: #{_lambda_.1} parent=1 // pred_fallthru
      _
    // Predicated region
    $region150: #{_lambda_.1} parent=1 // pred_check
      _
    $region151: #{_lambda_.1} parent=1 // pred_check_branch
      %531 = sbr.rel (0) target = $region153
    $region152: #{_lambda_.1} parent=1 // pred_region
      %533 = vsyncadd [#allocation57], 0
      %s535 = sshll.u32 %s75, 4
      %s536 = int_to_ptr.hbm [resolvable:$true] %s535
      %s537 = sshll.u32 [#allocation56], 4
      %s538 = int_to_ptr.vmem [resolvable:$true] %s537
      %540 = dma.hbm_to_vmem [thread:$0]  %s536, 16, %s538, [#allocation57]
    $region153: #{_lambda_.1} parent=1 // pred_fallthru
      _
    // Predicated region
    $region154: #{_lambda_.1} parent=1 // pred_check
      _
    $region155: #{_lambda_.1} parent=1 // pred_check_branch
      %542 = sbr.rel (0) target = $region157
    $region156: #{_lambda_.1} parent=1 // pred_region
      %544 = vsyncadd [#allocation57], 0
      %s546 = sshll.u32 %s77, 4
      %s547 = int_to_ptr.hbm [resolvable:$true] %s546
      %s548 = sshll.u32 [#allocation58], 4
      %s549 = int_to_ptr.vmem [resolvable:$true] %s548
      %551 = dma.hbm_to_vmem [thread:$0]  %s547, 16, %s549, [#allocation57]
    $region157: #{_lambda_.1} parent=1 // pred_fallthru
      _
    // Predicated region
    $region158: #{_lambda_.1} parent=1 // pred_check
      _
    $region159: #{_lambda_.1} parent=1 // pred_check_branch
      %553 = sbr.rel (0) target = $region161
    $region160: #{_lambda_.1} parent=1 // pred_region
      _
    $region161: #{_lambda_.1} parent=1 // pred_fallthru
      _
    // Predicated region
    $region162: #{_lambda_.1} parent=1 // pred_check
      _
    $region163: #{_lambda_.1} parent=1 // pred_check_branch
      %555 = sbr.rel (0) target = $region165
    $region164: #{_lambda_.1} parent=1 // pred_region
      _
    $region165: #{_lambda_.1} parent=1 // pred_fallthru
      _
    // Predicated region
    $region166: #{_lambda_.1} parent=1 // pred_check
      _
    $region167: #{_lambda_.1} parent=1 // pred_check_branch
      %557 = sbr.rel (0) target = $region169
    $region168: #{_lambda_.1} parent=1 // pred_region
      _
    $region169: #{_lambda_.1} parent=1 // pred_fallthru
      _
    // Predicated region
    $region170: #{_lambda_.1} parent=1 // pred_check
      _
    $region171: #{_lambda_.1} parent=1 // pred_check_branch
      %559 = sbr.rel (0) target = $region173
    $region172: #{_lambda_.1} parent=1 // pred_region
      %561 = vsyncadd [#allocation60], 0
      %s563 = sshll.u32 %s85, 4
      %s564 = int_to_ptr.hbm [resolvable:$true] %s563
      %s565 = sshll.u32 [#allocation59], 4
      %s566 = int_to_ptr.vmem [resolvable:$true] %s565
      %568 = dma.hbm_to_vmem [thread:$0]  %s564, 16, %s566, [#allocation60]
    $region173: #{_lambda_.1} parent=1 // pred_fallthru
      _
    // Predicated region
    $region174: #{_lambda_.1} parent=1 // pred_check
      _
    $region175: #{_lambda_.1} parent=1 // pred_check_branch
      %570 = sbr.rel (0) target = $region177
    $region176: #{_lambda_.1} parent=1 // pred_region
      _
    $region177: #{_lambda_.1} parent=1 // pred_fallthru
      _
    // Predicated region
    $region178: #{_lambda_.1} parent=1 // pred_check
      _
    $region179: #{_lambda_.1} parent=1 // pred_check_branch
      %572 = sbr.rel (0) target = $region181
    $region180: #{_lambda_.1} parent=1 // pred_region
      %574 = vsyncadd [#allocation60], 0
      %s576 = sshll.u32 %s89, 4
      %s577 = int_to_ptr.hbm [resolvable:$true] %s576
      %s578 = sshll.u32 [#allocation61], 4
      %s579 = int_to_ptr.vmem [resolvable:$true] %s578
      %581 = dma.hbm_to_vmem [thread:$0]  %s577, 16, %s579, [#allocation60]
    $region181: #{_lambda_.1} parent=1 // pred_fallthru
      _
    // Predicated region
    $region182: #{_lambda_.1} parent=1 // pred_check
      _
    $region183: #{_lambda_.1} parent=1 // pred_check_branch
      %583 = sbr.rel (0) target = $region185
    $region184: #{_lambda_.1} parent=1 // pred_region
      _
    $region185: #{_lambda_.1} parent=1 // pred_fallthru
      _
    // Predicated region
    $region186: #{_lambda_.1} parent=1 // pred_check
      _
    $region187: #{_lambda_.1} parent=1 // pred_check_branch
      %585 = sbr.rel (0) target = $region189
    $region188: #{_lambda_.1} parent=1 // pred_region
      %587 = dma.done [#allocation3], 256
    $region189: #{_lambda_.1} parent=1 // pred_fallthru
      _
    // Predicated region
    $region190: #{_lambda_.1} parent=1 // pred_check
      _
    $region191: #{_lambda_.1} parent=1 // pred_check_branch
      %589 = sbr.rel (0) target = $region193
    $region192: #{_lambda_.1} parent=1 // pred_region
      %591 = dma.done [#allocation6], 256
    $region193: #{_lambda_.1} parent=1 // pred_fallthru
      _
    // Predicated region
    $region194: #{_lambda_.1} parent=1 // pred_check
      _
    $region195: #{_lambda_.1} parent=1 // pred_check_branch
      %593 = sbr.rel (0) target = $region197
    $region196: #{_lambda_.1} parent=1 // pred_region
      %595 = dma.done [#allocation6], 16
    $region197: #{_lambda_.1} parent=1 // pred_fallthru
      _
    // Predicated region
    $region198: #{_lambda_.1} parent=1 // pred_check
      _
    $region199: #{_lambda_.1} parent=1 // pred_check_branch
      %597 = sbr.rel (0) target = $region201
    $region200: #{_lambda_.1} parent=1 // pred_region
      %599 = dma.done [#allocation9], 16
    $region201: #{_lambda_.1} parent=1 // pred_fallthru
      _
    // Predicated region
    $region202: #{_lambda_.1} parent=1 // pred_check
      _
    $region203: #{_lambda_.1} parent=1 // pred_check_branch
      %601 = sbr.rel (0) target = $region205
    $region204: #{_lambda_.1} parent=1 // pred_region
      %603 = dma.done [#allocation9], 16
    $region205: #{_lambda_.1} parent=1 // pred_fallthru
      _
    // Predicated region
    $region206: #{_lambda_.1} parent=1 // pred_check
      _
    $region207: #{_lambda_.1} parent=1 // pred_check_branch
      %605 = sbr.rel (0) target = $region209
    $region208: #{_lambda_.1} parent=1 // pred_region
      %607 = dma.done [#allocation12], 16
    $region209: #{_lambda_.1} parent=1 // pred_fallthru
      _
    // Predicated region
    $region210: #{_lambda_.1} parent=1 // pred_check
      _
    $region211: #{_lambda_.1} parent=1 // pred_check_branch
      %609 = sbr.rel (0) target = $region213
    $region212: #{_lambda_.1} parent=1 // pred_region
      %611 = dma.done [#allocation12], 16
    $region213: #{_lambda_.1} parent=1 // pred_fallthru
      _
    // Predicated region
    $region214: #{_lambda_.1} parent=1 // pred_check
      _
    $region215: #{_lambda_.1} parent=1 // pred_check_branch
      %613 = sbr.rel (0) target = $region217
    $region216: #{_lambda_.1} parent=1 // pred_region
      %615 = dma.done [#allocation15], 512
    $region217: #{_lambda_.1} parent=1 // pred_fallthru
      _
    // Predicated region
    $region218: #{_lambda_.1} parent=1 // pred_check
      _
    $region219: #{_lambda_.1} parent=1 // pred_check_branch
      %617 = sbr.rel (0) target = $region221
    $region220: #{_lambda_.1} parent=1 // pred_region
      %619 = dma.done [#allocation15], 16
    $region221: #{_lambda_.1} parent=1 // pred_fallthru
      _
    // Predicated region
    $region222: #{_lambda_.1} parent=1 // pred_check
      _
    $region223: #{_lambda_.1} parent=1 // pred_check_branch
      %621 = sbr.rel (0) target = $region225
    $region224: #{_lambda_.1} parent=1 // pred_region
      %623 = dma.done [#allocation18], 512
    $region225: #{_lambda_.1} parent=1 // pred_fallthru
      _
    // Predicated region
    $region226: #{_lambda_.1} parent=1 // pred_check
      _
    $region227: #{_lambda_.1} parent=1 // pred_check_branch
      %625 = sbr.rel (0) target = $region229
    $region228: #{_lambda_.1} parent=1 // pred_region
      %627 = dma.done [#allocation18], 16
    $region229: #{_lambda_.1} parent=1 // pred_fallthru
      _
    // Predicated region
    $region230: #{_lambda_.1} parent=1 // pred_check
      _
    $region231: #{_lambda_.1} parent=1 // pred_check_branch
      %629 = sbr.rel (0) target = $region233
    $region232: #{_lambda_.1} parent=1 // pred_region
      %631 = dma.done [#allocation21], 512
    $region233: #{_lambda_.1} parent=1 // pred_fallthru
      _
    // Predicated region
    $region234: #{_lambda_.1} parent=1 // pred_check
      _
    $region235: #{_lambda_.1} parent=1 // pred_check_branch
      %633 = sbr.rel (0) target = $region237
    $region236: #{_lambda_.1} parent=1 // pred_region
      %635 = dma.done [#allocation21], 16
    $region237: #{_lambda_.1} parent=1 // pred_fallthru
      _
    // Predicated region
    $region238: #{_lambda_.1} parent=1 // pred_check
      _
    $region239: #{_lambda_.1} parent=1 // pred_check_branch
      %637 = sbr.rel (0) target = $region241
    $region240: #{_lambda_.1} parent=1 // pred_region
      %639 = dma.done [#allocation24], 16
    $region241: #{_lambda_.1} parent=1 // pred_fallthru
      _
    // Predicated region
    $region242: #{_lambda_.1} parent=1 // pred_check
      _
    $region243: #{_lambda_.1} parent=1 // pred_check_branch
      %641 = sbr.rel (0) target = $region245
    $region244: #{_lambda_.1} parent=1 // pred_region
      %643 = dma.done [#allocation24], 16
    $region245: #{_lambda_.1} parent=1 // pred_fallthru
      _
    // Predicated region
    $region246: #{_lambda_.1} parent=1 // pred_check
      _
    $region247: #{_lambda_.1} parent=1 // pred_check_branch
      %645 = sbr.rel (0) target = $region249
    $region248: #{_lambda_.1} parent=1 // pred_region
      %647 = dma.done [#allocation27], 16
    $region249: #{_lambda_.1} parent=1 // pred_fallthru
      _
    // Predicated region
    $region250: #{_lambda_.1} parent=1 // pred_check
      _
    $region251: #{_lambda_.1} parent=1 // pred_check_branch
      %649 = sbr.rel (0) target = $region253
    $region252: #{_lambda_.1} parent=1 // pred_region
      %651 = dma.done [#allocation27], 16
    $region253: #{_lambda_.1} parent=1 // pred_fallthru
      _
    // Predicated region
    $region254: #{_lambda_.1} parent=1 // pred_check
      _
    $region255: #{_lambda_.1} parent=1 // pred_check_branch
      %653 = sbr.rel (0) target = $region257
    $region256: #{_lambda_.1} parent=1 // pred_region
      %655 = dma.done [#allocation30], 16
    $region257: #{_lambda_.1} parent=1 // pred_fallthru
      _
    // Predicated region
    $region258: #{_lambda_.1} parent=1 // pred_check
      _
    $region259: #{_lambda_.1} parent=1 // pred_check_branch
      %657 = sbr.rel (0) target = $region261
    $region260: #{_lambda_.1} parent=1 // pred_region
      %659 = dma.done [#allocation30], 16
    $region261: #{_lambda_.1} parent=1 // pred_fallthru
      _
    // Predicated region
    $region262: #{_lambda_.1} parent=1 // pred_check
      _
    $region263: #{_lambda_.1} parent=1 // pred_check_branch
      %661 = sbr.rel (0) target = $region265
    $region264: #{_lambda_.1} parent=1 // pred_region
      %663 = dma.done [#allocation33], 16
    $region265: #{_lambda_.1} parent=1 // pred_fallthru
      _
    // Predicated region
    $region266: #{_lambda_.1} parent=1 // pred_check
      _
    $region267: #{_lambda_.1} parent=1 // pred_check_branch
      %665 = sbr.rel (0) target = $region269
    $region268: #{_lambda_.1} parent=1 // pred_region
      %667 = dma.done [#allocation33], 512
    $region269: #{_lambda_.1} parent=1 // pred_fallthru
      _
    // Predicated region
    $region270: #{_lambda_.1} parent=1 // pred_check
      _
    $region271: #{_lambda_.1} parent=1 // pred_check_branch
      %669 = sbr.rel (0) target = $region273
    $region272: #{_lambda_.1} parent=1 // pred_region
      %671 = dma.done [#allocation36], 512
    $region273: #{_lambda_.1} parent=1 // pred_fallthru
      _
    // Predicated region
    $region274: #{_lambda_.1} parent=1 // pred_check
      _
    $region275: #{_lambda_.1} parent=1 // pred_check_branch
      %673 = sbr.rel (0) target = $region277
    $region276: #{_lambda_.1} parent=1 // pred_region
      %675 = dma.done [#allocation36], 16
    $region277: #{_lambda_.1} parent=1 // pred_fallthru
      _
    // Predicated region
    $region278: #{_lambda_.1} parent=1 // pred_check
      _
    $region279: #{_lambda_.1} parent=1 // pred_check_branch
      %677 = sbr.rel (0) target = $region281
    $region280: #{_lambda_.1} parent=1 // pred_region
      %679 = dma.done [#allocation39], 16
    $region281: #{_lambda_.1} parent=1 // pred_fallthru
      _
    // Predicated region
    $region282: #{_lambda_.1} parent=1 // pred_check
      _
    $region283: #{_lambda_.1} parent=1 // pred_check_branch
      %681 = sbr.rel (0) target = $region285
    $region284: #{_lambda_.1} parent=1 // pred_region
      %683 = dma.done [#allocation39], 16
    $region285: #{_lambda_.1} parent=1 // pred_fallthru
      _
    // Predicated region
    $region286: #{_lambda_.1} parent=1 // pred_check
      _
    $region287: #{_lambda_.1} parent=1 // pred_check_branch
      %685 = sbr.rel (0) target = $region289
    $region288: #{_lambda_.1} parent=1 // pred_region
      %687 = dma.done [#allocation42], 16
    $region289: #{_lambda_.1} parent=1 // pred_fallthru
      _
    // Predicated region
    $region290: #{_lambda_.1} parent=1 // pred_check
      _
    $region291: #{_lambda_.1} parent=1 // pred_check_branch
      %689 = sbr.rel (0) target = $region293
    $region292: #{_lambda_.1} parent=1 // pred_region
      %691 = dma.done [#allocation42], 512
    $region293: #{_lambda_.1} parent=1 // pred_fallthru
      _
    // Predicated region
    $region294: #{_lambda_.1} parent=1 // pred_check
      _
    $region295: #{_lambda_.1} parent=1 // pred_check_branch
      %693 = sbr.rel (0) target = $region297
    $region296: #{_lambda_.1} parent=1 // pred_region
      %695 = dma.done [#allocation45], 512
    $region297: #{_lambda_.1} parent=1 // pred_fallthru
      _
    // Predicated region
    $region298: #{_lambda_.1} parent=1 // pred_check
      _
    $region299: #{_lambda_.1} parent=1 // pred_check_branch
      %697 = sbr.rel (0) target = $region301
    $region300: #{_lambda_.1} parent=1 // pred_region
      %699 = dma.done [#allocation45], 16
    $region301: #{_lambda_.1} parent=1 // pred_fallthru
      _
    // Predicated region
    $region302: #{_lambda_.1} parent=1 // pred_check
      _
    $region303: #{_lambda_.1} parent=1 // pred_check_branch
      %701 = sbr.rel (0) target = $region305
    $region304: #{_lambda_.1} parent=1 // pred_region
      %703 = dma.done [#allocation48], 512
    $region305: #{_lambda_.1} parent=1 // pred_fallthru
      _
    // Predicated region
    $region306: #{_lambda_.1} parent=1 // pred_check
      _
    $region307: #{_lambda_.1} parent=1 // pred_check_branch
      %705 = sbr.rel (0) target = $region309
    $region308: #{_lambda_.1} parent=1 // pred_region
      %707 = dma.done [#allocation48], 16
    $region309: #{_lambda_.1} parent=1 // pred_fallthru
      _
    // Predicated region
    $region310: #{_lambda_.1} parent=1 // pred_check
      _
    $region311: #{_lambda_.1} parent=1 // pred_check_branch
      %709 = sbr.rel (0) target = $region313
    $region312: #{_lambda_.1} parent=1 // pred_region
      %711 = dma.done [#allocation51], 512
    $region313: #{_lambda_.1} parent=1 // pred_fallthru
      _
    // Predicated region
    $region314: #{_lambda_.1} parent=1 // pred_check
      _
    $region315: #{_lambda_.1} parent=1 // pred_check_branch
      %713 = sbr.rel (0) target = $region317
    $region316: #{_lambda_.1} parent=1 // pred_region
      %715 = dma.done [#allocation51], 16
    $region317: #{_lambda_.1} parent=1 // pred_fallthru
      _
    // Predicated region
    $region318: #{_lambda_.1} parent=1 // pred_check
      _
    $region319: #{_lambda_.1} parent=1 // pred_check_branch
      %717 = sbr.rel (0) target = $region321
    $region320: #{_lambda_.1} parent=1 // pred_region
      %719 = dma.done [#allocation54], 16
    $region321: #{_lambda_.1} parent=1 // pred_fallthru
      _
    // Predicated region
    $region322: #{_lambda_.1} parent=1 // pred_check
      _
    $region323: #{_lambda_.1} parent=1 // pred_check_branch
      %721 = sbr.rel (0) target = $region325
    $region324: #{_lambda_.1} parent=1 // pred_region
      %723 = dma.done [#allocation54], 16
    $region325: #{_lambda_.1} parent=1 // pred_fallthru
      _
    // Predicated region
    $region326: #{_lambda_.1} parent=1 // pred_check
      _
    $region327: #{_lambda_.1} parent=1 // pred_check_branch
      %725 = sbr.rel (0) target = $region329
    $region328: #{_lambda_.1} parent=1 // pred_region
      %727 = dma.done [#allocation57], 16
    $region329: #{_lambda_.1} parent=1 // pred_fallthru
      _
    // Predicated region
    $region330: #{_lambda_.1} parent=1 // pred_check
      _
    $region331: #{_lambda_.1} parent=1 // pred_check_branch
      %729 = sbr.rel (0) target = $region333
    $region332: #{_lambda_.1} parent=1 // pred_region
      %731 = dma.done [#allocation57], 16
    $region333: #{_lambda_.1} parent=1 // pred_fallthru
      _
    // Predicated region
    $region334: #{_lambda_.1} parent=1 // pred_check
      _
    $region335: #{_lambda_.1} parent=1 // pred_check_branch
      %733 = sbr.rel (0) target = $region337
    $region336: #{_lambda_.1} parent=1 // pred_region
      %735 = dma.done [#allocation60], 16
    $region337: #{_lambda_.1} parent=1 // pred_fallthru
      _
    // Predicated region
    $region338: #{_lambda_.1} parent=1 // pred_check
      _
    $region339: #{_lambda_.1} parent=1 // pred_check_branch
      %737 = sbr.rel (0) target = $region341
    $region340: #{_lambda_.1} parent=1 // pred_region
      %739 = dma.done [#allocation60], 16
    $region341: #{_lambda_.1} parent=1 // pred_fallthru
      _
    %v740 = vld [vmem:[#allocation7] sm:$0x1]
    %v741 = vld [vmem:[#allocation8] sm:$0x1]
    %v742 = vld [vmem:[#allocation10] sm:$0x1]
    %v743 = vld [vmem:[#allocation11] sm:$0x1]
    %v744 = vld [vmem:[#allocation13] sm:$0x1]
    %v745 = vld [vmem:[%s15] sm:$0xff]
    %v746 = vld [vmem:[%s15 + $0x8] sm:$0xff]
    %v747 = vld [vmem:[%s15 + $0x10] sm:$0xff]
    %v748 = vld [vmem:[%s15 + $0x18] sm:$0xff]
    %v749 = vld [vmem:[%s17] sm:$0xff]
    %v750 = vld [vmem:[%s17 + $0x8] sm:$0xff]
    %v751 = vld [vmem:[%s17 + $0x10] sm:$0xff]
    %v752 = vld [vmem:[%s17 + $0x18] sm:$0xff]
    %v753 = vld [vmem:[#allocation14] sm:$0xff]
    %v754 = vld [vmem:[#allocation14 + $0x8] sm:$0xff]
    %v755 = vld [vmem:[#allocation14 + $0x10] sm:$0xff]
    %v756 = vld [vmem:[#allocation14 + $0x18] sm:$0xff]
    %v757 = vld [vmem:[#allocation16] sm:$0x1]
    %v758 = vld [vmem:[#allocation17] sm:$0xff]
    %v759 = vld [vmem:[#allocation17 + $0x8] sm:$0xff]
    %v760 = vld [vmem:[#allocation17 + $0x10] sm:$0xff]
    %v761 = vld [vmem:[#allocation17 + $0x18] sm:$0xff]
    %v762 = vld [vmem:[#allocation19] sm:$0x1]
    %v763 = vld [vmem:[#allocation20] sm:$0xff]
    %v764 = vld [vmem:[#allocation20 + $0x8] sm:$0xff]
    %v765 = vld [vmem:[#allocation20 + $0x10] sm:$0xff]
    %v766 = vld [vmem:[#allocation20 + $0x18] sm:$0xff]
    %v767 = vld [vmem:[#allocation22] sm:$0x1]
    %v768 = vld [vmem:[#allocation23] sm:$0x1]
    %v769 = vld [vmem:[#allocation25] sm:$0x1]
    %v770 = vld [vmem:[#allocation26] sm:$0x1]
    %v771 = vld [vmem:[#allocation28] sm:$0x1]
    %v772 = vld [vmem:[#allocation29] sm:$0x1]
    %v773 = vld [vmem:[#allocation31] sm:$0x1]
    %v774 = vld [vmem:[#allocation32] sm:$0x1]
    %v775 = vld [vmem:[#allocation34] sm:$0xff]
    %v776 = vld [vmem:[#allocation34 + $0x8] sm:$0xff]
    %v777 = vld [vmem:[#allocation34 + $0x10] sm:$0xff]
    %v778 = vld [vmem:[#allocation34 + $0x18] sm:$0xff]
    %v779 = vld [vmem:[#allocation35] sm:$0xff]
    %v780 = vld [vmem:[#allocation35 + $0x8] sm:$0xff]
    %v781 = vld [vmem:[#allocation35 + $0x10] sm:$0xff]
    %v782 = vld [vmem:[#allocation35 + $0x18] sm:$0xff]
    %v783 = vld [vmem:[#allocation37] sm:$0x1]
    %v784 = vld [vmem:[#allocation38] sm:$0x1]
    %v785 = vld [vmem:[#allocation40] sm:$0x1]
    %v786 = vld [vmem:[#allocation41] sm:$0x1]
    %v787 = vld [vmem:[#allocation43] sm:$0xff]
    %v788 = vld [vmem:[#allocation43 + $0x8] sm:$0xff]
    %v789 = vld [vmem:[#allocation43 + $0x10] sm:$0xff]
    %v790 = vld [vmem:[#allocation43 + $0x18] sm:$0xff]
    %v791 = vld [vmem:[#allocation44] sm:$0xff]
    %v792 = vld [vmem:[#allocation44 + $0x8] sm:$0xff]
    %v793 = vld [vmem:[#allocation44 + $0x10] sm:$0xff]
    %v794 = vld [vmem:[#allocation44 + $0x18] sm:$0xff]
    %v795 = vld [vmem:[#allocation46] sm:$0x1]
    %v796 = vld [vmem:[#allocation47] sm:$0xff]
    %v797 = vld [vmem:[#allocation47 + $0x8] sm:$0xff]
    %v798 = vld [vmem:[#allocation47 + $0x10] sm:$0xff]
    %v799 = vld [vmem:[#allocation47 + $0x18] sm:$0xff]
    %v800 = vld [vmem:[#allocation49] sm:$0x1]
    %v801 = vld [vmem:[#allocation50] sm:$0xff]
    %v802 = vld [vmem:[#allocation50 + $0x8] sm:$0xff]
    %v803 = vld [vmem:[#allocation50 + $0x10] sm:$0xff]
    %v804 = vld [vmem:[#allocation50 + $0x18] sm:$0xff]
    %v805 = vld [vmem:[#allocation52] sm:$0x1]
    %v806 = vld [vmem:[#allocation53] sm:$0x1]
    %v807 = vld [vmem:[#allocation55] sm:$0x1]
    %v808 = vld [vmem:[#allocation56] sm:$0x1]
    %v809 = vld [vmem:[#allocation58] sm:$0x1]
    %v810 = vld [vmem:[%s79] sm:$0xff]
    %v811 = vld [vmem:[%s79 + $0x8] sm:$0xff]
    %v812 = vld [vmem:[%s79 + $0x10] sm:$0xff]
    %v813 = vld [vmem:[%s79 + $0x18] sm:$0xff]
    %v814 = vld [vmem:[%s81] sm:$0xff]
    %v815 = vld [vmem:[%s83] sm:$0xff]
    %v816 = vld [vmem:[#allocation59] sm:$0x1]
    %v817 = vld [vmem:[%s87] sm:$0xff]
    %v818 = vld [vmem:[#allocation61] sm:$0x1]
    %v819 = vld [vmem:[%s91] sm:$0xff]
    %v820 = vld [vmem:[#allocation2] sm:$0xff]
    %v821 = vld [vmem:[#allocation2 + $0x8] sm:$0xff]
    %v823 = vperm.slane %v816, 0
    %vm825 = vcmask 64512
    %v827 = vsel %vm825, %v820, 0
    %v830 = vsel %vm825, %v821, 0
    %832 = vmatpush.msra.mxu0 0.0
    %833 = vmatpush.msra.mxu0 0.0
    %834 = vmatpush.msra.mxu0 0.0
    %835 = vmatpush.msra.mxu0 0.0
    %836 = vmatpush.msra.mxu0 0.0
    %837 = vmatpush.msra.mxu0 0.0
    %838 = vmatpush.msra.mxu0 0.0
    %839 = vmatpush.msra.mxu0 0.0
    %840 = vmatpush.msra.mxu0 0.0
    %841 = vmatpush.msra.mxu0 0.0
    %842 = vmatpush.msra.mxu0 0.0
    %843 = vmatpush.msra.mxu0 0.0
    %844 = vmatpush.msra.mxu0 0.0
    %845 = vmatpush.msra.mxu0 0.0
    %846 = vmatpush.msra.mxu0 0.0
    %847 = vmatpush.msra.mxu0 %v817
    %848 = vmatmul.f32.gmra.mxu0 %v827
    %v849 = vpop.f32.mrf.mxu0
    %v850 = vadd.f32 %v823, %v849
    %851 = vmatmul.f32.gmra.mxu0 %v830
    %v852 = vpop.f32.mrf.mxu0
    %v853 = vadd.f32 %v823, %v852
    %854 = vdwg.mxu0
    %v855 = vadd.f32 %v850, %v814
    %v856 = vadd.f32 %v853, %v814
    %v858 = vperm.slane %v786, 0
    %vm860 = vcmask 261120
    %v862 = vsel %vm860, %v855, 0
    %v865 = vsel %vm860, %v856, 0
    %867 = vmatpush.msra.mxu0 0.0
    %868 = vmatpush.msra.mxu0 0.0
    %869 = vmatpush.msra.mxu0 0.0
    %870 = vmatpush.msra.mxu0 0.0
    %871 = vmatpush.msra.mxu0 0.0
    %872 = vmatpush.msra.mxu0 0.0
    %873 = vmatpush.msra.mxu0 0.0
    %874 = vmatpush.msra.mxu0 0.0
    %875 = vmatpush.msra.mxu0 0.0
    %876 = vmatpush.msra.mxu0 0.0
    %877 = vmatpush.msra.mxu0 0.0
    %878 = vmatpush.msra.mxu0 0.0
    %879 = vmatpush.msra.mxu0 %v794
    %880 = vmatpush.msra.mxu0 %v793
    %881 = vmatpush.msra.mxu0 %v792
    %882 = vmatpush.msra.mxu0 %v791
    %883 = vmatmul.f32.gmra.mxu0 %v862
    %v884 = vpop.f32.mrf.mxu0
    %v885 = vadd.f32 %v858, %v884
    %886 = vmatmul.f32.gmra.mxu0 %v865
    %v887 = vpop.f32.mrf.mxu0
    %v888 = vadd.f32 %v858, %v887
    %889 = vdwg.mxu0
    %vm890 = vcmp.gt.f32.partialorder %v885, 0.0
    %vm891 = vcmp.gt.f32.partialorder %v888, 0.0
    %v892 = vadd.f32 %v885, 1.0
    %v893 = vadd.f32 %v888, 1.0
    %v894 = vmul.f32 %v885, 1.442695
    %v895 = vpow.pop %v894
    %v896 = vmul.f32 %v888, 1.442695
    %v897 = vpow.pop %v896
    %v898 = vsel %vm890, %v892, %v895
    %v899 = vsel %vm891, %v893, %v897
    %901 = vrot.lane.b32.xlu0 %v898, 96
    %v902 = vpop.permute.xlu0 %901
    %vm903 = vcmask 130048
    %v904 = vsel %vm903, %v898, 0
    %v906 = vsel %vm903, %v902, 0
    %908 = vmatpush.xpose.msra.mxu0 0.0
    %909 = vmatpush.xpose.msra.mxu0 0.0
    %910 = vmatpush.xpose.msra.mxu0 0.0
    %911 = vmatpush.xpose.msra.mxu0 0.0
    %912 = vmatpush.xpose.msra.mxu0 0.0
    %913 = vmatpush.xpose.msra.mxu0 0.0
    %914 = vmatpush.xpose.msra.mxu0 0.0
    %915 = vmatpush.xpose.msra.mxu0 0.0
    %916 = vmatpush.xpose.msra.mxu0 0.0
    %917 = vmatpush.xpose.msra.mxu0 0.0
    %918 = vmatpush.xpose.msra.mxu0 0.0
    %919 = vmatpush.xpose.msra.mxu0 0.0
    %920 = vmatpush.xpose.msra.mxu0 0.0
    %921 = vmatpush.xpose.msra.mxu0 0.0
    %922 = vmatpush.xpose.msra.mxu0 0.0
    %923 = vmatpush.xpose.msra.mxu0 %v906
    %924 = vmatmul.f32.gmra.mxu0 %v904
    %v925 = vpop.f32.mrf.mxu0
    %v926 = vadd.f32 0.0, %v925
    %927 = vdwg.mxu0
    %929 = vrot.lane.b32.xlu0 %v899, 96
    %v930 = vpop.permute.xlu0 %929
    %v931 = vsel %vm903, %v899, 0
    %v933 = vsel %vm903, %v930, 0
    %935 = vmatpush.xpose.msra.mxu0 0.0
    %936 = vmatpush.xpose.msra.mxu0 0.0
    %937 = vmatpush.xpose.msra.mxu0 0.0
    %938 = vmatpush.xpose.msra.mxu0 0.0
    %939 = vmatpush.xpose.msra.mxu0 0.0
    %940 = vmatpush.xpose.msra.mxu0 0.0
    %941 = vmatpush.xpose.msra.mxu0 0.0
    %942 = vmatpush.xpose.msra.mxu0 0.0
    %943 = vmatpush.xpose.msra.mxu0 0.0
    %944 = vmatpush.xpose.msra.mxu0 0.0
    %945 = vmatpush.xpose.msra.mxu0 0.0
    %946 = vmatpush.xpose.msra.mxu0 0.0
    %947 = vmatpush.xpose.msra.mxu0 0.0
    %948 = vmatpush.xpose.msra.mxu0 0.0
    %949 = vmatpush.xpose.msra.mxu0 0.0
    %950 = vmatpush.xpose.msra.mxu0 %v933
    %951 = vmatmul.f32.gmra.mxu0 %v931
    %v952 = vpop.f32.mrf.mxu0
    %v953 = vadd.f32 0.0, %v952
    %954 = vdwg.mxu0
    %v955 = vsel %vm825, %v926, 0.0
    %956 = vadd.xlane.f32.xlu0 %v955
    %v957 = vpop.xlane.xlu0 %956
    %v958 = vsel %vm825, %v953, 0.0
    %959 = vadd.xlane.f32.xlu0 %v958
    %v960 = vpop.xlane.xlu0 %959
    %v961 = vadd.f32 %v957, 1e-06
    %v962 = vadd.f32 %v960, 1e-06
    %v963 = vrcp.pop %v961
    %v964 = vrcp.pop %v962
    %v965 = vmul.f32 %v926, %v963
    %v966 = vmul.f32 %v953, %v964
    %968 = vrot.lane.b32.xlu0 %v885, 64
    %v969 = vpop.permute.xlu0 %968
    %v972 = vsel %vm825, %v965, 0
    %974 = vmatpush.msra.mxu0 0.0
    %975 = vmatpush.msra.mxu0 0.0
    %976 = vmatpush.msra.mxu0 0.0
    %977 = vmatpush.msra.mxu0 0.0
    %978 = vmatpush.msra.mxu0 0.0
    %979 = vmatpush.msra.mxu0 0.0
    %980 = vmatpush.msra.mxu0 0.0
    %981 = vmatpush.msra.mxu0 0.0
    %982 = vmatpush.msra.mxu0 0.0
    %983 = vmatpush.msra.mxu0 0.0
    %984 = vmatpush.msra.mxu0 0.0
    %985 = vmatpush.msra.mxu0 0.0
    %986 = vmatpush.msra.mxu0 0.0
    %987 = vmatpush.msra.mxu0 0.0
    %988 = vmatpush.msra.mxu0 0.0
    %989 = vmatpush.msra.mxu0 %v969
    %990 = vmatmul.f32.gmra.mxu0 %v972
    %v991 = vpop.f32.mrf.mxu0
    %v992 = vadd.f32 0.0, %v991
    %993 = vdwg.mxu0
    %995 = vrot.lane.b32.xlu0 %v888, 64
    %v996 = vpop.permute.xlu0 %995
    %v999 = vsel %vm825, %v966, 0
    %1001 = vmatpush.msra.mxu0 0.0
    %1002 = vmatpush.msra.mxu0 0.0
    %1003 = vmatpush.msra.mxu0 0.0
    %1004 = vmatpush.msra.mxu0 0.0
    %1005 = vmatpush.msra.mxu0 0.0
    %1006 = vmatpush.msra.mxu0 0.0
    %1007 = vmatpush.msra.mxu0 0.0
    %1008 = vmatpush.msra.mxu0 0.0
    %1009 = vmatpush.msra.mxu0 0.0
    %1010 = vmatpush.msra.mxu0 0.0
    %1011 = vmatpush.msra.mxu0 0.0
    %1012 = vmatpush.msra.mxu0 0.0
    %1013 = vmatpush.msra.mxu0 0.0
    %1014 = vmatpush.msra.mxu0 0.0
    %1015 = vmatpush.msra.mxu0 0.0
    %1016 = vmatpush.msra.mxu0 %v996
    %1017 = vmatmul.f32.gmra.mxu0 %v999
    %v1018 = vpop.f32.mrf.mxu0
    %v1019 = vadd.f32 0.0, %v1018
    %1020 = vdwg.mxu0
    %1021 = vrot.lane.b32.xlu0 %v898, 112
    %v1022 = vpop.permute.xlu0 %1021
    %1023 = vrot.lane.b32.xlu0 %v898, 80
    %v1024 = vpop.permute.xlu0 %1023
    %v1025 = vsel %vm903, %v1022, 0
    %v1027 = vsel %vm903, %v1024, 0
    %1029 = vmatpush.xpose.msra.mxu0 0.0
    %1030 = vmatpush.xpose.msra.mxu0 0.0
    %1031 = vmatpush.xpose.msra.mxu0 0.0
    %1032 = vmatpush.xpose.msra.mxu0 0.0
    %1033 = vmatpush.xpose.msra.mxu0 0.0
    %1034 = vmatpush.xpose.msra.mxu0 0.0
    %1035 = vmatpush.xpose.msra.mxu0 0.0
    %1036 = vmatpush.xpose.msra.mxu0 0.0
    %1037 = vmatpush.xpose.msra.mxu0 0.0
    %1038 = vmatpush.xpose.msra.mxu0 0.0
    %1039 = vmatpush.xpose.msra.mxu0 0.0
    %1040 = vmatpush.xpose.msra.mxu0 0.0
    %1041 = vmatpush.xpose.msra.mxu0 0.0
    %1042 = vmatpush.xpose.msra.mxu0 0.0
    %1043 = vmatpush.xpose.msra.mxu0 0.0
    %1044 = vmatpush.xpose.msra.mxu0 %v1027
    %1045 = vmatmul.f32.gmra.mxu0 %v1025
    %v1046 = vpop.f32.mrf.mxu0
    %v1047 = vadd.f32 0.0, %v1046
    %1048 = vdwg.mxu0
    %1049 = vrot.lane.b32.xlu0 %v899, 112
    %v1050 = vpop.permute.xlu0 %1049
    %1051 = vrot.lane.b32.xlu0 %v899, 80
    %v1052 = vpop.permute.xlu0 %1051
    %v1053 = vsel %vm903, %v1050, 0
    %v1055 = vsel %vm903, %v1052, 0
    %1057 = vmatpush.xpose.msra.mxu0 0.0
    %1058 = vmatpush.xpose.msra.mxu0 0.0
    %1059 = vmatpush.xpose.msra.mxu0 0.0
    %1060 = vmatpush.xpose.msra.mxu0 0.0
    %1061 = vmatpush.xpose.msra.mxu0 0.0
    %1062 = vmatpush.xpose.msra.mxu0 0.0
    %1063 = vmatpush.xpose.msra.mxu0 0.0
    %1064 = vmatpush.xpose.msra.mxu0 0.0
    %1065 = vmatpush.xpose.msra.mxu0 0.0
    %1066 = vmatpush.xpose.msra.mxu0 0.0
    %1067 = vmatpush.xpose.msra.mxu0 0.0
    %1068 = vmatpush.xpose.msra.mxu0 0.0
    %1069 = vmatpush.xpose.msra.mxu0 0.0
    %1070 = vmatpush.xpose.msra.mxu0 0.0
    %1071 = vmatpush.xpose.msra.mxu0 0.0
    %1072 = vmatpush.xpose.msra.mxu0 %v1055
    %1073 = vmatmul.f32.gmra.mxu0 %v1053
    %v1074 = vpop.f32.mrf.mxu0
    %v1075 = vadd.f32 0.0, %v1074
    %1076 = vdwg.mxu0
    %v1077 = vsel %vm825, %v1047, 0.0
    %1078 = vadd.xlane.f32.xlu0 %v1077
    %v1079 = vpop.xlane.xlu0 %1078
    %v1080 = vsel %vm825, %v1075, 0.0
    %1081 = vadd.xlane.f32.xlu0 %v1080
    %v1082 = vpop.xlane.xlu0 %1081
    %v1083 = vadd.f32 %v1079, 1e-06
    %v1084 = vadd.f32 %v1082, 1e-06
    %v1085 = vrcp.pop %v1083
    %v1086 = vrcp.pop %v1084
    %v1087 = vmul.f32 %v1047, %v1085
    %v1088 = vmul.f32 %v1075, %v1086
    %1089 = vrot.lane.b32.xlu0 %v885, 48
    %v1090 = vpop.permute.xlu0 %1089
    %v1093 = vsel %vm825, %v1087, 0
    %1095 = vmatpush.msra.mxu0 0.0
    %1096 = vmatpush.msra.mxu0 0.0
    %1097 = vmatpush.msra.mxu0 0.0
    %1098 = vmatpush.msra.mxu0 0.0
    %1099 = vmatpush.msra.mxu0 0.0
    %1100 = vmatpush.msra.mxu0 0.0
    %1101 = vmatpush.msra.mxu0 0.0
    %1102 = vmatpush.msra.mxu0 0.0
    %1103 = vmatpush.msra.mxu0 0.0
    %1104 = vmatpush.msra.mxu0 0.0
    %1105 = vmatpush.msra.mxu0 0.0
    %1106 = vmatpush.msra.mxu0 0.0
    %1107 = vmatpush.msra.mxu0 0.0
    %1108 = vmatpush.msra.mxu0 0.0
    %1109 = vmatpush.msra.mxu0 0.0
    %1110 = vmatpush.msra.mxu0 %v1090
    %1111 = vmatmul.f32.gmra.mxu0 %v1093
    %v1112 = vpop.f32.mrf.mxu0
    %v1113 = vadd.f32 0.0, %v1112
    %1114 = vdwg.mxu0
    %1115 = vrot.lane.b32.xlu0 %v888, 48
    %v1116 = vpop.permute.xlu0 %1115
    %v1119 = vsel %vm825, %v1088, 0
    %1121 = vmatpush.msra.mxu0 0.0
    %1122 = vmatpush.msra.mxu0 0.0
    %1123 = vmatpush.msra.mxu0 0.0
    %1124 = vmatpush.msra.mxu0 0.0
    %1125 = vmatpush.msra.mxu0 0.0
    %1126 = vmatpush.msra.mxu0 0.0
    %1127 = vmatpush.msra.mxu0 0.0
    %1128 = vmatpush.msra.mxu0 0.0
    %1129 = vmatpush.msra.mxu0 0.0
    %1130 = vmatpush.msra.mxu0 0.0
    %1131 = vmatpush.msra.mxu0 0.0
    %1132 = vmatpush.msra.mxu0 0.0
    %1133 = vmatpush.msra.mxu0 0.0
    %1134 = vmatpush.msra.mxu0 0.0
    %1135 = vmatpush.msra.mxu0 0.0
    %1136 = vmatpush.msra.mxu0 %v1116
    %1137 = vmatmul.f32.gmra.mxu0 %v1119
    %v1138 = vpop.f32.mrf.mxu0
    %v1139 = vadd.f32 0.0, %v1138
    %1140 = vdwg.mxu0
    %v1142 = vsel %vm903, %v1113, 0
    %v1145 = vsel %vm903, %v1139, 0
    %1147 = vmatpush.msra.mxu0 0.0
    %1148 = vmatpush.msra.mxu0 0.0
    %1149 = vmatpush.msra.mxu0 0.0
    %1150 = vmatpush.msra.mxu0 0.0
    %1151 = vmatpush.msra.mxu0 0.0
    %1152 = vmatpush.msra.mxu0 0.0
    %1153 = vmatpush.msra.mxu0 0.0
    %1154 = vmatpush.msra.mxu0 0.0
    %1155 = vmatpush.msra.mxu0 0.0
    %1156 = vmatpush.msra.mxu0 0.0
    %1157 = vmatpush.msra.mxu0 0.0
    %1158 = vmatpush.msra.mxu0 0.0
    %1159 = vmatpush.msra.mxu0 0.0
    %1160 = vmatpush.msra.mxu0 0.0
    %1161 = vmatpush.msra.mxu0 %v790
    %1162 = vmatpush.msra.mxu0 %v789
    %1163 = vmatmul.f32.gmra.mxu0 %v1142
    %v1164 = vpop.f32.mrf.mxu0
    %v1165 = vadd.f32 0.0, %v1164
    %1166 = vmatmul.f32.gmra.mxu0 %v1145
    %v1167 = vpop.f32.mrf.mxu0
    %v1168 = vadd.f32 0.0, %v1167
    %1169 = vdwg.mxu0
    %v1171 = vsel %vm903, %v992, 0
    %v1174 = vsel %vm903, %v1019, 0
    %1176 = vmatpush.msra.mxu0 0.0
    %1177 = vmatpush.msra.mxu0 0.0
    %1178 = vmatpush.msra.mxu0 0.0
    %1179 = vmatpush.msra.mxu0 0.0
    %1180 = vmatpush.msra.mxu0 0.0
    %1181 = vmatpush.msra.mxu0 0.0
    %1182 = vmatpush.msra.mxu0 0.0
    %1183 = vmatpush.msra.mxu0 0.0
    %1184 = vmatpush.msra.mxu0 0.0
    %1185 = vmatpush.msra.mxu0 0.0
    %1186 = vmatpush.msra.mxu0 0.0
    %1187 = vmatpush.msra.mxu0 0.0
    %1188 = vmatpush.msra.mxu0 0.0
    %1189 = vmatpush.msra.mxu0 0.0
    %1190 = vmatpush.msra.mxu0 %v788
    %1191 = vmatpush.msra.mxu0 %v787
    %1192 = vmatmul.f32.gmra.mxu0 %v1171
    %v1193 = vpop.f32.mrf.mxu0
    %v1194 = vadd.f32 %v1165, %v1193
    %1195 = vmatmul.f32.gmra.mxu0 %v1174
    %v1196 = vpop.f32.mrf.mxu0
    %v1197 = vadd.f32 %v1168, %v1196
    %1198 = vdwg.mxu0
    %v1199 = vadd.f32 %v855, %v1194
    %v1200 = vadd.f32 %v856, %v1197
    %v1202 = vperm.slane %v785, 0
    %v1204 = vadd.f32 %v1199, %v1202
    %v1205 = vadd.f32 %v1200, %v1202
    %v1206 = vsel %vm860, %v1204, 0.0
    %1207 = vadd.xlane.f32.xlu0 %v1206
    %v1208 = vpop.xlane.xlu0 %1207
    %v1209 = vsel %vm860, %v1205, 0.0
    %1210 = vadd.xlane.f32.xlu0 %v1209
    %v1211 = vpop.xlane.xlu0 %1210
    %v1212 = vrcp.pop 32.0
    %v1213 = vmul.f32 32.0, %v1212
    %v1214 = vsub.f32 1.0, %v1213
    %v1215 = vmul.f32 %v1212, %v1214
    %v1216 = vadd.f32 %v1212, %v1215
    %vm1217 = vweird.f32 %v1212
    %v1218 = vsel %vm1217, %v1212, %v1216
    %v1219 = vmul.f32 %v1208, %v1218
    %v1220 = vmul.f32 %v1211, %v1218
    %v1221 = vsub.f32 %v1204, %v1219
    %v1222 = vsub.f32 %v1205, %v1220
    %v1223 = vmul.f32 %v1221, %v1221
    %v1224 = vmul.f32 %v1222, %v1222
    %v1225 = vsel %vm860, %v1223, 0.0
    %1226 = vadd.xlane.f32.xlu0 %v1225
    %v1227 = vpop.xlane.xlu0 %1226
    %v1228 = vsel %vm860, %v1224, 0.0
    %1229 = vadd.xlane.f32.xlu0 %v1228
    %v1230 = vpop.xlane.xlu0 %1229
    %v1231 = vmul.f32 %v1227, %v1218
    %v1232 = vmul.f32 %v1230, %v1218
    %v1233 = vadd.f32 %v1231, 1e-05
    %v1234 = vadd.f32 %v1232, 1e-05
    %v1235 = vrsqrt.pop %v1233
    %v1236 = vmul.f32 %v1235, %v1233
    %v1237 = vmul.f32 %v1236, %v1235
    %v1238 = vmul.f32 0.5, %v1237
    %v1239 = vsub.f32 1.5, %v1238
    %v1240 = vmul.f32 %v1235, %v1239
    %vm1241 = vweird.f32 %v1233
    %vm1242 = vweird.f32 %v1235
    %vm1243 = vmor %vm1241, %vm1242
    %v1244 = vsel %vm1243, %v1235, %v1240
    %v1245 = vrsqrt.pop %v1234
    %v1246 = vmul.f32 %v1245, %v1234
    %v1247 = vmul.f32 %v1246, %v1245
    %v1248 = vmul.f32 0.5, %v1247
    %v1249 = vsub.f32 1.5, %v1248
    %v1250 = vmul.f32 %v1245, %v1249
    %vm1251 = vweird.f32 %v1234
    %vm1252 = vweird.f32 %v1245
    %vm1253 = vmor %vm1251, %vm1252
    %v1254 = vsel %vm1253, %v1245, %v1250
    %v1255 = vmul.f32 %v1221, %v1244
    %v1256 = vmul.f32 %v1222, %v1254
    %v1258 = vperm.slane %v806, 0
    %v1260 = vmul.f32 %v1255, %v1258
    %v1261 = vmul.f32 %v1256, %v1258
    %v1263 = vperm.slane %v805, 0
    %v1265 = vadd.f32 %v1260, %v1263
    %v1266 = vadd.f32 %v1261, %v1263
    %v1268 = vperm.slane %v795, 0
    %v1271 = vsel %vm860, %v1265, 0
    %v1274 = vsel %vm860, %v1266, 0
    %1276 = vmatpush.msra.mxu0 0.0
    %1277 = vmatpush.msra.mxu0 0.0
    %1278 = vmatpush.msra.mxu0 0.0
    %1279 = vmatpush.msra.mxu0 0.0
    %1280 = vmatpush.msra.mxu0 0.0
    %1281 = vmatpush.msra.mxu0 0.0
    %1282 = vmatpush.msra.mxu0 0.0
    %1283 = vmatpush.msra.mxu0 0.0
    %1284 = vmatpush.msra.mxu0 0.0
    %1285 = vmatpush.msra.mxu0 0.0
    %1286 = vmatpush.msra.mxu0 0.0
    %1287 = vmatpush.msra.mxu0 0.0
    %1288 = vmatpush.msra.mxu0 %v799
    %1289 = vmatpush.msra.mxu0 %v798
    %1290 = vmatpush.msra.mxu0 %v797
    %1291 = vmatpush.msra.mxu0 %v796
    %1292 = vmatmul.f32.gmra.mxu0 %v1271
    %v1293 = vpop.f32.mrf.mxu0
    %v1294 = vadd.f32 %v1268, %v1293
    %1295 = vmatmul.f32.gmra.mxu0 %v1274
    %v1296 = vpop.f32.mrf.mxu0
    %v1297 = vadd.f32 %v1268, %v1296
    %1298 = vdwg.mxu0
    %v1299 = vmax.f32 %v1294, 0.0
    %v1300 = vmax.f32 %v1297, 0.0
    %v1302 = vperm.slane %v800, 0
    %v1305 = vsel %vm860, %v1299, 0
    %v1308 = vsel %vm860, %v1300, 0
    %1310 = vmatpush.msra.mxu0 0.0
    %1311 = vmatpush.msra.mxu0 0.0
    %1312 = vmatpush.msra.mxu0 0.0
    %1313 = vmatpush.msra.mxu0 0.0
    %1314 = vmatpush.msra.mxu0 0.0
    %1315 = vmatpush.msra.mxu0 0.0
    %1316 = vmatpush.msra.mxu0 0.0
    %1317 = vmatpush.msra.mxu0 0.0
    %1318 = vmatpush.msra.mxu0 0.0
    %1319 = vmatpush.msra.mxu0 0.0
    %1320 = vmatpush.msra.mxu0 0.0
    %1321 = vmatpush.msra.mxu0 0.0
    %1322 = vmatpush.msra.mxu0 %v804
    %1323 = vmatpush.msra.mxu0 %v803
    %1324 = vmatpush.msra.mxu0 %v802
    %1325 = vmatpush.msra.mxu0 %v801
    %1326 = vmatmul.f32.gmra.mxu0 %v1305
    %v1327 = vpop.f32.mrf.mxu0
    %v1328 = vadd.f32 %v1302, %v1327
    %1329 = vmatmul.f32.gmra.mxu0 %v1308
    %v1330 = vpop.f32.mrf.mxu0
    %v1331 = vadd.f32 %v1302, %v1330
    %1332 = vdwg.mxu0
    %v1333 = vadd.f32 %v1265, %v1328
    %v1334 = vadd.f32 %v1266, %v1331
    %v1335 = vsel %vm860, %v1333, 0.0
    %1336 = vadd.xlane.f32.xlu0 %v1335
    %v1337 = vpop.xlane.xlu0 %1336
    %v1338 = vsel %vm860, %v1334, 0.0
    %1339 = vadd.xlane.f32.xlu0 %v1338
    %v1340 = vpop.xlane.xlu0 %1339
    %v1341 = vmul.f32 %v1337, %v1218
    %v1342 = vmul.f32 %v1340, %v1218
    %v1343 = vsub.f32 %v1333, %v1341
    %v1344 = vsub.f32 %v1334, %v1342
    %v1345 = vmul.f32 %v1343, %v1343
    %v1346 = vmul.f32 %v1344, %v1344
    %v1347 = vsel %vm860, %v1345, 0.0
    %1348 = vadd.xlane.f32.xlu0 %v1347
    %v1349 = vpop.xlane.xlu0 %1348
    %v1350 = vsel %vm860, %v1346, 0.0
    %1351 = vadd.xlane.f32.xlu0 %v1350
    %v1352 = vpop.xlane.xlu0 %1351
    %v1353 = vmul.f32 %v1349, %v1218
    %v1354 = vmul.f32 %v1352, %v1218
    %v1355 = vadd.f32 %v1353, 1e-05
    %v1356 = vadd.f32 %v1354, 1e-05
    %v1357 = vrsqrt.pop %v1355
    %v1358 = vmul.f32 %v1357, %v1355
    %v1359 = vmul.f32 %v1358, %v1357
    %v1360 = vmul.f32 0.5, %v1359
    %v1361 = vsub.f32 1.5, %v1360
    %v1362 = vmul.f32 %v1357, %v1361
    %vm1363 = vweird.f32 %v1355
    %vm1364 = vweird.f32 %v1357
    %vm1365 = vmor %vm1363, %vm1364
    %v1366 = vsel %vm1365, %v1357, %v1362
    %v1367 = vrsqrt.pop %v1356
    %v1368 = vmul.f32 %v1367, %v1356
    %v1369 = vmul.f32 %v1368, %v1367
    %v1370 = vmul.f32 0.5, %v1369
    %v1371 = vsub.f32 1.5, %v1370
    %v1372 = vmul.f32 %v1367, %v1371
    %vm1373 = vweird.f32 %v1356
    %vm1374 = vweird.f32 %v1367
    %vm1375 = vmor %vm1373, %vm1374
    %v1376 = vsel %vm1375, %v1367, %v1372
    %v1377 = vmul.f32 %v1343, %v1366
    %v1378 = vmul.f32 %v1344, %v1376
    %v1380 = vperm.slane %v808, 0
    %v1382 = vmul.f32 %v1377, %v1380
    %v1383 = vmul.f32 %v1378, %v1380
    %v1385 = vperm.slane %v807, 0
    %v1387 = vadd.f32 %v1382, %v1385
    %v1388 = vadd.f32 %v1383, %v1385
    %v1389 = vsel %vm860, %v1387, 0.0
    %1390 = vadd.xlane.f32.xlu0 %v1389
    %v1391 = vpop.xlane.xlu0 %1390
    %v1392 = vsel %vm860, %v1388, 0.0
    %1393 = vadd.xlane.f32.xlu0 %v1392
    %v1394 = vpop.xlane.xlu0 %1393
    %v1395 = vmul.f32 %v1391, %v1218
    %v1396 = vmul.f32 %v1394, %v1218
    %v1397 = vsub.f32 %v1387, %v1395
    %v1398 = vsub.f32 %v1388, %v1396
    %v1399 = vmul.f32 %v1397, %v1397
    %v1400 = vmul.f32 %v1398, %v1398
    %v1401 = vsel %vm860, %v1399, 0.0
    %1402 = vadd.xlane.f32.xlu0 %v1401
    %v1403 = vpop.xlane.xlu0 %1402
    %v1404 = vsel %vm860, %v1400, 0.0
    %1405 = vadd.xlane.f32.xlu0 %v1404
    %v1406 = vpop.xlane.xlu0 %1405
    %v1407 = vmul.f32 %v1403, %v1218
    %v1408 = vmul.f32 %v1406, %v1218
    %v1409 = vadd.f32 %v1407, 1e-05
    %v1410 = vadd.f32 %v1408, 1e-05
    %v1411 = vrsqrt.pop %v1409
    %v1412 = vmul.f32 %v1411, %v1409
    %v1413 = vmul.f32 %v1412, %v1411
    %v1414 = vmul.f32 0.5, %v1413
    %v1415 = vsub.f32 1.5, %v1414
    %v1416 = vmul.f32 %v1411, %v1415
    %vm1417 = vweird.f32 %v1409
    %vm1418 = vweird.f32 %v1411
    %vm1419 = vmor %vm1417, %vm1418
    %v1420 = vsel %vm1419, %v1411, %v1416
    %v1421 = vrsqrt.pop %v1410
    %v1422 = vmul.f32 %v1421, %v1410
    %v1423 = vmul.f32 %v1422, %v1421
    %v1424 = vmul.f32 0.5, %v1423
    %v1425 = vsub.f32 1.5, %v1424
    %v1426 = vmul.f32 %v1421, %v1425
    %vm1427 = vweird.f32 %v1410
    %vm1428 = vweird.f32 %v1421
    %vm1429 = vmor %vm1427, %vm1428
    %v1430 = vsel %vm1429, %v1421, %v1426
    %v1431 = vmul.f32 %v1397, %v1420
    %v1432 = vmul.f32 %v1398, %v1430
    %v1434 = vperm.slane %v784, 0
    %v1436 = vmul.f32 %v1431, %v1434
    %v1437 = vmul.f32 %v1432, %v1434
    %v1439 = vperm.slane %v783, 0
    %v1441 = vadd.f32 %v1436, %v1439
    %v1442 = vadd.f32 %v1437, %v1439
    %v1444 = vsel %vm860, %v1441, 0
    %v1447 = vsel %vm860, %v1442, 0
    %1449 = vmatpush.msra.mxu0 0.0
    %1450 = vmatpush.msra.mxu0 0.0
    %1451 = vmatpush.msra.mxu0 0.0
    %1452 = vmatpush.msra.mxu0 0.0
    %1453 = vmatpush.msra.mxu0 0.0
    %1454 = vmatpush.msra.mxu0 0.0
    %1455 = vmatpush.msra.mxu0 0.0
    %1456 = vmatpush.msra.mxu0 0.0
    %1457 = vmatpush.msra.mxu0 0.0
    %1458 = vmatpush.msra.mxu0 0.0
    %1459 = vmatpush.msra.mxu0 0.0
    %1460 = vmatpush.msra.mxu0 0.0
    %1461 = vmatpush.msra.mxu0 %v794
    %1462 = vmatpush.msra.mxu0 %v793
    %1463 = vmatpush.msra.mxu0 %v792
    %1464 = vmatpush.msra.mxu0 %v791
    %1465 = vmatmul.f32.gmra.mxu0 %v1444
    %v1466 = vpop.f32.mrf.mxu0
    %v1467 = vadd.f32 %v858, %v1466
    %1468 = vmatmul.f32.gmra.mxu0 %v1447
    %v1469 = vpop.f32.mrf.mxu0
    %v1470 = vadd.f32 %v858, %v1469
    %1471 = vdwg.mxu0
    %vm1472 = vcmp.gt.f32.partialorder %v1467, 0.0
    %vm1473 = vcmp.gt.f32.partialorder %v1470, 0.0
    %v1474 = vadd.f32 %v1467, 1.0
    %v1475 = vadd.f32 %v1470, 1.0
    %v1476 = vmul.f32 %v1467, 1.442695
    %v1477 = vpow.pop %v1476
    %v1478 = vmul.f32 %v1470, 1.442695
    %v1479 = vpow.pop %v1478
    %v1480 = vsel %vm1472, %v1474, %v1477
    %v1481 = vsel %vm1473, %v1475, %v1479
    %1483 = vrot.lane.b32.xlu0 %v1480, 96
    %v1484 = vpop.permute.xlu0 %1483
    %v1485 = vsel %vm903, %v1480, 0
    %v1487 = vsel %vm903, %v1484, 0
    %1489 = vmatpush.xpose.msra.mxu0 0.0
    %1490 = vmatpush.xpose.msra.mxu0 0.0
    %1491 = vmatpush.xpose.msra.mxu0 0.0
    %1492 = vmatpush.xpose.msra.mxu0 0.0
    %1493 = vmatpush.xpose.msra.mxu0 0.0
    %1494 = vmatpush.xpose.msra.mxu0 0.0
    %1495 = vmatpush.xpose.msra.mxu0 0.0
    %1496 = vmatpush.xpose.msra.mxu0 0.0
    %1497 = vmatpush.xpose.msra.mxu0 0.0
    %1498 = vmatpush.xpose.msra.mxu0 0.0
    %1499 = vmatpush.xpose.msra.mxu0 0.0
    %1500 = vmatpush.xpose.msra.mxu0 0.0
    %1501 = vmatpush.xpose.msra.mxu0 0.0
    %1502 = vmatpush.xpose.msra.mxu0 0.0
    %1503 = vmatpush.xpose.msra.mxu0 0.0
    %1504 = vmatpush.xpose.msra.mxu0 %v1487
    %1505 = vmatmul.f32.gmra.mxu0 %v1485
    %v1506 = vpop.f32.mrf.mxu0
    %v1507 = vadd.f32 0.0, %v1506
    %1508 = vdwg.mxu0
    %1510 = vrot.lane.b32.xlu0 %v1481, 96
    %v1511 = vpop.permute.xlu0 %1510
    %v1512 = vsel %vm903, %v1481, 0
    %v1514 = vsel %vm903, %v1511, 0
    %1516 = vmatpush.xpose.msra.mxu0 0.0
    %1517 = vmatpush.xpose.msra.mxu0 0.0
    %1518 = vmatpush.xpose.msra.mxu0 0.0
    %1519 = vmatpush.xpose.msra.mxu0 0.0
    %1520 = vmatpush.xpose.msra.mxu0 0.0
    %1521 = vmatpush.xpose.msra.mxu0 0.0
    %1522 = vmatpush.xpose.msra.mxu0 0.0
    %1523 = vmatpush.xpose.msra.mxu0 0.0
    %1524 = vmatpush.xpose.msra.mxu0 0.0
    %1525 = vmatpush.xpose.msra.mxu0 0.0
    %1526 = vmatpush.xpose.msra.mxu0 0.0
    %1527 = vmatpush.xpose.msra.mxu0 0.0
    %1528 = vmatpush.xpose.msra.mxu0 0.0
    %1529 = vmatpush.xpose.msra.mxu0 0.0
    %1530 = vmatpush.xpose.msra.mxu0 0.0
    %1531 = vmatpush.xpose.msra.mxu0 %v1514
    %1532 = vmatmul.f32.gmra.mxu0 %v1512
    %v1533 = vpop.f32.mrf.mxu0
    %v1534 = vadd.f32 0.0, %v1533
    %1535 = vdwg.mxu0
    %v1536 = vsel %vm825, %v1507, 0.0
    %1537 = vadd.xlane.f32.xlu0 %v1536
    %v1538 = vpop.xlane.xlu0 %1537
    %v1539 = vsel %vm825, %v1534, 0.0
    %1540 = vadd.xlane.f32.xlu0 %v1539
    %v1541 = vpop.xlane.xlu0 %1540
    %v1542 = vadd.f32 %v1538, 1e-06
    %v1543 = vadd.f32 %v1541, 1e-06
    %v1544 = vrcp.pop %v1542
    %v1545 = vrcp.pop %v1543
    %v1546 = vmul.f32 %v1507, %v1544
    %v1547 = vmul.f32 %v1534, %v1545
    %1549 = vrot.lane.b32.xlu0 %v1467, 64
    %v1550 = vpop.permute.xlu0 %1549
    %v1553 = vsel %vm825, %v1546, 0
    %1555 = vmatpush.msra.mxu0 0.0
    %1556 = vmatpush.msra.mxu0 0.0
    %1557 = vmatpush.msra.mxu0 0.0
    %1558 = vmatpush.msra.mxu0 0.0
    %1559 = vmatpush.msra.mxu0 0.0
    %1560 = vmatpush.msra.mxu0 0.0
    %1561 = vmatpush.msra.mxu0 0.0
    %1562 = vmatpush.msra.mxu0 0.0
    %1563 = vmatpush.msra.mxu0 0.0
    %1564 = vmatpush.msra.mxu0 0.0
    %1565 = vmatpush.msra.mxu0 0.0
    %1566 = vmatpush.msra.mxu0 0.0
    %1567 = vmatpush.msra.mxu0 0.0
    %1568 = vmatpush.msra.mxu0 0.0
    %1569 = vmatpush.msra.mxu0 0.0
    %1570 = vmatpush.msra.mxu0 %v1550
    %1571 = vmatmul.f32.gmra.mxu0 %v1553
    %v1572 = vpop.f32.mrf.mxu0
    %v1573 = vadd.f32 0.0, %v1572
    %1574 = vdwg.mxu0
    %1576 = vrot.lane.b32.xlu0 %v1470, 64
    %v1577 = vpop.permute.xlu0 %1576
    %v1580 = vsel %vm825, %v1547, 0
    %1582 = vmatpush.msra.mxu0 0.0
    %1583 = vmatpush.msra.mxu0 0.0
    %1584 = vmatpush.msra.mxu0 0.0
    %1585 = vmatpush.msra.mxu0 0.0
    %1586 = vmatpush.msra.mxu0 0.0
    %1587 = vmatpush.msra.mxu0 0.0
    %1588 = vmatpush.msra.mxu0 0.0
    %1589 = vmatpush.msra.mxu0 0.0
    %1590 = vmatpush.msra.mxu0 0.0
    %1591 = vmatpush.msra.mxu0 0.0
    %1592 = vmatpush.msra.mxu0 0.0
    %1593 = vmatpush.msra.mxu0 0.0
    %1594 = vmatpush.msra.mxu0 0.0
    %1595 = vmatpush.msra.mxu0 0.0
    %1596 = vmatpush.msra.mxu0 0.0
    %1597 = vmatpush.msra.mxu0 %v1577
    %1598 = vmatmul.f32.gmra.mxu0 %v1580
    %v1599 = vpop.f32.mrf.mxu0
    %v1600 = vadd.f32 0.0, %v1599
    %1601 = vdwg.mxu0
    %1602 = vrot.lane.b32.xlu0 %v1480, 112
    %v1603 = vpop.permute.xlu0 %1602
    %1604 = vrot.lane.b32.xlu0 %v1480, 80
    %v1605 = vpop.permute.xlu0 %1604
    %v1606 = vsel %vm903, %v1603, 0
    %v1608 = vsel %vm903, %v1605, 0
    %1610 = vmatpush.xpose.msra.mxu0 0.0
    %1611 = vmatpush.xpose.msra.mxu0 0.0
    %1612 = vmatpush.xpose.msra.mxu0 0.0
    %1613 = vmatpush.xpose.msra.mxu0 0.0
    %1614 = vmatpush.xpose.msra.mxu0 0.0
    %1615 = vmatpush.xpose.msra.mxu0 0.0
    %1616 = vmatpush.xpose.msra.mxu0 0.0
    %1617 = vmatpush.xpose.msra.mxu0 0.0
    %1618 = vmatpush.xpose.msra.mxu0 0.0
    %1619 = vmatpush.xpose.msra.mxu0 0.0
    %1620 = vmatpush.xpose.msra.mxu0 0.0
    %1621 = vmatpush.xpose.msra.mxu0 0.0
    %1622 = vmatpush.xpose.msra.mxu0 0.0
    %1623 = vmatpush.xpose.msra.mxu0 0.0
    %1624 = vmatpush.xpose.msra.mxu0 0.0
    %1625 = vmatpush.xpose.msra.mxu0 %v1608
    %1626 = vmatmul.f32.gmra.mxu0 %v1606
    %v1627 = vpop.f32.mrf.mxu0
    %v1628 = vadd.f32 0.0, %v1627
    %1629 = vdwg.mxu0
    %1630 = vrot.lane.b32.xlu0 %v1481, 112
    %v1631 = vpop.permute.xlu0 %1630
    %1632 = vrot.lane.b32.xlu0 %v1481, 80
    %v1633 = vpop.permute.xlu0 %1632
    %v1634 = vsel %vm903, %v1631, 0
    %v1636 = vsel %vm903, %v1633, 0
    %1638 = vmatpush.xpose.msra.mxu0 0.0
    %1639 = vmatpush.xpose.msra.mxu0 0.0
    %1640 = vmatpush.xpose.msra.mxu0 0.0
    %1641 = vmatpush.xpose.msra.mxu0 0.0
    %1642 = vmatpush.xpose.msra.mxu0 0.0
    %1643 = vmatpush.xpose.msra.mxu0 0.0
    %1644 = vmatpush.xpose.msra.mxu0 0.0
    %1645 = vmatpush.xpose.msra.mxu0 0.0
    %1646 = vmatpush.xpose.msra.mxu0 0.0
    %1647 = vmatpush.xpose.msra.mxu0 0.0
    %1648 = vmatpush.xpose.msra.mxu0 0.0
    %1649 = vmatpush.xpose.msra.mxu0 0.0
    %1650 = vmatpush.xpose.msra.mxu0 0.0
    %1651 = vmatpush.xpose.msra.mxu0 0.0
    %1652 = vmatpush.xpose.msra.mxu0 0.0
    %1653 = vmatpush.xpose.msra.mxu0 %v1636
    %1654 = vmatmul.f32.gmra.mxu0 %v1634
    %v1655 = vpop.f32.mrf.mxu0
    %v1656 = vadd.f32 0.0, %v1655
    %1657 = vdwg.mxu0
    %v1658 = vsel %vm825, %v1628, 0.0
    %1659 = vadd.xlane.f32.xlu0 %v1658
    %v1660 = vpop.xlane.xlu0 %1659
    %v1661 = vsel %vm825, %v1656, 0.0
    %1662 = vadd.xlane.f32.xlu0 %v1661
    %v1663 = vpop.xlane.xlu0 %1662
    %v1664 = vadd.f32 %v1660, 1e-06
    %v1665 = vadd.f32 %v1663, 1e-06
    %v1666 = vrcp.pop %v1664
    %v1667 = vrcp.pop %v1665
    %v1668 = vmul.f32 %v1628, %v1666
    %v1669 = vmul.f32 %v1656, %v1667
    %1670 = vrot.lane.b32.xlu0 %v1467, 48
    %v1671 = vpop.permute.xlu0 %1670
    %v1674 = vsel %vm825, %v1668, 0
    %1676 = vmatpush.msra.mxu0 0.0
    %1677 = vmatpush.msra.mxu0 0.0
    %1678 = vmatpush.msra.mxu0 0.0
    %1679 = vmatpush.msra.mxu0 0.0
    %1680 = vmatpush.msra.mxu0 0.0
    %1681 = vmatpush.msra.mxu0 0.0
    %1682 = vmatpush.msra.mxu0 0.0
    %1683 = vmatpush.msra.mxu0 0.0
    %1684 = vmatpush.msra.mxu0 0.0
    %1685 = vmatpush.msra.mxu0 0.0
    %1686 = vmatpush.msra.mxu0 0.0
    %1687 = vmatpush.msra.mxu0 0.0
    %1688 = vmatpush.msra.mxu0 0.0
    %1689 = vmatpush.msra.mxu0 0.0
    %1690 = vmatpush.msra.mxu0 0.0
    %1691 = vmatpush.msra.mxu0 %v1671
    %1692 = vmatmul.f32.gmra.mxu0 %v1674
    %v1693 = vpop.f32.mrf.mxu0
    %v1694 = vadd.f32 0.0, %v1693
    %1695 = vdwg.mxu0
    %1696 = vrot.lane.b32.xlu0 %v1470, 48
    %v1697 = vpop.permute.xlu0 %1696
    %v1700 = vsel %vm825, %v1669, 0
    %1702 = vmatpush.msra.mxu0 0.0
    %1703 = vmatpush.msra.mxu0 0.0
    %1704 = vmatpush.msra.mxu0 0.0
    %1705 = vmatpush.msra.mxu0 0.0
    %1706 = vmatpush.msra.mxu0 0.0
    %1707 = vmatpush.msra.mxu0 0.0
    %1708 = vmatpush.msra.mxu0 0.0
    %1709 = vmatpush.msra.mxu0 0.0
    %1710 = vmatpush.msra.mxu0 0.0
    %1711 = vmatpush.msra.mxu0 0.0
    %1712 = vmatpush.msra.mxu0 0.0
    %1713 = vmatpush.msra.mxu0 0.0
    %1714 = vmatpush.msra.mxu0 0.0
    %1715 = vmatpush.msra.mxu0 0.0
    %1716 = vmatpush.msra.mxu0 0.0
    %1717 = vmatpush.msra.mxu0 %v1697
    %1718 = vmatmul.f32.gmra.mxu0 %v1700
    %v1719 = vpop.f32.mrf.mxu0
    %v1720 = vadd.f32 0.0, %v1719
    %1721 = vdwg.mxu0
    %v1723 = vsel %vm903, %v1694, 0
    %v1726 = vsel %vm903, %v1720, 0
    %1728 = vmatpush.msra.mxu0 0.0
    %1729 = vmatpush.msra.mxu0 0.0
    %1730 = vmatpush.msra.mxu0 0.0
    %1731 = vmatpush.msra.mxu0 0.0
    %1732 = vmatpush.msra.mxu0 0.0
    %1733 = vmatpush.msra.mxu0 0.0
    %1734 = vmatpush.msra.mxu0 0.0
    %1735 = vmatpush.msra.mxu0 0.0
    %1736 = vmatpush.msra.mxu0 0.0
    %1737 = vmatpush.msra.mxu0 0.0
    %1738 = vmatpush.msra.mxu0 0.0
    %1739 = vmatpush.msra.mxu0 0.0
    %1740 = vmatpush.msra.mxu0 0.0
    %1741 = vmatpush.msra.mxu0 0.0
    %1742 = vmatpush.msra.mxu0 %v790
    %1743 = vmatpush.msra.mxu0 %v789
    %1744 = vmatmul.f32.gmra.mxu0 %v1723
    %v1745 = vpop.f32.mrf.mxu0
    %v1746 = vadd.f32 0.0, %v1745
    %1747 = vmatmul.f32.gmra.mxu0 %v1726
    %v1748 = vpop.f32.mrf.mxu0
    %v1749 = vadd.f32 0.0, %v1748
    %1750 = vdwg.mxu0
    %v1752 = vsel %vm903, %v1573, 0
    %v1755 = vsel %vm903, %v1600, 0
    %1757 = vmatpush.msra.mxu0 0.0
    %1758 = vmatpush.msra.mxu0 0.0
    %1759 = vmatpush.msra.mxu0 0.0
    %1760 = vmatpush.msra.mxu0 0.0
    %1761 = vmatpush.msra.mxu0 0.0
    %1762 = vmatpush.msra.mxu0 0.0
    %1763 = vmatpush.msra.mxu0 0.0
    %1764 = vmatpush.msra.mxu0 0.0
    %1765 = vmatpush.msra.mxu0 0.0
    %1766 = vmatpush.msra.mxu0 0.0
    %1767 = vmatpush.msra.mxu0 0.0
    %1768 = vmatpush.msra.mxu0 0.0
    %1769 = vmatpush.msra.mxu0 0.0
    %1770 = vmatpush.msra.mxu0 0.0
    %1771 = vmatpush.msra.mxu0 %v788
    %1772 = vmatpush.msra.mxu0 %v787
    %1773 = vmatmul.f32.gmra.mxu0 %v1752
    %v1774 = vpop.f32.mrf.mxu0
    %v1775 = vadd.f32 %v1746, %v1774
    %1776 = vmatmul.f32.gmra.mxu0 %v1755
    %v1777 = vpop.f32.mrf.mxu0
    %v1778 = vadd.f32 %v1749, %v1777
    %1779 = vdwg.mxu0
    %v1780 = vadd.f32 %v1441, %v1775
    %v1781 = vadd.f32 %v1442, %v1778
    %v1782 = vadd.f32 %v1780, %v1202
    %v1783 = vadd.f32 %v1781, %v1202
    %v1784 = vsel %vm860, %v1782, 0.0
    %1785 = vadd.xlane.f32.xlu0 %v1784
    %v1786 = vpop.xlane.xlu0 %1785
    %v1787 = vsel %vm860, %v1783, 0.0
    %1788 = vadd.xlane.f32.xlu0 %v1787
    %v1789 = vpop.xlane.xlu0 %1788
    %v1790 = vmul.f32 %v1786, %v1218
    %v1791 = vmul.f32 %v1789, %v1218
    %v1792 = vsub.f32 %v1782, %v1790
    %v1793 = vsub.f32 %v1783, %v1791
    %v1794 = vmul.f32 %v1792, %v1792
    %v1795 = vmul.f32 %v1793, %v1793
    %v1796 = vsel %vm860, %v1794, 0.0
    %1797 = vadd.xlane.f32.xlu0 %v1796
    %v1798 = vpop.xlane.xlu0 %1797
    %v1799 = vsel %vm860, %v1795, 0.0
    %1800 = vadd.xlane.f32.xlu0 %v1799
    %v1801 = vpop.xlane.xlu0 %1800
    %v1802 = vmul.f32 %v1798, %v1218
    %v1803 = vmul.f32 %v1801, %v1218
    %v1804 = vadd.f32 %v1802, 1e-05
    %v1805 = vadd.f32 %v1803, 1e-05
    %v1806 = vrsqrt.pop %v1804
    %v1807 = vmul.f32 %v1806, %v1804
    %v1808 = vmul.f32 %v1807, %v1806
    %v1809 = vmul.f32 0.5, %v1808
    %v1810 = vsub.f32 1.5, %v1809
    %v1811 = vmul.f32 %v1806, %v1810
    %vm1812 = vweird.f32 %v1804
    %vm1813 = vweird.f32 %v1806
    %vm1814 = vmor %vm1812, %vm1813
    %v1815 = vsel %vm1814, %v1806, %v1811
    %v1816 = vrsqrt.pop %v1805
    %v1817 = vmul.f32 %v1816, %v1805
    %v1818 = vmul.f32 %v1817, %v1816
    %v1819 = vmul.f32 0.5, %v1818
    %v1820 = vsub.f32 1.5, %v1819
    %v1821 = vmul.f32 %v1816, %v1820
    %vm1822 = vweird.f32 %v1805
    %vm1823 = vweird.f32 %v1816
    %vm1824 = vmor %vm1822, %vm1823
    %v1825 = vsel %vm1824, %v1816, %v1821
    %v1826 = vmul.f32 %v1792, %v1815
    %v1827 = vmul.f32 %v1793, %v1825
    %v1828 = vmul.f32 %v1826, %v1258
    %v1829 = vmul.f32 %v1827, %v1258
    %v1830 = vadd.f32 %v1828, %v1263
    %v1831 = vadd.f32 %v1829, %v1263
    %v1833 = vsel %vm860, %v1830, 0
    %v1836 = vsel %vm860, %v1831, 0
    %1838 = vmatpush.msra.mxu0 0.0
    %1839 = vmatpush.msra.mxu0 0.0
    %1840 = vmatpush.msra.mxu0 0.0
    %1841 = vmatpush.msra.mxu0 0.0
    %1842 = vmatpush.msra.mxu0 0.0
    %1843 = vmatpush.msra.mxu0 0.0
    %1844 = vmatpush.msra.mxu0 0.0
    %1845 = vmatpush.msra.mxu0 0.0
    %1846 = vmatpush.msra.mxu0 0.0
    %1847 = vmatpush.msra.mxu0 0.0
    %1848 = vmatpush.msra.mxu0 0.0
    %1849 = vmatpush.msra.mxu0 0.0
    %1850 = vmatpush.msra.mxu0 %v799
    %1851 = vmatpush.msra.mxu0 %v798
    %1852 = vmatpush.msra.mxu0 %v797
    %1853 = vmatpush.msra.mxu0 %v796
    %1854 = vmatmul.f32.gmra.mxu0 %v1833
    %v1855 = vpop.f32.mrf.mxu0
    %v1856 = vadd.f32 %v1268, %v1855
    %1857 = vmatmul.f32.gmra.mxu0 %v1836
    %v1858 = vpop.f32.mrf.mxu0
    %v1859 = vadd.f32 %v1268, %v1858
    %1860 = vdwg.mxu0
    %v1861 = vmax.f32 %v1856, 0.0
    %v1862 = vmax.f32 %v1859, 0.0
    %v1864 = vsel %vm860, %v1861, 0
    %v1867 = vsel %vm860, %v1862, 0
    %1869 = vmatpush.msra.mxu0 0.0
    %1870 = vmatpush.msra.mxu0 0.0
    %1871 = vmatpush.msra.mxu0 0.0
    %1872 = vmatpush.msra.mxu0 0.0
    %1873 = vmatpush.msra.mxu0 0.0
    %1874 = vmatpush.msra.mxu0 0.0
    %1875 = vmatpush.msra.mxu0 0.0
    %1876 = vmatpush.msra.mxu0 0.0
    %1877 = vmatpush.msra.mxu0 0.0
    %1878 = vmatpush.msra.mxu0 0.0
    %1879 = vmatpush.msra.mxu0 0.0
    %1880 = vmatpush.msra.mxu0 0.0
    %1881 = vmatpush.msra.mxu0 %v804
    %1882 = vmatpush.msra.mxu0 %v803
    %1883 = vmatpush.msra.mxu0 %v802
    %1884 = vmatpush.msra.mxu0 %v801
    %1885 = vmatmul.f32.gmra.mxu0 %v1864
    %v1886 = vpop.f32.mrf.mxu0
    %v1887 = vadd.f32 %v1302, %v1886
    %1888 = vmatmul.f32.gmra.mxu0 %v1867
    %v1889 = vpop.f32.mrf.mxu0
    %v1890 = vadd.f32 %v1302, %v1889
    %1891 = vdwg.mxu0
    %v1892 = vadd.f32 %v1830, %v1887
    %v1893 = vadd.f32 %v1831, %v1890
    %v1894 = vsel %vm860, %v1892, 0.0
    %1895 = vadd.xlane.f32.xlu0 %v1894
    %v1896 = vpop.xlane.xlu0 %1895
    %v1897 = vsel %vm860, %v1893, 0.0
    %1898 = vadd.xlane.f32.xlu0 %v1897
    %v1899 = vpop.xlane.xlu0 %1898
    %v1900 = vmul.f32 %v1896, %v1218
    %v1901 = vmul.f32 %v1899, %v1218
    %v1902 = vsub.f32 %v1892, %v1900
    %v1903 = vsub.f32 %v1893, %v1901
    %v1904 = vmul.f32 %v1902, %v1902
    %v1905 = vmul.f32 %v1903, %v1903
    %v1906 = vsel %vm860, %v1904, 0.0
    %1907 = vadd.xlane.f32.xlu0 %v1906
    %v1908 = vpop.xlane.xlu0 %1907
    %v1909 = vsel %vm860, %v1905, 0.0
    %1910 = vadd.xlane.f32.xlu0 %v1909
    %v1911 = vpop.xlane.xlu0 %1910
    %v1912 = vmul.f32 %v1908, %v1218
    %v1913 = vmul.f32 %v1911, %v1218
    %v1914 = vadd.f32 %v1912, 1e-05
    %v1915 = vadd.f32 %v1913, 1e-05
    %v1916 = vrsqrt.pop %v1914
    %v1917 = vmul.f32 %v1916, %v1914
    %v1918 = vmul.f32 %v1917, %v1916
    %v1919 = vmul.f32 0.5, %v1918
    %v1920 = vsub.f32 1.5, %v1919
    %v1921 = vmul.f32 %v1916, %v1920
    %vm1922 = vweird.f32 %v1914
    %vm1923 = vweird.f32 %v1916
    %vm1924 = vmor %vm1922, %vm1923
    %v1925 = vsel %vm1924, %v1916, %v1921
    %v1926 = vrsqrt.pop %v1915
    %v1927 = vmul.f32 %v1926, %v1915
    %v1928 = vmul.f32 %v1927, %v1926
    %v1929 = vmul.f32 0.5, %v1928
    %v1930 = vsub.f32 1.5, %v1929
    %v1931 = vmul.f32 %v1926, %v1930
    %vm1932 = vweird.f32 %v1915
    %vm1933 = vweird.f32 %v1926
    %vm1934 = vmor %vm1932, %vm1933
    %v1935 = vsel %vm1934, %v1926, %v1931
    %v1936 = vmul.f32 %v1902, %v1925
    %v1937 = vmul.f32 %v1903, %v1935
    %v1938 = vmul.f32 %v1936, %v1380
    %v1939 = vmul.f32 %v1937, %v1380
    %v1940 = vadd.f32 %v1938, %v1385
    %v1941 = vadd.f32 %v1939, %v1385
    %v1942 = vsel %vm860, %v1940, 0.0
    %1943 = vadd.xlane.f32.xlu0 %v1942
    %v1944 = vpop.xlane.xlu0 %1943
    %v1945 = vsel %vm860, %v1941, 0.0
    %1946 = vadd.xlane.f32.xlu0 %v1945
    %v1947 = vpop.xlane.xlu0 %1946
    %v1948 = vmul.f32 %v1944, %v1218
    %v1949 = vmul.f32 %v1947, %v1218
    %v1950 = vsub.f32 %v1940, %v1948
    %v1951 = vsub.f32 %v1941, %v1949
    %v1952 = vmul.f32 %v1950, %v1950
    %v1953 = vmul.f32 %v1951, %v1951
    %v1954 = vsel %vm860, %v1952, 0.0
    %1955 = vadd.xlane.f32.xlu0 %v1954
    %v1956 = vpop.xlane.xlu0 %1955
    %v1957 = vsel %vm860, %v1953, 0.0
    %1958 = vadd.xlane.f32.xlu0 %v1957
    %v1959 = vpop.xlane.xlu0 %1958
    %v1960 = vmul.f32 %v1956, %v1218
    %v1961 = vmul.f32 %v1959, %v1218
    %v1962 = vadd.f32 %v1960, 1e-05
    %v1963 = vadd.f32 %v1961, 1e-05
    %v1964 = vrsqrt.pop %v1962
    %v1965 = vmul.f32 %v1964, %v1962
    %v1966 = vmul.f32 %v1965, %v1964
    %v1967 = vmul.f32 0.5, %v1966
    %v1968 = vsub.f32 1.5, %v1967
    %v1969 = vmul.f32 %v1964, %v1968
    %vm1970 = vweird.f32 %v1962
    %vm1971 = vweird.f32 %v1964
    %vm1972 = vmor %vm1970, %vm1971
    %v1973 = vsel %vm1972, %v1964, %v1969
    %v1974 = vrsqrt.pop %v1963
    %v1975 = vmul.f32 %v1974, %v1963
    %v1976 = vmul.f32 %v1975, %v1974
    %v1977 = vmul.f32 0.5, %v1976
    %v1978 = vsub.f32 1.5, %v1977
    %v1979 = vmul.f32 %v1974, %v1978
    %vm1980 = vweird.f32 %v1963
    %vm1981 = vweird.f32 %v1974
    %vm1982 = vmor %vm1980, %vm1981
    %v1983 = vsel %vm1982, %v1974, %v1979
    %v1984 = vmul.f32 %v1950, %v1973
    %v1985 = vmul.f32 %v1951, %v1983
    %v1986 = vmul.f32 %v1984, %v1434
    %v1987 = vmul.f32 %v1985, %v1434
    %v1988 = vadd.f32 %v1986, %v1439
    %v1989 = vadd.f32 %v1987, %v1439
    %v1991 = vperm.slane %v742, 0
    %v1994 = vsel %vm860, %v1988, 0
    %v1997 = vsel %vm860, %v1989, 0
    %1999 = vmatpush.msra.mxu0 0.0
    %2000 = vmatpush.msra.mxu0 0.0
    %2001 = vmatpush.msra.mxu0 0.0
    %2002 = vmatpush.msra.mxu0 0.0
    %2003 = vmatpush.msra.mxu0 0.0
    %2004 = vmatpush.msra.mxu0 0.0
    %2005 = vmatpush.msra.mxu0 0.0
    %2006 = vmatpush.msra.mxu0 0.0
    %2007 = vmatpush.msra.mxu0 0.0
    %2008 = vmatpush.msra.mxu0 0.0
    %2009 = vmatpush.msra.mxu0 0.0
    %2010 = vmatpush.msra.mxu0 0.0
    %2011 = vmatpush.msra.mxu0 %v748
    %2012 = vmatpush.msra.mxu0 %v747
    %2013 = vmatpush.msra.mxu0 %v746
    %2014 = vmatpush.msra.mxu0 %v745
    %2015 = vmatmul.f32.gmra.mxu0 %v1994
    %v2016 = vpop.f32.mrf.mxu0
    %v2017 = vadd.f32 %v1991, %v2016
    %2018 = vmatmul.f32.gmra.mxu0 %v1997
    %v2019 = vpop.f32.mrf.mxu0
    %v2020 = vadd.f32 %v1991, %v2019
    %2021 = vdwg.mxu0
    %vm2022 = vcmp.gt.f32.partialorder %v2017, 0.0
    %vm2023 = vcmp.gt.f32.partialorder %v2020, 0.0
    %v2024 = vadd.f32 %v2017, 1.0
    %v2025 = vadd.f32 %v2020, 1.0
    %v2026 = vmul.f32 %v2017, 1.442695
    %v2027 = vpow.pop %v2026
    %v2028 = vmul.f32 %v2020, 1.442695
    %v2029 = vpow.pop %v2028
    %v2030 = vsel %vm2022, %v2024, %v2027
    %v2031 = vsel %vm2023, %v2025, %v2029
    %v2032 = vlaneseq
    %v2033 = vshrl.u32 %v2032, 7
    %v2034 = vlaneseq
    %v2035 = vand.u32 %v2034, 127
    %vm2036 = vcmp.le.s32.totalorder %v2035, %v2033
    %v2037 = vsel %vm2036, 1, 0
    %v2038 = vcvt.s32.f32 %v2037
    %v2039 = vld [vmem:[#allocation5] sm:$0xff]
    %v2040 = vld [vmem:[#allocation5 + $0x8] sm:$0xff]
    %v2042 = vperm.slane %v818, 0
    %v2045 = vsel %vm825, %v2039, 0
    %v2048 = vsel %vm825, %v2040, 0
    %2050 = vmatpush.msra.mxu0 0.0
    %2051 = vmatpush.msra.mxu0 0.0
    %2052 = vmatpush.msra.mxu0 0.0
    %2053 = vmatpush.msra.mxu0 0.0
    %2054 = vmatpush.msra.mxu0 0.0
    %2055 = vmatpush.msra.mxu0 0.0
    %2056 = vmatpush.msra.mxu0 0.0
    %2057 = vmatpush.msra.mxu0 0.0
    %2058 = vmatpush.msra.mxu0 0.0
    %2059 = vmatpush.msra.mxu0 0.0
    %2060 = vmatpush.msra.mxu0 0.0
    %2061 = vmatpush.msra.mxu0 0.0
    %2062 = vmatpush.msra.mxu0 0.0
    %2063 = vmatpush.msra.mxu0 0.0
    %2064 = vmatpush.msra.mxu0 0.0
    %2065 = vmatpush.msra.mxu0 %v819
    %2066 = vmatmul.f32.gmra.mxu0 %v2045
    %v2067 = vpop.f32.mrf.mxu0
    %v2068 = vadd.f32 %v2042, %v2067
    %2069 = vmatmul.f32.gmra.mxu0 %v2048
    %v2070 = vpop.f32.mrf.mxu0
    %v2071 = vadd.f32 %v2042, %v2070
    %2072 = vdwg.mxu0
    %v2073 = vadd.f32 %v2068, %v815
    %v2074 = vadd.f32 %v2071, %v815
    %v2076 = vperm.slane %v774, 0
    %v2079 = vsel %vm860, %v2073, 0
    %v2082 = vsel %vm860, %v2074, 0
    %2084 = vmatpush.msra.mxu0 0.0
    %2085 = vmatpush.msra.mxu0 0.0
    %2086 = vmatpush.msra.mxu0 0.0
    %2087 = vmatpush.msra.mxu0 0.0
    %2088 = vmatpush.msra.mxu0 0.0
    %2089 = vmatpush.msra.mxu0 0.0
    %2090 = vmatpush.msra.mxu0 0.0
    %2091 = vmatpush.msra.mxu0 0.0
    %2092 = vmatpush.msra.mxu0 0.0
    %2093 = vmatpush.msra.mxu0 0.0
    %2094 = vmatpush.msra.mxu0 0.0
    %2095 = vmatpush.msra.mxu0 0.0
    %2096 = vmatpush.msra.mxu0 %v782
    %2097 = vmatpush.msra.mxu0 %v781
    %2098 = vmatpush.msra.mxu0 %v780
    %2099 = vmatpush.msra.mxu0 %v779
    %2100 = vmatmul.f32.gmra.mxu0 %v2079
    %v2101 = vpop.f32.mrf.mxu0
    %v2102 = vadd.f32 %v2076, %v2101
    %2103 = vmatmul.f32.gmra.mxu0 %v2082
    %v2104 = vpop.f32.mrf.mxu0
    %v2105 = vadd.f32 %v2076, %v2104
    %2106 = vdwg.mxu0
    %vm2107 = vcmp.gt.f32.partialorder %v2102, 0.0
    %vm2108 = vcmp.gt.f32.partialorder %v2105, 0.0
    %v2109 = vadd.f32 %v2102, 1.0
    %v2110 = vadd.f32 %v2105, 1.0
    %v2111 = vmul.f32 %v2102, 1.442695
    %v2112 = vpow.pop %v2111
    %v2113 = vmul.f32 %v2105, 1.442695
    %v2114 = vpow.pop %v2113
    %v2115 = vsel %vm2107, %v2109, %v2112
    %v2116 = vsel %vm2108, %v2110, %v2114
    %2118 = vrot.lane.b32.xlu0 %v2115, 96
    %v2119 = vpop.permute.xlu0 %2118
    %v2120 = vsel %vm903, %v2115, 0
    %v2122 = vsel %vm903, %v2119, 0
    %2124 = vmatpush.xpose.msra.mxu0 0.0
    %2125 = vmatpush.xpose.msra.mxu0 0.0
    %2126 = vmatpush.xpose.msra.mxu0 0.0
    %2127 = vmatpush.xpose.msra.mxu0 0.0
    %2128 = vmatpush.xpose.msra.mxu0 0.0
    %2129 = vmatpush.xpose.msra.mxu0 0.0
    %2130 = vmatpush.xpose.msra.mxu0 0.0
    %2131 = vmatpush.xpose.msra.mxu0 0.0
    %2132 = vmatpush.xpose.msra.mxu0 0.0
    %2133 = vmatpush.xpose.msra.mxu0 0.0
    %2134 = vmatpush.xpose.msra.mxu0 0.0
    %2135 = vmatpush.xpose.msra.mxu0 0.0
    %2136 = vmatpush.xpose.msra.mxu0 0.0
    %2137 = vmatpush.xpose.msra.mxu0 0.0
    %2138 = vmatpush.xpose.msra.mxu0 0.0
    %2139 = vmatpush.xpose.msra.mxu0 %v2122
    %2140 = vmatmul.f32.gmra.mxu0 %v2120
    %v2141 = vpop.f32.mrf.mxu0
    %v2142 = vadd.f32 0.0, %v2141
    %2143 = vdwg.mxu0
    %2145 = vrot.lane.b32.xlu0 %v2116, 96
    %v2146 = vpop.permute.xlu0 %2145
    %v2147 = vsel %vm903, %v2116, 0
    %v2149 = vsel %vm903, %v2146, 0
    %2151 = vmatpush.xpose.msra.mxu0 0.0
    %2152 = vmatpush.xpose.msra.mxu0 0.0
    %2153 = vmatpush.xpose.msra.mxu0 0.0
    %2154 = vmatpush.xpose.msra.mxu0 0.0
    %2155 = vmatpush.xpose.msra.mxu0 0.0
    %2156 = vmatpush.xpose.msra.mxu0 0.0
    %2157 = vmatpush.xpose.msra.mxu0 0.0
    %2158 = vmatpush.xpose.msra.mxu0 0.0
    %2159 = vmatpush.xpose.msra.mxu0 0.0
    %2160 = vmatpush.xpose.msra.mxu0 0.0
    %2161 = vmatpush.xpose.msra.mxu0 0.0
    %2162 = vmatpush.xpose.msra.mxu0 0.0
    %2163 = vmatpush.xpose.msra.mxu0 0.0
    %2164 = vmatpush.xpose.msra.mxu0 0.0
    %2165 = vmatpush.xpose.msra.mxu0 0.0
    %2166 = vmatpush.xpose.msra.mxu0 %v2149
    %2167 = vmatmul.f32.gmra.mxu0 %v2147
    %v2168 = vpop.f32.mrf.mxu0
    %v2169 = vadd.f32 0.0, %v2168
    %2170 = vdwg.mxu0
    %v2171 = vmul.f32 %v2142, %v2038
    %v2172 = vmul.f32 %v2169, %v2038
    %v2173 = vsel %vm825, %v2171, 0.0
    %2174 = vadd.xlane.f32.xlu0 %v2173
    %v2175 = vpop.xlane.xlu0 %2174
    %v2176 = vsel %vm825, %v2172, 0.0
    %2177 = vadd.xlane.f32.xlu0 %v2176
    %v2178 = vpop.xlane.xlu0 %2177
    %v2179 = vadd.f32 %v2175, 1e-06
    %v2180 = vadd.f32 %v2178, 1e-06
    %v2181 = vrcp.pop %v2179
    %v2182 = vrcp.pop %v2180
    %v2183 = vmul.f32 %v2171, %v2181
    %v2184 = vmul.f32 %v2172, %v2182
    %2186 = vrot.lane.b32.xlu0 %v2102, 64
    %v2187 = vpop.permute.xlu0 %2186
    %v2190 = vsel %vm825, %v2183, 0
    %2192 = vmatpush.msra.mxu0 0.0
    %2193 = vmatpush.msra.mxu0 0.0
    %2194 = vmatpush.msra.mxu0 0.0
    %2195 = vmatpush.msra.mxu0 0.0
    %2196 = vmatpush.msra.mxu0 0.0
    %2197 = vmatpush.msra.mxu0 0.0
    %2198 = vmatpush.msra.mxu0 0.0
    %2199 = vmatpush.msra.mxu0 0.0
    %2200 = vmatpush.msra.mxu0 0.0
    %2201 = vmatpush.msra.mxu0 0.0
    %2202 = vmatpush.msra.mxu0 0.0
    %2203 = vmatpush.msra.mxu0 0.0
    %2204 = vmatpush.msra.mxu0 0.0
    %2205 = vmatpush.msra.mxu0 0.0
    %2206 = vmatpush.msra.mxu0 0.0
    %2207 = vmatpush.msra.mxu0 %v2187
    %2208 = vmatmul.f32.gmra.mxu0 %v2190
    %v2209 = vpop.f32.mrf.mxu0
    %v2210 = vadd.f32 0.0, %v2209
    %2211 = vdwg.mxu0
    %2213 = vrot.lane.b32.xlu0 %v2105, 64
    %v2214 = vpop.permute.xlu0 %2213
    %v2217 = vsel %vm825, %v2184, 0
    %2219 = vmatpush.msra.mxu0 0.0
    %2220 = vmatpush.msra.mxu0 0.0
    %2221 = vmatpush.msra.mxu0 0.0
    %2222 = vmatpush.msra.mxu0 0.0
    %2223 = vmatpush.msra.mxu0 0.0
    %2224 = vmatpush.msra.mxu0 0.0
    %2225 = vmatpush.msra.mxu0 0.0
    %2226 = vmatpush.msra.mxu0 0.0
    %2227 = vmatpush.msra.mxu0 0.0
    %2228 = vmatpush.msra.mxu0 0.0
    %2229 = vmatpush.msra.mxu0 0.0
    %2230 = vmatpush.msra.mxu0 0.0
    %2231 = vmatpush.msra.mxu0 0.0
    %2232 = vmatpush.msra.mxu0 0.0
    %2233 = vmatpush.msra.mxu0 0.0
    %2234 = vmatpush.msra.mxu0 %v2214
    %2235 = vmatmul.f32.gmra.mxu0 %v2217
    %v2236 = vpop.f32.mrf.mxu0
    %v2237 = vadd.f32 0.0, %v2236
    %2238 = vdwg.mxu0
    %2239 = vrot.lane.b32.xlu0 %v2115, 112
    %v2240 = vpop.permute.xlu0 %2239
    %2241 = vrot.lane.b32.xlu0 %v2115, 80
    %v2242 = vpop.permute.xlu0 %2241
    %v2243 = vsel %vm903, %v2240, 0
    %v2245 = vsel %vm903, %v2242, 0
    %2247 = vmatpush.xpose.msra.mxu0 0.0
    %2248 = vmatpush.xpose.msra.mxu0 0.0
    %2249 = vmatpush.xpose.msra.mxu0 0.0
    %2250 = vmatpush.xpose.msra.mxu0 0.0
    %2251 = vmatpush.xpose.msra.mxu0 0.0
    %2252 = vmatpush.xpose.msra.mxu0 0.0
    %2253 = vmatpush.xpose.msra.mxu0 0.0
    %2254 = vmatpush.xpose.msra.mxu0 0.0
    %2255 = vmatpush.xpose.msra.mxu0 0.0
    %2256 = vmatpush.xpose.msra.mxu0 0.0
    %2257 = vmatpush.xpose.msra.mxu0 0.0
    %2258 = vmatpush.xpose.msra.mxu0 0.0
    %2259 = vmatpush.xpose.msra.mxu0 0.0
    %2260 = vmatpush.xpose.msra.mxu0 0.0
    %2261 = vmatpush.xpose.msra.mxu0 0.0
    %2262 = vmatpush.xpose.msra.mxu0 %v2245
    %2263 = vmatmul.f32.gmra.mxu0 %v2243
    %v2264 = vpop.f32.mrf.mxu0
    %v2265 = vadd.f32 0.0, %v2264
    %2266 = vdwg.mxu0
    %2267 = vrot.lane.b32.xlu0 %v2116, 112
    %v2268 = vpop.permute.xlu0 %2267
    %2269 = vrot.lane.b32.xlu0 %v2116, 80
    %v2270 = vpop.permute.xlu0 %2269
    %v2271 = vsel %vm903, %v2268, 0
    %v2273 = vsel %vm903, %v2270, 0
    %2275 = vmatpush.xpose.msra.mxu0 0.0
    %2276 = vmatpush.xpose.msra.mxu0 0.0
    %2277 = vmatpush.xpose.msra.mxu0 0.0
    %2278 = vmatpush.xpose.msra.mxu0 0.0
    %2279 = vmatpush.xpose.msra.mxu0 0.0
    %2280 = vmatpush.xpose.msra.mxu0 0.0
    %2281 = vmatpush.xpose.msra.mxu0 0.0
    %2282 = vmatpush.xpose.msra.mxu0 0.0
    %2283 = vmatpush.xpose.msra.mxu0 0.0
    %2284 = vmatpush.xpose.msra.mxu0 0.0
    %2285 = vmatpush.xpose.msra.mxu0 0.0
    %2286 = vmatpush.xpose.msra.mxu0 0.0
    %2287 = vmatpush.xpose.msra.mxu0 0.0
    %2288 = vmatpush.xpose.msra.mxu0 0.0
    %2289 = vmatpush.xpose.msra.mxu0 0.0
    %2290 = vmatpush.xpose.msra.mxu0 %v2273
    %2291 = vmatmul.f32.gmra.mxu0 %v2271
    %v2292 = vpop.f32.mrf.mxu0
    %v2293 = vadd.f32 0.0, %v2292
    %2294 = vdwg.mxu0
    %v2295 = vmul.f32 %v2265, %v2038
    %v2296 = vmul.f32 %v2293, %v2038
    %v2297 = vsel %vm825, %v2295, 0.0
    %2298 = vadd.xlane.f32.xlu0 %v2297
    %v2299 = vpop.xlane.xlu0 %2298
    %v2300 = vsel %vm825, %v2296, 0.0
    %2301 = vadd.xlane.f32.xlu0 %v2300
    %v2302 = vpop.xlane.xlu0 %2301
    %v2303 = vadd.f32 %v2299, 1e-06
    %v2304 = vadd.f32 %v2302, 1e-06
    %v2305 = vrcp.pop %v2303
    %v2306 = vrcp.pop %v2304
    %v2307 = vmul.f32 %v2295, %v2305
    %v2308 = vmul.f32 %v2296, %v2306
    %2309 = vrot.lane.b32.xlu0 %v2102, 48
    %v2310 = vpop.permute.xlu0 %2309
    %v2313 = vsel %vm825, %v2307, 0
    %2315 = vmatpush.msra.mxu0 0.0
    %2316 = vmatpush.msra.mxu0 0.0
    %2317 = vmatpush.msra.mxu0 0.0
    %2318 = vmatpush.msra.mxu0 0.0
    %2319 = vmatpush.msra.mxu0 0.0
    %2320 = vmatpush.msra.mxu0 0.0
    %2321 = vmatpush.msra.mxu0 0.0
    %2322 = vmatpush.msra.mxu0 0.0
    %2323 = vmatpush.msra.mxu0 0.0
    %2324 = vmatpush.msra.mxu0 0.0
    %2325 = vmatpush.msra.mxu0 0.0
    %2326 = vmatpush.msra.mxu0 0.0
    %2327 = vmatpush.msra.mxu0 0.0
    %2328 = vmatpush.msra.mxu0 0.0
    %2329 = vmatpush.msra.mxu0 0.0
    %2330 = vmatpush.msra.mxu0 %v2310
    %2331 = vmatmul.f32.gmra.mxu0 %v2313
    %v2332 = vpop.f32.mrf.mxu0
    %v2333 = vadd.f32 0.0, %v2332
    %2334 = vdwg.mxu0
    %2335 = vrot.lane.b32.xlu0 %v2105, 48
    %v2336 = vpop.permute.xlu0 %2335
    %v2339 = vsel %vm825, %v2308, 0
    %2341 = vmatpush.msra.mxu0 0.0
    %2342 = vmatpush.msra.mxu0 0.0
    %2343 = vmatpush.msra.mxu0 0.0
    %2344 = vmatpush.msra.mxu0 0.0
    %2345 = vmatpush.msra.mxu0 0.0
    %2346 = vmatpush.msra.mxu0 0.0
    %2347 = vmatpush.msra.mxu0 0.0
    %2348 = vmatpush.msra.mxu0 0.0
    %2349 = vmatpush.msra.mxu0 0.0
    %2350 = vmatpush.msra.mxu0 0.0
    %2351 = vmatpush.msra.mxu0 0.0
    %2352 = vmatpush.msra.mxu0 0.0
    %2353 = vmatpush.msra.mxu0 0.0
    %2354 = vmatpush.msra.mxu0 0.0
    %2355 = vmatpush.msra.mxu0 0.0
    %2356 = vmatpush.msra.mxu0 %v2336
    %2357 = vmatmul.f32.gmra.mxu0 %v2339
    %v2358 = vpop.f32.mrf.mxu0
    %v2359 = vadd.f32 0.0, %v2358
    %2360 = vdwg.mxu0
    %v2362 = vsel %vm903, %v2333, 0
    %v2365 = vsel %vm903, %v2359, 0
    %2367 = vmatpush.msra.mxu0 0.0
    %2368 = vmatpush.msra.mxu0 0.0
    %2369 = vmatpush.msra.mxu0 0.0
    %2370 = vmatpush.msra.mxu0 0.0
    %2371 = vmatpush.msra.mxu0 0.0
    %2372 = vmatpush.msra.mxu0 0.0
    %2373 = vmatpush.msra.mxu0 0.0
    %2374 = vmatpush.msra.mxu0 0.0
    %2375 = vmatpush.msra.mxu0 0.0
    %2376 = vmatpush.msra.mxu0 0.0
    %2377 = vmatpush.msra.mxu0 0.0
    %2378 = vmatpush.msra.mxu0 0.0
    %2379 = vmatpush.msra.mxu0 0.0
    %2380 = vmatpush.msra.mxu0 0.0
    %2381 = vmatpush.msra.mxu0 %v778
    %2382 = vmatpush.msra.mxu0 %v777
    %2383 = vmatmul.f32.gmra.mxu0 %v2362
    %v2384 = vpop.f32.mrf.mxu0
    %v2385 = vadd.f32 0.0, %v2384
    %2386 = vmatmul.f32.gmra.mxu0 %v2365
    %v2387 = vpop.f32.mrf.mxu0
    %v2388 = vadd.f32 0.0, %v2387
    %2389 = vdwg.mxu0
    %v2391 = vsel %vm903, %v2210, 0
    %v2394 = vsel %vm903, %v2237, 0
    %2396 = vmatpush.msra.mxu0 0.0
    %2397 = vmatpush.msra.mxu0 0.0
    %2398 = vmatpush.msra.mxu0 0.0
    %2399 = vmatpush.msra.mxu0 0.0
    %2400 = vmatpush.msra.mxu0 0.0
    %2401 = vmatpush.msra.mxu0 0.0
    %2402 = vmatpush.msra.mxu0 0.0
    %2403 = vmatpush.msra.mxu0 0.0
    %2404 = vmatpush.msra.mxu0 0.0
    %2405 = vmatpush.msra.mxu0 0.0
    %2406 = vmatpush.msra.mxu0 0.0
    %2407 = vmatpush.msra.mxu0 0.0
    %2408 = vmatpush.msra.mxu0 0.0
    %2409 = vmatpush.msra.mxu0 0.0
    %2410 = vmatpush.msra.mxu0 %v776
    %2411 = vmatpush.msra.mxu0 %v775
    %2412 = vmatmul.f32.gmra.mxu0 %v2391
    %v2413 = vpop.f32.mrf.mxu0
    %v2414 = vadd.f32 %v2385, %v2413
    %2415 = vmatmul.f32.gmra.mxu0 %v2394
    %v2416 = vpop.f32.mrf.mxu0
    %v2417 = vadd.f32 %v2388, %v2416
    %2418 = vdwg.mxu0
    %v2419 = vadd.f32 %v2073, %v2414
    %v2420 = vadd.f32 %v2074, %v2417
    %v2422 = vperm.slane %v773, 0
    %v2424 = vadd.f32 %v2419, %v2422
    %v2425 = vadd.f32 %v2420, %v2422
    %v2426 = vsel %vm860, %v2424, 0.0
    %2427 = vadd.xlane.f32.xlu0 %v2426
    %v2428 = vpop.xlane.xlu0 %2427
    %v2429 = vsel %vm860, %v2425, 0.0
    %2430 = vadd.xlane.f32.xlu0 %v2429
    %v2431 = vpop.xlane.xlu0 %2430
    %v2432 = vmul.f32 %v2428, %v1218
    %v2433 = vmul.f32 %v2431, %v1218
    %v2434 = vsub.f32 %v2424, %v2432
    %v2435 = vsub.f32 %v2425, %v2433
    %v2436 = vmul.f32 %v2434, %v2434
    %v2437 = vmul.f32 %v2435, %v2435
    %v2438 = vsel %vm860, %v2436, 0.0
    %2439 = vadd.xlane.f32.xlu0 %v2438
    %v2440 = vpop.xlane.xlu0 %2439
    %v2441 = vsel %vm860, %v2437, 0.0
    %2442 = vadd.xlane.f32.xlu0 %v2441
    %v2443 = vpop.xlane.xlu0 %2442
    %v2444 = vmul.f32 %v2440, %v1218
    %v2445 = vmul.f32 %v2443, %v1218
    %v2446 = vadd.f32 %v2444, 1e-05
    %v2447 = vadd.f32 %v2445, 1e-05
    %v2448 = vrsqrt.pop %v2446
    %v2449 = vmul.f32 %v2448, %v2446
    %v2450 = vmul.f32 %v2449, %v2448
    %v2451 = vmul.f32 0.5, %v2450
    %v2452 = vsub.f32 1.5, %v2451
    %v2453 = vmul.f32 %v2448, %v2452
    %vm2454 = vweird.f32 %v2446
    %vm2455 = vweird.f32 %v2448
    %vm2456 = vmor %vm2454, %vm2455
    %v2457 = vsel %vm2456, %v2448, %v2453
    %v2458 = vrsqrt.pop %v2447
    %v2459 = vmul.f32 %v2458, %v2447
    %v2460 = vmul.f32 %v2459, %v2458
    %v2461 = vmul.f32 0.5, %v2460
    %v2462 = vsub.f32 1.5, %v2461
    %v2463 = vmul.f32 %v2458, %v2462
    %vm2464 = vweird.f32 %v2447
    %vm2465 = vweird.f32 %v2458
    %vm2466 = vmor %vm2464, %vm2465
    %v2467 = vsel %vm2466, %v2458, %v2463
    %v2468 = vmul.f32 %v2434, %v2457
    %v2469 = vmul.f32 %v2435, %v2467
    %v2471 = vperm.slane %v768, 0
    %v2473 = vmul.f32 %v2468, %v2471
    %v2474 = vmul.f32 %v2469, %v2471
    %v2476 = vperm.slane %v767, 0
    %v2478 = vadd.f32 %v2473, %v2476
    %v2479 = vadd.f32 %v2474, %v2476
    %v2481 = vperm.slane %v744, 0
    %v2484 = vsel %vm860, %v2478, 0
    %v2487 = vsel %vm860, %v2479, 0
    %2489 = vmatpush.msra.mxu0 0.0
    %2490 = vmatpush.msra.mxu0 0.0
    %2491 = vmatpush.msra.mxu0 0.0
    %2492 = vmatpush.msra.mxu0 0.0
    %2493 = vmatpush.msra.mxu0 0.0
    %2494 = vmatpush.msra.mxu0 0.0
    %2495 = vmatpush.msra.mxu0 0.0
    %2496 = vmatpush.msra.mxu0 0.0
    %2497 = vmatpush.msra.mxu0 0.0
    %2498 = vmatpush.msra.mxu0 0.0
    %2499 = vmatpush.msra.mxu0 0.0
    %2500 = vmatpush.msra.mxu0 0.0
    %2501 = vmatpush.msra.mxu0 %v756
    %2502 = vmatpush.msra.mxu0 %v755
    %2503 = vmatpush.msra.mxu0 %v754
    %2504 = vmatpush.msra.mxu0 %v753
    %2505 = vmatmul.f32.gmra.mxu0 %v2484
    %v2506 = vpop.f32.mrf.mxu0
    %v2507 = vadd.f32 %v2481, %v2506
    %2508 = vmatmul.f32.gmra.mxu0 %v2487
    %v2509 = vpop.f32.mrf.mxu0
    %v2510 = vadd.f32 %v2481, %v2509
    %2511 = vdwg.mxu0
    %vm2512 = vcmp.gt.f32.partialorder %v2507, 0.0
    %vm2513 = vcmp.gt.f32.partialorder %v2510, 0.0
    %v2514 = vadd.f32 %v2507, 1.0
    %v2515 = vadd.f32 %v2510, 1.0
    %v2516 = vmul.f32 %v2507, 1.442695
    %v2517 = vpow.pop %v2516
    %v2518 = vmul.f32 %v2510, 1.442695
    %v2519 = vpow.pop %v2518
    %v2520 = vsel %vm2512, %v2514, %v2517
    %v2521 = vsel %vm2513, %v2515, %v2519
    %v2523 = vsel %vm903, %v2520, 0
    %v2526 = vsel %vm903, %v2030, 0
    %2528 = vmatpush.xpose.msra.mxu0 0.0
    %2529 = vmatpush.xpose.msra.mxu0 0.0
    %2530 = vmatpush.xpose.msra.mxu0 0.0
    %2531 = vmatpush.xpose.msra.mxu0 0.0
    %2532 = vmatpush.xpose.msra.mxu0 0.0
    %2533 = vmatpush.xpose.msra.mxu0 0.0
    %2534 = vmatpush.xpose.msra.mxu0 0.0
    %2535 = vmatpush.xpose.msra.mxu0 0.0
    %2536 = vmatpush.xpose.msra.mxu0 0.0
    %2537 = vmatpush.xpose.msra.mxu0 0.0
    %2538 = vmatpush.xpose.msra.mxu0 0.0
    %2539 = vmatpush.xpose.msra.mxu0 0.0
    %2540 = vmatpush.xpose.msra.mxu0 0.0
    %2541 = vmatpush.xpose.msra.mxu0 0.0
    %2542 = vmatpush.xpose.msra.mxu0 0.0
    %2543 = vmatpush.xpose.msra.mxu0 %v2526
    %2544 = vmatmul.f32.gmra.mxu0 %v2523
    %v2545 = vpop.f32.mrf.mxu0
    %v2546 = vadd.f32 0.0, %v2545
    %2547 = vdwg.mxu0
    %v2549 = vsel %vm903, %v2521, 0
    %v2552 = vsel %vm903, %v2031, 0
    %2554 = vmatpush.xpose.msra.mxu0 0.0
    %2555 = vmatpush.xpose.msra.mxu0 0.0
    %2556 = vmatpush.xpose.msra.mxu0 0.0
    %2557 = vmatpush.xpose.msra.mxu0 0.0
    %2558 = vmatpush.xpose.msra.mxu0 0.0
    %2559 = vmatpush.xpose.msra.mxu0 0.0
    %2560 = vmatpush.xpose.msra.mxu0 0.0
    %2561 = vmatpush.xpose.msra.mxu0 0.0
    %2562 = vmatpush.xpose.msra.mxu0 0.0
    %2563 = vmatpush.xpose.msra.mxu0 0.0
    %2564 = vmatpush.xpose.msra.mxu0 0.0
    %2565 = vmatpush.xpose.msra.mxu0 0.0
    %2566 = vmatpush.xpose.msra.mxu0 0.0
    %2567 = vmatpush.xpose.msra.mxu0 0.0
    %2568 = vmatpush.xpose.msra.mxu0 0.0
    %2569 = vmatpush.xpose.msra.mxu0 %v2552
    %2570 = vmatmul.f32.gmra.mxu0 %v2549
    %v2571 = vpop.f32.mrf.mxu0
    %v2572 = vadd.f32 0.0, %v2571
    %2573 = vdwg.mxu0
    %v2574 = vsel %vm825, %v2546, 0.0
    %2575 = vadd.xlane.f32.xlu0 %v2574
    %v2576 = vpop.xlane.xlu0 %2575
    %v2577 = vsel %vm825, %v2572, 0.0
    %2578 = vadd.xlane.f32.xlu0 %v2577
    %v2579 = vpop.xlane.xlu0 %2578
    %v2580 = vadd.f32 %v2576, 1e-06
    %v2581 = vadd.f32 %v2579, 1e-06
    %v2582 = vrcp.pop %v2580
    %v2583 = vrcp.pop %v2581
    %v2584 = vmul.f32 %v2546, %v2582
    %v2585 = vmul.f32 %v2572, %v2583
    %2587 = vrot.lane.b32.xlu0 %v2017, 96
    %v2588 = vpop.permute.xlu0 %2587
    %v2591 = vsel %vm825, %v2584, 0
    %2593 = vmatpush.msra.mxu0 0.0
    %2594 = vmatpush.msra.mxu0 0.0
    %2595 = vmatpush.msra.mxu0 0.0
    %2596 = vmatpush.msra.mxu0 0.0
    %2597 = vmatpush.msra.mxu0 0.0
    %2598 = vmatpush.msra.mxu0 0.0
    %2599 = vmatpush.msra.mxu0 0.0
    %2600 = vmatpush.msra.mxu0 0.0
    %2601 = vmatpush.msra.mxu0 0.0
    %2602 = vmatpush.msra.mxu0 0.0
    %2603 = vmatpush.msra.mxu0 0.0
    %2604 = vmatpush.msra.mxu0 0.0
    %2605 = vmatpush.msra.mxu0 0.0
    %2606 = vmatpush.msra.mxu0 0.0
    %2607 = vmatpush.msra.mxu0 0.0
    %2608 = vmatpush.msra.mxu0 %v2588
    %2609 = vmatmul.f32.gmra.mxu0 %v2591
    %v2610 = vpop.f32.mrf.mxu0
    %v2611 = vadd.f32 0.0, %v2610
    %2612 = vdwg.mxu0
    %2614 = vrot.lane.b32.xlu0 %v2020, 96
    %v2615 = vpop.permute.xlu0 %2614
    %v2618 = vsel %vm825, %v2585, 0
    %2620 = vmatpush.msra.mxu0 0.0
    %2621 = vmatpush.msra.mxu0 0.0
    %2622 = vmatpush.msra.mxu0 0.0
    %2623 = vmatpush.msra.mxu0 0.0
    %2624 = vmatpush.msra.mxu0 0.0
    %2625 = vmatpush.msra.mxu0 0.0
    %2626 = vmatpush.msra.mxu0 0.0
    %2627 = vmatpush.msra.mxu0 0.0
    %2628 = vmatpush.msra.mxu0 0.0
    %2629 = vmatpush.msra.mxu0 0.0
    %2630 = vmatpush.msra.mxu0 0.0
    %2631 = vmatpush.msra.mxu0 0.0
    %2632 = vmatpush.msra.mxu0 0.0
    %2633 = vmatpush.msra.mxu0 0.0
    %2634 = vmatpush.msra.mxu0 0.0
    %2635 = vmatpush.msra.mxu0 %v2615
    %2636 = vmatmul.f32.gmra.mxu0 %v2618
    %v2637 = vpop.f32.mrf.mxu0
    %v2638 = vadd.f32 0.0, %v2637
    %2639 = vdwg.mxu0
    %2640 = vrot.lane.b32.xlu0 %v2520, 112
    %v2641 = vpop.permute.xlu0 %2640
    %2642 = vrot.lane.b32.xlu0 %v2030, 112
    %v2643 = vpop.permute.xlu0 %2642
    %v2644 = vsel %vm903, %v2641, 0
    %v2646 = vsel %vm903, %v2643, 0
    %2648 = vmatpush.xpose.msra.mxu0 0.0
    %2649 = vmatpush.xpose.msra.mxu0 0.0
    %2650 = vmatpush.xpose.msra.mxu0 0.0
    %2651 = vmatpush.xpose.msra.mxu0 0.0
    %2652 = vmatpush.xpose.msra.mxu0 0.0
    %2653 = vmatpush.xpose.msra.mxu0 0.0
    %2654 = vmatpush.xpose.msra.mxu0 0.0
    %2655 = vmatpush.xpose.msra.mxu0 0.0
    %2656 = vmatpush.xpose.msra.mxu0 0.0
    %2657 = vmatpush.xpose.msra.mxu0 0.0
    %2658 = vmatpush.xpose.msra.mxu0 0.0
    %2659 = vmatpush.xpose.msra.mxu0 0.0
    %2660 = vmatpush.xpose.msra.mxu0 0.0
    %2661 = vmatpush.xpose.msra.mxu0 0.0
    %2662 = vmatpush.xpose.msra.mxu0 0.0
    %2663 = vmatpush.xpose.msra.mxu0 %v2646
    %2664 = vmatmul.f32.gmra.mxu0 %v2644
    %v2665 = vpop.f32.mrf.mxu0
    %v2666 = vadd.f32 0.0, %v2665
    %2667 = vdwg.mxu0
    %2668 = vrot.lane.b32.xlu0 %v2521, 112
    %v2669 = vpop.permute.xlu0 %2668
    %2670 = vrot.lane.b32.xlu0 %v2031, 112
    %v2671 = vpop.permute.xlu0 %2670
    %v2672 = vsel %vm903, %v2669, 0
    %v2674 = vsel %vm903, %v2671, 0
    %2676 = vmatpush.xpose.msra.mxu0 0.0
    %2677 = vmatpush.xpose.msra.mxu0 0.0
    %2678 = vmatpush.xpose.msra.mxu0 0.0
    %2679 = vmatpush.xpose.msra.mxu0 0.0
    %2680 = vmatpush.xpose.msra.mxu0 0.0
    %2681 = vmatpush.xpose.msra.mxu0 0.0
    %2682 = vmatpush.xpose.msra.mxu0 0.0
    %2683 = vmatpush.xpose.msra.mxu0 0.0
    %2684 = vmatpush.xpose.msra.mxu0 0.0
    %2685 = vmatpush.xpose.msra.mxu0 0.0
    %2686 = vmatpush.xpose.msra.mxu0 0.0
    %2687 = vmatpush.xpose.msra.mxu0 0.0
    %2688 = vmatpush.xpose.msra.mxu0 0.0
    %2689 = vmatpush.xpose.msra.mxu0 0.0
    %2690 = vmatpush.xpose.msra.mxu0 0.0
    %2691 = vmatpush.xpose.msra.mxu0 %v2674
    %2692 = vmatmul.f32.gmra.mxu0 %v2672
    %v2693 = vpop.f32.mrf.mxu0
    %v2694 = vadd.f32 0.0, %v2693
    %2695 = vdwg.mxu0
    %v2696 = vsel %vm825, %v2666, 0.0
    %2697 = vadd.xlane.f32.xlu0 %v2696
    %v2698 = vpop.xlane.xlu0 %2697
    %v2699 = vsel %vm825, %v2694, 0.0
    %2700 = vadd.xlane.f32.xlu0 %v2699
    %v2701 = vpop.xlane.xlu0 %2700
    %v2702 = vadd.f32 %v2698, 1e-06
    %v2703 = vadd.f32 %v2701, 1e-06
    %v2704 = vrcp.pop %v2702
    %v2705 = vrcp.pop %v2703
    %v2706 = vmul.f32 %v2666, %v2704
    %v2707 = vmul.f32 %v2694, %v2705
    %2708 = vrot.lane.b32.xlu0 %v2017, 80
    %v2709 = vpop.permute.xlu0 %2708
    %v2712 = vsel %vm825, %v2706, 0
    %2714 = vmatpush.msra.mxu0 0.0
    %2715 = vmatpush.msra.mxu0 0.0
    %2716 = vmatpush.msra.mxu0 0.0
    %2717 = vmatpush.msra.mxu0 0.0
    %2718 = vmatpush.msra.mxu0 0.0
    %2719 = vmatpush.msra.mxu0 0.0
    %2720 = vmatpush.msra.mxu0 0.0
    %2721 = vmatpush.msra.mxu0 0.0
    %2722 = vmatpush.msra.mxu0 0.0
    %2723 = vmatpush.msra.mxu0 0.0
    %2724 = vmatpush.msra.mxu0 0.0
    %2725 = vmatpush.msra.mxu0 0.0
    %2726 = vmatpush.msra.mxu0 0.0
    %2727 = vmatpush.msra.mxu0 0.0
    %2728 = vmatpush.msra.mxu0 0.0
    %2729 = vmatpush.msra.mxu0 %v2709
    %2730 = vmatmul.f32.gmra.mxu0 %v2712
    %v2731 = vpop.f32.mrf.mxu0
    %v2732 = vadd.f32 0.0, %v2731
    %2733 = vdwg.mxu0
    %2734 = vrot.lane.b32.xlu0 %v2020, 80
    %v2735 = vpop.permute.xlu0 %2734
    %v2738 = vsel %vm825, %v2707, 0
    %2740 = vmatpush.msra.mxu0 0.0
    %2741 = vmatpush.msra.mxu0 0.0
    %2742 = vmatpush.msra.mxu0 0.0
    %2743 = vmatpush.msra.mxu0 0.0
    %2744 = vmatpush.msra.mxu0 0.0
    %2745 = vmatpush.msra.mxu0 0.0
    %2746 = vmatpush.msra.mxu0 0.0
    %2747 = vmatpush.msra.mxu0 0.0
    %2748 = vmatpush.msra.mxu0 0.0
    %2749 = vmatpush.msra.mxu0 0.0
    %2750 = vmatpush.msra.mxu0 0.0
    %2751 = vmatpush.msra.mxu0 0.0
    %2752 = vmatpush.msra.mxu0 0.0
    %2753 = vmatpush.msra.mxu0 0.0
    %2754 = vmatpush.msra.mxu0 0.0
    %2755 = vmatpush.msra.mxu0 %v2735
    %2756 = vmatmul.f32.gmra.mxu0 %v2738
    %v2757 = vpop.f32.mrf.mxu0
    %v2758 = vadd.f32 0.0, %v2757
    %2759 = vdwg.mxu0
    %v2761 = vsel %vm903, %v2732, 0
    %v2764 = vsel %vm903, %v2758, 0
    %2766 = vmatpush.msra.mxu0 0.0
    %2767 = vmatpush.msra.mxu0 0.0
    %2768 = vmatpush.msra.mxu0 0.0
    %2769 = vmatpush.msra.mxu0 0.0
    %2770 = vmatpush.msra.mxu0 0.0
    %2771 = vmatpush.msra.mxu0 0.0
    %2772 = vmatpush.msra.mxu0 0.0
    %2773 = vmatpush.msra.mxu0 0.0
    %2774 = vmatpush.msra.mxu0 0.0
    %2775 = vmatpush.msra.mxu0 0.0
    %2776 = vmatpush.msra.mxu0 0.0
    %2777 = vmatpush.msra.mxu0 0.0
    %2778 = vmatpush.msra.mxu0 0.0
    %2779 = vmatpush.msra.mxu0 0.0
    %2780 = vmatpush.msra.mxu0 %v752
    %2781 = vmatpush.msra.mxu0 %v751
    %2782 = vmatmul.f32.gmra.mxu0 %v2761
    %v2783 = vpop.f32.mrf.mxu0
    %v2784 = vadd.f32 0.0, %v2783
    %2785 = vmatmul.f32.gmra.mxu0 %v2764
    %v2786 = vpop.f32.mrf.mxu0
    %v2787 = vadd.f32 0.0, %v2786
    %2788 = vdwg.mxu0
    %v2790 = vsel %vm903, %v2611, 0
    %v2793 = vsel %vm903, %v2638, 0
    %2795 = vmatpush.msra.mxu0 0.0
    %2796 = vmatpush.msra.mxu0 0.0
    %2797 = vmatpush.msra.mxu0 0.0
    %2798 = vmatpush.msra.mxu0 0.0
    %2799 = vmatpush.msra.mxu0 0.0
    %2800 = vmatpush.msra.mxu0 0.0
    %2801 = vmatpush.msra.mxu0 0.0
    %2802 = vmatpush.msra.mxu0 0.0
    %2803 = vmatpush.msra.mxu0 0.0
    %2804 = vmatpush.msra.mxu0 0.0
    %2805 = vmatpush.msra.mxu0 0.0
    %2806 = vmatpush.msra.mxu0 0.0
    %2807 = vmatpush.msra.mxu0 0.0
    %2808 = vmatpush.msra.mxu0 0.0
    %2809 = vmatpush.msra.mxu0 %v750
    %2810 = vmatpush.msra.mxu0 %v749
    %2811 = vmatmul.f32.gmra.mxu0 %v2790
    %v2812 = vpop.f32.mrf.mxu0
    %v2813 = vadd.f32 %v2784, %v2812
    %2814 = vmatmul.f32.gmra.mxu0 %v2793
    %v2815 = vpop.f32.mrf.mxu0
    %v2816 = vadd.f32 %v2787, %v2815
    %2817 = vdwg.mxu0
    %v2818 = vadd.f32 %v2478, %v2813
    %v2819 = vadd.f32 %v2479, %v2816
    %v2821 = vperm.slane %v743, 0
    %v2823 = vadd.f32 %v2818, %v2821
    %v2824 = vadd.f32 %v2819, %v2821
    %v2825 = vsel %vm860, %v2823, 0.0
    %2826 = vadd.xlane.f32.xlu0 %v2825
    %v2827 = vpop.xlane.xlu0 %2826
    %v2828 = vsel %vm860, %v2824, 0.0
    %2829 = vadd.xlane.f32.xlu0 %v2828
    %v2830 = vpop.xlane.xlu0 %2829
    %v2831 = vmul.f32 %v2827, %v1218
    %v2832 = vmul.f32 %v2830, %v1218
    %v2833 = vsub.f32 %v2823, %v2831
    %v2834 = vsub.f32 %v2824, %v2832
    %v2835 = vmul.f32 %v2833, %v2833
    %v2836 = vmul.f32 %v2834, %v2834
    %v2837 = vsel %vm860, %v2835, 0.0
    %2838 = vadd.xlane.f32.xlu0 %v2837
    %v2839 = vpop.xlane.xlu0 %2838
    %v2840 = vsel %vm860, %v2836, 0.0
    %2841 = vadd.xlane.f32.xlu0 %v2840
    %v2842 = vpop.xlane.xlu0 %2841
    %v2843 = vmul.f32 %v2839, %v1218
    %v2844 = vmul.f32 %v2842, %v1218
    %v2845 = vadd.f32 %v2843, 1e-05
    %v2846 = vadd.f32 %v2844, 1e-05
    %v2847 = vrsqrt.pop %v2845
    %v2848 = vmul.f32 %v2847, %v2845
    %v2849 = vmul.f32 %v2848, %v2847
    %v2850 = vmul.f32 0.5, %v2849
    %v2851 = vsub.f32 1.5, %v2850
    %v2852 = vmul.f32 %v2847, %v2851
    %vm2853 = vweird.f32 %v2845
    %vm2854 = vweird.f32 %v2847
    %vm2855 = vmor %vm2853, %vm2854
    %v2856 = vsel %vm2855, %v2847, %v2852
    %v2857 = vrsqrt.pop %v2846
    %v2858 = vmul.f32 %v2857, %v2846
    %v2859 = vmul.f32 %v2858, %v2857
    %v2860 = vmul.f32 0.5, %v2859
    %v2861 = vsub.f32 1.5, %v2860
    %v2862 = vmul.f32 %v2857, %v2861
    %vm2863 = vweird.f32 %v2846
    %vm2864 = vweird.f32 %v2857
    %vm2865 = vmor %vm2863, %vm2864
    %v2866 = vsel %vm2865, %v2857, %v2862
    %v2867 = vmul.f32 %v2833, %v2856
    %v2868 = vmul.f32 %v2834, %v2866
    %v2870 = vperm.slane %v770, 0
    %v2872 = vmul.f32 %v2867, %v2870
    %v2873 = vmul.f32 %v2868, %v2870
    %v2875 = vperm.slane %v769, 0
    %v2877 = vadd.f32 %v2872, %v2875
    %v2878 = vadd.f32 %v2873, %v2875
    %v2880 = vperm.slane %v757, 0
    %v2883 = vsel %vm860, %v2877, 0
    %v2886 = vsel %vm860, %v2878, 0
    %2888 = vmatpush.msra.mxu0 0.0
    %2889 = vmatpush.msra.mxu0 0.0
    %2890 = vmatpush.msra.mxu0 0.0
    %2891 = vmatpush.msra.mxu0 0.0
    %2892 = vmatpush.msra.mxu0 0.0
    %2893 = vmatpush.msra.mxu0 0.0
    %2894 = vmatpush.msra.mxu0 0.0
    %2895 = vmatpush.msra.mxu0 0.0
    %2896 = vmatpush.msra.mxu0 0.0
    %2897 = vmatpush.msra.mxu0 0.0
    %2898 = vmatpush.msra.mxu0 0.0
    %2899 = vmatpush.msra.mxu0 0.0
    %2900 = vmatpush.msra.mxu0 %v761
    %2901 = vmatpush.msra.mxu0 %v760
    %2902 = vmatpush.msra.mxu0 %v759
    %2903 = vmatpush.msra.mxu0 %v758
    %2904 = vmatmul.f32.gmra.mxu0 %v2883
    %v2905 = vpop.f32.mrf.mxu0
    %v2906 = vadd.f32 %v2880, %v2905
    %2907 = vmatmul.f32.gmra.mxu0 %v2886
    %v2908 = vpop.f32.mrf.mxu0
    %v2909 = vadd.f32 %v2880, %v2908
    %2910 = vdwg.mxu0
    %v2911 = vmax.f32 %v2906, 0.0
    %v2912 = vmax.f32 %v2909, 0.0
    %v2914 = vperm.slane %v762, 0
    %v2917 = vsel %vm860, %v2911, 0
    %v2920 = vsel %vm860, %v2912, 0
    %2922 = vmatpush.msra.mxu0 0.0
    %2923 = vmatpush.msra.mxu0 0.0
    %2924 = vmatpush.msra.mxu0 0.0
    %2925 = vmatpush.msra.mxu0 0.0
    %2926 = vmatpush.msra.mxu0 0.0
    %2927 = vmatpush.msra.mxu0 0.0
    %2928 = vmatpush.msra.mxu0 0.0
    %2929 = vmatpush.msra.mxu0 0.0
    %2930 = vmatpush.msra.mxu0 0.0
    %2931 = vmatpush.msra.mxu0 0.0
    %2932 = vmatpush.msra.mxu0 0.0
    %2933 = vmatpush.msra.mxu0 0.0
    %2934 = vmatpush.msra.mxu0 %v766
    %2935 = vmatpush.msra.mxu0 %v765
    %2936 = vmatpush.msra.mxu0 %v764
    %2937 = vmatpush.msra.mxu0 %v763
    %2938 = vmatmul.f32.gmra.mxu0 %v2917
    %v2939 = vpop.f32.mrf.mxu0
    %v2940 = vadd.f32 %v2914, %v2939
    %2941 = vmatmul.f32.gmra.mxu0 %v2920
    %v2942 = vpop.f32.mrf.mxu0
    %v2943 = vadd.f32 %v2914, %v2942
    %2944 = vdwg.mxu0
    %v2945 = vadd.f32 %v2877, %v2940
    %v2946 = vadd.f32 %v2878, %v2943
    %v2947 = vsel %vm860, %v2945, 0.0
    %2948 = vadd.xlane.f32.xlu0 %v2947
    %v2949 = vpop.xlane.xlu0 %2948
    %v2950 = vsel %vm860, %v2946, 0.0
    %2951 = vadd.xlane.f32.xlu0 %v2950
    %v2952 = vpop.xlane.xlu0 %2951
    %v2953 = vmul.f32 %v2949, %v1218
    %v2954 = vmul.f32 %v2952, %v1218
    %v2955 = vsub.f32 %v2945, %v2953
    %v2956 = vsub.f32 %v2946, %v2954
    %v2957 = vmul.f32 %v2955, %v2955
    %v2958 = vmul.f32 %v2956, %v2956
    %v2959 = vsel %vm860, %v2957, 0.0
    %2960 = vadd.xlane.f32.xlu0 %v2959
    %v2961 = vpop.xlane.xlu0 %2960
    %v2962 = vsel %vm860, %v2958, 0.0
    %2963 = vadd.xlane.f32.xlu0 %v2962
    %v2964 = vpop.xlane.xlu0 %2963
    %v2965 = vmul.f32 %v2961, %v1218
    %v2966 = vmul.f32 %v2964, %v1218
    %v2967 = vadd.f32 %v2965, 1e-05
    %v2968 = vadd.f32 %v2966, 1e-05
    %v2969 = vrsqrt.pop %v2967
    %v2970 = vmul.f32 %v2969, %v2967
    %v2971 = vmul.f32 %v2970, %v2969
    %v2972 = vmul.f32 0.5, %v2971
    %v2973 = vsub.f32 1.5, %v2972
    %v2974 = vmul.f32 %v2969, %v2973
    %vm2975 = vweird.f32 %v2967
    %vm2976 = vweird.f32 %v2969
    %vm2977 = vmor %vm2975, %vm2976
    %v2978 = vsel %vm2977, %v2969, %v2974
    %v2979 = vrsqrt.pop %v2968
    %v2980 = vmul.f32 %v2979, %v2968
    %v2981 = vmul.f32 %v2980, %v2979
    %v2982 = vmul.f32 0.5, %v2981
    %v2983 = vsub.f32 1.5, %v2982
    %v2984 = vmul.f32 %v2979, %v2983
    %vm2985 = vweird.f32 %v2968
    %vm2986 = vweird.f32 %v2979
    %vm2987 = vmor %vm2985, %vm2986
    %v2988 = vsel %vm2987, %v2979, %v2984
    %v2989 = vmul.f32 %v2955, %v2978
    %v2990 = vmul.f32 %v2956, %v2988
    %v2992 = vperm.slane %v772, 0
    %v2994 = vmul.f32 %v2989, %v2992
    %v2995 = vmul.f32 %v2990, %v2992
    %v2997 = vperm.slane %v771, 0
    %v2999 = vadd.f32 %v2994, %v2997
    %v3000 = vadd.f32 %v2995, %v2997
    %v3001 = vsel %vm860, %v2999, 0.0
    %3002 = vadd.xlane.f32.xlu0 %v3001
    %v3003 = vpop.xlane.xlu0 %3002
    %v3004 = vsel %vm860, %v3000, 0.0
    %3005 = vadd.xlane.f32.xlu0 %v3004
    %v3006 = vpop.xlane.xlu0 %3005
    %v3007 = vmul.f32 %v3003, %v1218
    %v3008 = vmul.f32 %v3006, %v1218
    %v3009 = vsub.f32 %v2999, %v3007
    %v3010 = vsub.f32 %v3000, %v3008
    %v3011 = vmul.f32 %v3009, %v3009
    %v3012 = vmul.f32 %v3010, %v3010
    %v3013 = vsel %vm860, %v3011, 0.0
    %3014 = vadd.xlane.f32.xlu0 %v3013
    %v3015 = vpop.xlane.xlu0 %3014
    %v3016 = vsel %vm860, %v3012, 0.0
    %3017 = vadd.xlane.f32.xlu0 %v3016
    %v3018 = vpop.xlane.xlu0 %3017
    %v3019 = vmul.f32 %v3015, %v1218
    %v3020 = vmul.f32 %v3018, %v1218
    %v3021 = vadd.f32 %v3019, 1e-05
    %v3022 = vadd.f32 %v3020, 1e-05
    %v3023 = vrsqrt.pop %v3021
    %v3024 = vmul.f32 %v3023, %v3021
    %v3025 = vmul.f32 %v3024, %v3023
    %v3026 = vmul.f32 0.5, %v3025
    %v3027 = vsub.f32 1.5, %v3026
    %v3028 = vmul.f32 %v3023, %v3027
    %vm3029 = vweird.f32 %v3021
    %vm3030 = vweird.f32 %v3023
    %vm3031 = vmor %vm3029, %vm3030
    %v3032 = vsel %vm3031, %v3023, %v3028
    %v3033 = vrsqrt.pop %v3022
    %v3034 = vmul.f32 %v3033, %v3022
    %v3035 = vmul.f32 %v3034, %v3033
    %v3036 = vmul.f32 0.5, %v3035
    %v3037 = vsub.f32 1.5, %v3036
    %v3038 = vmul.f32 %v3033, %v3037
    %vm3039 = vweird.f32 %v3022
    %vm3040 = vweird.f32 %v3033
    %vm3041 = vmor %vm3039, %vm3040
    %v3042 = vsel %vm3041, %v3033, %v3038
    %v3043 = vmul.f32 %v3009, %v3032
    %v3044 = vmul.f32 %v3010, %v3042
    %v3046 = vperm.slane %v741, 0
    %v3048 = vmul.f32 %v3043, %v3046
    %v3049 = vmul.f32 %v3044, %v3046
    %v3051 = vperm.slane %v740, 0
    %v3053 = vadd.f32 %v3048, %v3051
    %v3054 = vadd.f32 %v3049, %v3051
    %v3056 = vsel %vm860, %v3053, 0
    %v3059 = vsel %vm860, %v3054, 0
    %3061 = vmatpush.msra.mxu0 0.0
    %3062 = vmatpush.msra.mxu0 0.0
    %3063 = vmatpush.msra.mxu0 0.0
    %3064 = vmatpush.msra.mxu0 0.0
    %3065 = vmatpush.msra.mxu0 0.0
    %3066 = vmatpush.msra.mxu0 0.0
    %3067 = vmatpush.msra.mxu0 0.0
    %3068 = vmatpush.msra.mxu0 0.0
    %3069 = vmatpush.msra.mxu0 0.0
    %3070 = vmatpush.msra.mxu0 0.0
    %3071 = vmatpush.msra.mxu0 0.0
    %3072 = vmatpush.msra.mxu0 0.0
    %3073 = vmatpush.msra.mxu0 %v782
    %3074 = vmatpush.msra.mxu0 %v781
    %3075 = vmatpush.msra.mxu0 %v780
    %3076 = vmatpush.msra.mxu0 %v779
    %3077 = vmatmul.f32.gmra.mxu0 %v3056
    %v3078 = vpop.f32.mrf.mxu0
    %v3079 = vadd.f32 %v2076, %v3078
    %3080 = vmatmul.f32.gmra.mxu0 %v3059
    %v3081 = vpop.f32.mrf.mxu0
    %v3082 = vadd.f32 %v2076, %v3081
    %3083 = vdwg.mxu0
    %vm3084 = vcmp.gt.f32.partialorder %v3079, 0.0
    %vm3085 = vcmp.gt.f32.partialorder %v3082, 0.0
    %v3086 = vadd.f32 %v3079, 1.0
    %v3087 = vadd.f32 %v3082, 1.0
    %v3088 = vmul.f32 %v3079, 1.442695
    %v3089 = vpow.pop %v3088
    %v3090 = vmul.f32 %v3082, 1.442695
    %v3091 = vpow.pop %v3090
    %v3092 = vsel %vm3084, %v3086, %v3089
    %v3093 = vsel %vm3085, %v3087, %v3091
    %3095 = vrot.lane.b32.xlu0 %v3092, 96
    %v3096 = vpop.permute.xlu0 %3095
    %v3097 = vsel %vm903, %v3092, 0
    %v3099 = vsel %vm903, %v3096, 0
    %3101 = vmatpush.xpose.msra.mxu0 0.0
    %3102 = vmatpush.xpose.msra.mxu0 0.0
    %3103 = vmatpush.xpose.msra.mxu0 0.0
    %3104 = vmatpush.xpose.msra.mxu0 0.0
    %3105 = vmatpush.xpose.msra.mxu0 0.0
    %3106 = vmatpush.xpose.msra.mxu0 0.0
    %3107 = vmatpush.xpose.msra.mxu0 0.0
    %3108 = vmatpush.xpose.msra.mxu0 0.0
    %3109 = vmatpush.xpose.msra.mxu0 0.0
    %3110 = vmatpush.xpose.msra.mxu0 0.0
    %3111 = vmatpush.xpose.msra.mxu0 0.0
    %3112 = vmatpush.xpose.msra.mxu0 0.0
    %3113 = vmatpush.xpose.msra.mxu0 0.0
    %3114 = vmatpush.xpose.msra.mxu0 0.0
    %3115 = vmatpush.xpose.msra.mxu0 0.0
    %3116 = vmatpush.xpose.msra.mxu0 %v3099
    %3117 = vmatmul.f32.gmra.mxu0 %v3097
    %v3118 = vpop.f32.mrf.mxu0
    %v3119 = vadd.f32 0.0, %v3118
    %3120 = vdwg.mxu0
    %3122 = vrot.lane.b32.xlu0 %v3093, 96
    %v3123 = vpop.permute.xlu0 %3122
    %v3124 = vsel %vm903, %v3093, 0
    %v3126 = vsel %vm903, %v3123, 0
    %3128 = vmatpush.xpose.msra.mxu0 0.0
    %3129 = vmatpush.xpose.msra.mxu0 0.0
    %3130 = vmatpush.xpose.msra.mxu0 0.0
    %3131 = vmatpush.xpose.msra.mxu0 0.0
    %3132 = vmatpush.xpose.msra.mxu0 0.0
    %3133 = vmatpush.xpose.msra.mxu0 0.0
    %3134 = vmatpush.xpose.msra.mxu0 0.0
    %3135 = vmatpush.xpose.msra.mxu0 0.0
    %3136 = vmatpush.xpose.msra.mxu0 0.0
    %3137 = vmatpush.xpose.msra.mxu0 0.0
    %3138 = vmatpush.xpose.msra.mxu0 0.0
    %3139 = vmatpush.xpose.msra.mxu0 0.0
    %3140 = vmatpush.xpose.msra.mxu0 0.0
    %3141 = vmatpush.xpose.msra.mxu0 0.0
    %3142 = vmatpush.xpose.msra.mxu0 0.0
    %3143 = vmatpush.xpose.msra.mxu0 %v3126
    %3144 = vmatmul.f32.gmra.mxu0 %v3124
    %v3145 = vpop.f32.mrf.mxu0
    %v3146 = vadd.f32 0.0, %v3145
    %3147 = vdwg.mxu0
    %v3148 = vmul.f32 %v3119, %v2038
    %v3149 = vmul.f32 %v3146, %v2038
    %v3150 = vsel %vm825, %v3148, 0.0
    %3151 = vadd.xlane.f32.xlu0 %v3150
    %v3152 = vpop.xlane.xlu0 %3151
    %v3153 = vsel %vm825, %v3149, 0.0
    %3154 = vadd.xlane.f32.xlu0 %v3153
    %v3155 = vpop.xlane.xlu0 %3154
    %v3156 = vadd.f32 %v3152, 1e-06
    %v3157 = vadd.f32 %v3155, 1e-06
    %v3158 = vrcp.pop %v3156
    %v3159 = vrcp.pop %v3157
    %v3160 = vmul.f32 %v3148, %v3158
    %v3161 = vmul.f32 %v3149, %v3159
    %3163 = vrot.lane.b32.xlu0 %v3079, 64
    %v3164 = vpop.permute.xlu0 %3163
    %v3167 = vsel %vm825, %v3160, 0
    %3169 = vmatpush.msra.mxu0 0.0
    %3170 = vmatpush.msra.mxu0 0.0
    %3171 = vmatpush.msra.mxu0 0.0
    %3172 = vmatpush.msra.mxu0 0.0
    %3173 = vmatpush.msra.mxu0 0.0
    %3174 = vmatpush.msra.mxu0 0.0
    %3175 = vmatpush.msra.mxu0 0.0
    %3176 = vmatpush.msra.mxu0 0.0
    %3177 = vmatpush.msra.mxu0 0.0
    %3178 = vmatpush.msra.mxu0 0.0
    %3179 = vmatpush.msra.mxu0 0.0
    %3180 = vmatpush.msra.mxu0 0.0
    %3181 = vmatpush.msra.mxu0 0.0
    %3182 = vmatpush.msra.mxu0 0.0
    %3183 = vmatpush.msra.mxu0 0.0
    %3184 = vmatpush.msra.mxu0 %v3164
    %3185 = vmatmul.f32.gmra.mxu0 %v3167
    %v3186 = vpop.f32.mrf.mxu0
    %v3187 = vadd.f32 0.0, %v3186
    %3188 = vdwg.mxu0
    %3190 = vrot.lane.b32.xlu0 %v3082, 64
    %v3191 = vpop.permute.xlu0 %3190
    %v3194 = vsel %vm825, %v3161, 0
    %3196 = vmatpush.msra.mxu0 0.0
    %3197 = vmatpush.msra.mxu0 0.0
    %3198 = vmatpush.msra.mxu0 0.0
    %3199 = vmatpush.msra.mxu0 0.0
    %3200 = vmatpush.msra.mxu0 0.0
    %3201 = vmatpush.msra.mxu0 0.0
    %3202 = vmatpush.msra.mxu0 0.0
    %3203 = vmatpush.msra.mxu0 0.0
    %3204 = vmatpush.msra.mxu0 0.0
    %3205 = vmatpush.msra.mxu0 0.0
    %3206 = vmatpush.msra.mxu0 0.0
    %3207 = vmatpush.msra.mxu0 0.0
    %3208 = vmatpush.msra.mxu0 0.0
    %3209 = vmatpush.msra.mxu0 0.0
    %3210 = vmatpush.msra.mxu0 0.0
    %3211 = vmatpush.msra.mxu0 %v3191
    %3212 = vmatmul.f32.gmra.mxu0 %v3194
    %v3213 = vpop.f32.mrf.mxu0
    %v3214 = vadd.f32 0.0, %v3213
    %3215 = vdwg.mxu0
    %3216 = vrot.lane.b32.xlu0 %v3092, 112
    %v3217 = vpop.permute.xlu0 %3216
    %3218 = vrot.lane.b32.xlu0 %v3092, 80
    %v3219 = vpop.permute.xlu0 %3218
    %v3220 = vsel %vm903, %v3217, 0
    %v3222 = vsel %vm903, %v3219, 0
    %3224 = vmatpush.xpose.msra.mxu0 0.0
    %3225 = vmatpush.xpose.msra.mxu0 0.0
    %3226 = vmatpush.xpose.msra.mxu0 0.0
    %3227 = vmatpush.xpose.msra.mxu0 0.0
    %3228 = vmatpush.xpose.msra.mxu0 0.0
    %3229 = vmatpush.xpose.msra.mxu0 0.0
    %3230 = vmatpush.xpose.msra.mxu0 0.0
    %3231 = vmatpush.xpose.msra.mxu0 0.0
    %3232 = vmatpush.xpose.msra.mxu0 0.0
    %3233 = vmatpush.xpose.msra.mxu0 0.0
    %3234 = vmatpush.xpose.msra.mxu0 0.0
    %3235 = vmatpush.xpose.msra.mxu0 0.0
    %3236 = vmatpush.xpose.msra.mxu0 0.0
    %3237 = vmatpush.xpose.msra.mxu0 0.0
    %3238 = vmatpush.xpose.msra.mxu0 0.0
    %3239 = vmatpush.xpose.msra.mxu0 %v3222
    %3240 = vmatmul.f32.gmra.mxu0 %v3220
    %v3241 = vpop.f32.mrf.mxu0
    %v3242 = vadd.f32 0.0, %v3241
    %3243 = vdwg.mxu0
    %3244 = vrot.lane.b32.xlu0 %v3093, 112
    %v3245 = vpop.permute.xlu0 %3244
    %3246 = vrot.lane.b32.xlu0 %v3093, 80
    %v3247 = vpop.permute.xlu0 %3246
    %v3248 = vsel %vm903, %v3245, 0
    %v3250 = vsel %vm903, %v3247, 0
    %3252 = vmatpush.xpose.msra.mxu0 0.0
    %3253 = vmatpush.xpose.msra.mxu0 0.0
    %3254 = vmatpush.xpose.msra.mxu0 0.0
    %3255 = vmatpush.xpose.msra.mxu0 0.0
    %3256 = vmatpush.xpose.msra.mxu0 0.0
    %3257 = vmatpush.xpose.msra.mxu0 0.0
    %3258 = vmatpush.xpose.msra.mxu0 0.0
    %3259 = vmatpush.xpose.msra.mxu0 0.0
    %3260 = vmatpush.xpose.msra.mxu0 0.0
    %3261 = vmatpush.xpose.msra.mxu0 0.0
    %3262 = vmatpush.xpose.msra.mxu0 0.0
    %3263 = vmatpush.xpose.msra.mxu0 0.0
    %3264 = vmatpush.xpose.msra.mxu0 0.0
    %3265 = vmatpush.xpose.msra.mxu0 0.0
    %3266 = vmatpush.xpose.msra.mxu0 0.0
    %3267 = vmatpush.xpose.msra.mxu0 %v3250
    %3268 = vmatmul.f32.gmra.mxu0 %v3248
    %v3269 = vpop.f32.mrf.mxu0
    %v3270 = vadd.f32 0.0, %v3269
    %3271 = vdwg.mxu0
    %v3272 = vmul.f32 %v3242, %v2038
    %v3273 = vmul.f32 %v3270, %v2038
    %v3274 = vsel %vm825, %v3272, 0.0
    %3275 = vadd.xlane.f32.xlu0 %v3274
    %v3276 = vpop.xlane.xlu0 %3275
    %v3277 = vsel %vm825, %v3273, 0.0
    %3278 = vadd.xlane.f32.xlu0 %v3277
    %v3279 = vpop.xlane.xlu0 %3278
    %v3280 = vadd.f32 %v3276, 1e-06
    %v3281 = vadd.f32 %v3279, 1e-06
    %v3282 = vrcp.pop %v3280
    %v3283 = vrcp.pop %v3281
    %v3284 = vmul.f32 %v3272, %v3282
    %v3285 = vmul.f32 %v3273, %v3283
    %3286 = vrot.lane.b32.xlu0 %v3079, 48
    %v3287 = vpop.permute.xlu0 %3286
    %v3290 = vsel %vm825, %v3284, 0
    %3292 = vmatpush.msra.mxu0 0.0
    %3293 = vmatpush.msra.mxu0 0.0
    %3294 = vmatpush.msra.mxu0 0.0
    %3295 = vmatpush.msra.mxu0 0.0
    %3296 = vmatpush.msra.mxu0 0.0
    %3297 = vmatpush.msra.mxu0 0.0
    %3298 = vmatpush.msra.mxu0 0.0
    %3299 = vmatpush.msra.mxu0 0.0
    %3300 = vmatpush.msra.mxu0 0.0
    %3301 = vmatpush.msra.mxu0 0.0
    %3302 = vmatpush.msra.mxu0 0.0
    %3303 = vmatpush.msra.mxu0 0.0
    %3304 = vmatpush.msra.mxu0 0.0
    %3305 = vmatpush.msra.mxu0 0.0
    %3306 = vmatpush.msra.mxu0 0.0
    %3307 = vmatpush.msra.mxu0 %v3287
    %3308 = vmatmul.f32.gmra.mxu0 %v3290
    %v3309 = vpop.f32.mrf.mxu0
    %v3310 = vadd.f32 0.0, %v3309
    %3311 = vdwg.mxu0
    %3312 = vrot.lane.b32.xlu0 %v3082, 48
    %v3313 = vpop.permute.xlu0 %3312
    %v3316 = vsel %vm825, %v3285, 0
    %3318 = vmatpush.msra.mxu0 0.0
    %3319 = vmatpush.msra.mxu0 0.0
    %3320 = vmatpush.msra.mxu0 0.0
    %3321 = vmatpush.msra.mxu0 0.0
    %3322 = vmatpush.msra.mxu0 0.0
    %3323 = vmatpush.msra.mxu0 0.0
    %3324 = vmatpush.msra.mxu0 0.0
    %3325 = vmatpush.msra.mxu0 0.0
    %3326 = vmatpush.msra.mxu0 0.0
    %3327 = vmatpush.msra.mxu0 0.0
    %3328 = vmatpush.msra.mxu0 0.0
    %3329 = vmatpush.msra.mxu0 0.0
    %3330 = vmatpush.msra.mxu0 0.0
    %3331 = vmatpush.msra.mxu0 0.0
    %3332 = vmatpush.msra.mxu0 0.0
    %3333 = vmatpush.msra.mxu0 %v3313
    %3334 = vmatmul.f32.gmra.mxu0 %v3316
    %v3335 = vpop.f32.mrf.mxu0
    %v3336 = vadd.f32 0.0, %v3335
    %3337 = vdwg.mxu0
    %v3339 = vsel %vm903, %v3310, 0
    %v3342 = vsel %vm903, %v3336, 0
    %3344 = vmatpush.msra.mxu0 0.0
    %3345 = vmatpush.msra.mxu0 0.0
    %3346 = vmatpush.msra.mxu0 0.0
    %3347 = vmatpush.msra.mxu0 0.0
    %3348 = vmatpush.msra.mxu0 0.0
    %3349 = vmatpush.msra.mxu0 0.0
    %3350 = vmatpush.msra.mxu0 0.0
    %3351 = vmatpush.msra.mxu0 0.0
    %3352 = vmatpush.msra.mxu0 0.0
    %3353 = vmatpush.msra.mxu0 0.0
    %3354 = vmatpush.msra.mxu0 0.0
    %3355 = vmatpush.msra.mxu0 0.0
    %3356 = vmatpush.msra.mxu0 0.0
    %3357 = vmatpush.msra.mxu0 0.0
    %3358 = vmatpush.msra.mxu0 %v778
    %3359 = vmatpush.msra.mxu0 %v777
    %3360 = vmatmul.f32.gmra.mxu0 %v3339
    %v3361 = vpop.f32.mrf.mxu0
    %v3362 = vadd.f32 0.0, %v3361
    %3363 = vmatmul.f32.gmra.mxu0 %v3342
    %v3364 = vpop.f32.mrf.mxu0
    %v3365 = vadd.f32 0.0, %v3364
    %3366 = vdwg.mxu0
    %v3368 = vsel %vm903, %v3187, 0
    %v3371 = vsel %vm903, %v3214, 0
    %3373 = vmatpush.msra.mxu0 0.0
    %3374 = vmatpush.msra.mxu0 0.0
    %3375 = vmatpush.msra.mxu0 0.0
    %3376 = vmatpush.msra.mxu0 0.0
    %3377 = vmatpush.msra.mxu0 0.0
    %3378 = vmatpush.msra.mxu0 0.0
    %3379 = vmatpush.msra.mxu0 0.0
    %3380 = vmatpush.msra.mxu0 0.0
    %3381 = vmatpush.msra.mxu0 0.0
    %3382 = vmatpush.msra.mxu0 0.0
    %3383 = vmatpush.msra.mxu0 0.0
    %3384 = vmatpush.msra.mxu0 0.0
    %3385 = vmatpush.msra.mxu0 0.0
    %3386 = vmatpush.msra.mxu0 0.0
    %3387 = vmatpush.msra.mxu0 %v776
    %3388 = vmatpush.msra.mxu0 %v775
    %3389 = vmatmul.f32.gmra.mxu0 %v3368
    %v3390 = vpop.f32.mrf.mxu0
    %v3391 = vadd.f32 %v3362, %v3390
    %3392 = vmatmul.f32.gmra.mxu0 %v3371
    %v3393 = vpop.f32.mrf.mxu0
    %v3394 = vadd.f32 %v3365, %v3393
    %3395 = vdwg.mxu0
    %v3396 = vadd.f32 %v3053, %v3391
    %v3397 = vadd.f32 %v3054, %v3394
    %v3398 = vadd.f32 %v3396, %v2422
    %v3399 = vadd.f32 %v3397, %v2422
    %v3400 = vsel %vm860, %v3398, 0.0
    %3401 = vadd.xlane.f32.xlu0 %v3400
    %v3402 = vpop.xlane.xlu0 %3401
    %v3403 = vsel %vm860, %v3399, 0.0
    %3404 = vadd.xlane.f32.xlu0 %v3403
    %v3405 = vpop.xlane.xlu0 %3404
    %v3406 = vmul.f32 %v3402, %v1218
    %v3407 = vmul.f32 %v3405, %v1218
    %v3408 = vsub.f32 %v3398, %v3406
    %v3409 = vsub.f32 %v3399, %v3407
    %v3410 = vmul.f32 %v3408, %v3408
    %v3411 = vmul.f32 %v3409, %v3409
    %v3412 = vsel %vm860, %v3410, 0.0
    %3413 = vadd.xlane.f32.xlu0 %v3412
    %v3414 = vpop.xlane.xlu0 %3413
    %v3415 = vsel %vm860, %v3411, 0.0
    %3416 = vadd.xlane.f32.xlu0 %v3415
    %v3417 = vpop.xlane.xlu0 %3416
    %v3418 = vmul.f32 %v3414, %v1218
    %v3419 = vmul.f32 %v3417, %v1218
    %v3420 = vadd.f32 %v3418, 1e-05
    %v3421 = vadd.f32 %v3419, 1e-05
    %v3422 = vrsqrt.pop %v3420
    %v3423 = vmul.f32 %v3422, %v3420
    %v3424 = vmul.f32 %v3423, %v3422
    %v3425 = vmul.f32 0.5, %v3424
    %v3426 = vsub.f32 1.5, %v3425
    %v3427 = vmul.f32 %v3422, %v3426
    %vm3428 = vweird.f32 %v3420
    %vm3429 = vweird.f32 %v3422
    %vm3430 = vmor %vm3428, %vm3429
    %v3431 = vsel %vm3430, %v3422, %v3427
    %v3432 = vrsqrt.pop %v3421
    %v3433 = vmul.f32 %v3432, %v3421
    %v3434 = vmul.f32 %v3433, %v3432
    %v3435 = vmul.f32 0.5, %v3434
    %v3436 = vsub.f32 1.5, %v3435
    %v3437 = vmul.f32 %v3432, %v3436
    %vm3438 = vweird.f32 %v3421
    %vm3439 = vweird.f32 %v3432
    %vm3440 = vmor %vm3438, %vm3439
    %v3441 = vsel %vm3440, %v3432, %v3437
    %v3442 = vmul.f32 %v3408, %v3431
    %v3443 = vmul.f32 %v3409, %v3441
    %v3444 = vmul.f32 %v3442, %v2471
    %v3445 = vmul.f32 %v3443, %v2471
    %v3446 = vadd.f32 %v3444, %v2476
    %v3447 = vadd.f32 %v3445, %v2476
    %v3449 = vsel %vm860, %v3446, 0
    %v3452 = vsel %vm860, %v3447, 0
    %3454 = vmatpush.msra.mxu0 0.0
    %3455 = vmatpush.msra.mxu0 0.0
    %3456 = vmatpush.msra.mxu0 0.0
    %3457 = vmatpush.msra.mxu0 0.0
    %3458 = vmatpush.msra.mxu0 0.0
    %3459 = vmatpush.msra.mxu0 0.0
    %3460 = vmatpush.msra.mxu0 0.0
    %3461 = vmatpush.msra.mxu0 0.0
    %3462 = vmatpush.msra.mxu0 0.0
    %3463 = vmatpush.msra.mxu0 0.0
    %3464 = vmatpush.msra.mxu0 0.0
    %3465 = vmatpush.msra.mxu0 0.0
    %3466 = vmatpush.msra.mxu0 %v756
    %3467 = vmatpush.msra.mxu0 %v755
    %3468 = vmatpush.msra.mxu0 %v754
    %3469 = vmatpush.msra.mxu0 %v753
    %3470 = vmatmul.f32.gmra.mxu0 %v3449
    %v3471 = vpop.f32.mrf.mxu0
    %v3472 = vadd.f32 %v2481, %v3471
    %3473 = vmatmul.f32.gmra.mxu0 %v3452
    %v3474 = vpop.f32.mrf.mxu0
    %v3475 = vadd.f32 %v2481, %v3474
    %3476 = vdwg.mxu0
    %vm3477 = vcmp.gt.f32.partialorder %v3472, 0.0
    %vm3478 = vcmp.gt.f32.partialorder %v3475, 0.0
    %v3479 = vadd.f32 %v3472, 1.0
    %v3480 = vadd.f32 %v3475, 1.0
    %v3481 = vmul.f32 %v3472, 1.442695
    %v3482 = vpow.pop %v3481
    %v3483 = vmul.f32 %v3475, 1.442695
    %v3484 = vpow.pop %v3483
    %v3485 = vsel %vm3477, %v3479, %v3482
    %v3486 = vsel %vm3478, %v3480, %v3484
    %v3488 = vsel %vm903, %v3485, 0
    %3490 = vmatpush.xpose.msra.mxu0 0.0
    %3491 = vmatpush.xpose.msra.mxu0 0.0
    %3492 = vmatpush.xpose.msra.mxu0 0.0
    %3493 = vmatpush.xpose.msra.mxu0 0.0
    %3494 = vmatpush.xpose.msra.mxu0 0.0
    %3495 = vmatpush.xpose.msra.mxu0 0.0
    %3496 = vmatpush.xpose.msra.mxu0 0.0
    %3497 = vmatpush.xpose.msra.mxu0 0.0
    %3498 = vmatpush.xpose.msra.mxu0 0.0
    %3499 = vmatpush.xpose.msra.mxu0 0.0
    %3500 = vmatpush.xpose.msra.mxu0 0.0
    %3501 = vmatpush.xpose.msra.mxu0 0.0
    %3502 = vmatpush.xpose.msra.mxu0 0.0
    %3503 = vmatpush.xpose.msra.mxu0 0.0
    %3504 = vmatpush.xpose.msra.mxu0 0.0
    %3505 = vmatpush.xpose.msra.mxu0 %v2526
    %3506 = vmatmul.f32.gmra.mxu0 %v3488
    %v3507 = vpop.f32.mrf.mxu0
    %v3508 = vadd.f32 0.0, %v3507
    %3509 = vdwg.mxu0
    %v3511 = vsel %vm903, %v3486, 0
    %3513 = vmatpush.xpose.msra.mxu0 0.0
    %3514 = vmatpush.xpose.msra.mxu0 0.0
    %3515 = vmatpush.xpose.msra.mxu0 0.0
    %3516 = vmatpush.xpose.msra.mxu0 0.0
    %3517 = vmatpush.xpose.msra.mxu0 0.0
    %3518 = vmatpush.xpose.msra.mxu0 0.0
    %3519 = vmatpush.xpose.msra.mxu0 0.0
    %3520 = vmatpush.xpose.msra.mxu0 0.0
    %3521 = vmatpush.xpose.msra.mxu0 0.0
    %3522 = vmatpush.xpose.msra.mxu0 0.0
    %3523 = vmatpush.xpose.msra.mxu0 0.0
    %3524 = vmatpush.xpose.msra.mxu0 0.0
    %3525 = vmatpush.xpose.msra.mxu0 0.0
    %3526 = vmatpush.xpose.msra.mxu0 0.0
    %3527 = vmatpush.xpose.msra.mxu0 0.0
    %3528 = vmatpush.xpose.msra.mxu0 %v2552
    %3529 = vmatmul.f32.gmra.mxu0 %v3511
    %v3530 = vpop.f32.mrf.mxu0
    %v3531 = vadd.f32 0.0, %v3530
    %3532 = vdwg.mxu0
    %v3533 = vsel %vm825, %v3508, 0.0
    %3534 = vadd.xlane.f32.xlu0 %v3533
    %v3535 = vpop.xlane.xlu0 %3534
    %v3536 = vsel %vm825, %v3531, 0.0
    %3537 = vadd.xlane.f32.xlu0 %v3536
    %v3538 = vpop.xlane.xlu0 %3537
    %v3539 = vadd.f32 %v3535, 1e-06
    %v3540 = vadd.f32 %v3538, 1e-06
    %v3541 = vrcp.pop %v3539
    %v3542 = vrcp.pop %v3540
    %v3543 = vmul.f32 %v3508, %v3541
    %v3544 = vmul.f32 %v3531, %v3542
    %v3546 = vsel %vm825, %v3543, 0
    %3548 = vmatpush.msra.mxu0 0.0
    %3549 = vmatpush.msra.mxu0 0.0
    %3550 = vmatpush.msra.mxu0 0.0
    %3551 = vmatpush.msra.mxu0 0.0
    %3552 = vmatpush.msra.mxu0 0.0
    %3553 = vmatpush.msra.mxu0 0.0
    %3554 = vmatpush.msra.mxu0 0.0
    %3555 = vmatpush.msra.mxu0 0.0
    %3556 = vmatpush.msra.mxu0 0.0
    %3557 = vmatpush.msra.mxu0 0.0
    %3558 = vmatpush.msra.mxu0 0.0
    %3559 = vmatpush.msra.mxu0 0.0
    %3560 = vmatpush.msra.mxu0 0.0
    %3561 = vmatpush.msra.mxu0 0.0
    %3562 = vmatpush.msra.mxu0 0.0
    %3563 = vmatpush.msra.mxu0 %v2588
    %3564 = vmatmul.f32.gmra.mxu0 %v3546
    %v3565 = vpop.f32.mrf.mxu0
    %v3566 = vadd.f32 0.0, %v3565
    %3567 = vdwg.mxu0
    %v3569 = vsel %vm825, %v3544, 0
    %3571 = vmatpush.msra.mxu0 0.0
    %3572 = vmatpush.msra.mxu0 0.0
    %3573 = vmatpush.msra.mxu0 0.0
    %3574 = vmatpush.msra.mxu0 0.0
    %3575 = vmatpush.msra.mxu0 0.0
    %3576 = vmatpush.msra.mxu0 0.0
    %3577 = vmatpush.msra.mxu0 0.0
    %3578 = vmatpush.msra.mxu0 0.0
    %3579 = vmatpush.msra.mxu0 0.0
    %3580 = vmatpush.msra.mxu0 0.0
    %3581 = vmatpush.msra.mxu0 0.0
    %3582 = vmatpush.msra.mxu0 0.0
    %3583 = vmatpush.msra.mxu0 0.0
    %3584 = vmatpush.msra.mxu0 0.0
    %3585 = vmatpush.msra.mxu0 0.0
    %3586 = vmatpush.msra.mxu0 %v2615
    %3587 = vmatmul.f32.gmra.mxu0 %v3569
    %v3588 = vpop.f32.mrf.mxu0
    %v3589 = vadd.f32 0.0, %v3588
    %3590 = vdwg.mxu0
    %3591 = vrot.lane.b32.xlu0 %v3485, 112
    %v3592 = vpop.permute.xlu0 %3591
    %v3593 = vsel %vm903, %v3592, 0
    %3595 = vmatpush.xpose.msra.mxu0 0.0
    %3596 = vmatpush.xpose.msra.mxu0 0.0
    %3597 = vmatpush.xpose.msra.mxu0 0.0
    %3598 = vmatpush.xpose.msra.mxu0 0.0
    %3599 = vmatpush.xpose.msra.mxu0 0.0
    %3600 = vmatpush.xpose.msra.mxu0 0.0
    %3601 = vmatpush.xpose.msra.mxu0 0.0
    %3602 = vmatpush.xpose.msra.mxu0 0.0
    %3603 = vmatpush.xpose.msra.mxu0 0.0
    %3604 = vmatpush.xpose.msra.mxu0 0.0
    %3605 = vmatpush.xpose.msra.mxu0 0.0
    %3606 = vmatpush.xpose.msra.mxu0 0.0
    %3607 = vmatpush.xpose.msra.mxu0 0.0
    %3608 = vmatpush.xpose.msra.mxu0 0.0
    %3609 = vmatpush.xpose.msra.mxu0 0.0
    %3610 = vmatpush.xpose.msra.mxu0 %v2646
    %3611 = vmatmul.f32.gmra.mxu0 %v3593
    %v3612 = vpop.f32.mrf.mxu0
    %v3613 = vadd.f32 0.0, %v3612
    %3614 = vdwg.mxu0
    %3615 = vrot.lane.b32.xlu0 %v3486, 112
    %v3616 = vpop.permute.xlu0 %3615
    %v3617 = vsel %vm903, %v3616, 0
    %3619 = vmatpush.xpose.msra.mxu0 0.0
    %3620 = vmatpush.xpose.msra.mxu0 0.0
    %3621 = vmatpush.xpose.msra.mxu0 0.0
    %3622 = vmatpush.xpose.msra.mxu0 0.0
    %3623 = vmatpush.xpose.msra.mxu0 0.0
    %3624 = vmatpush.xpose.msra.mxu0 0.0
    %3625 = vmatpush.xpose.msra.mxu0 0.0
    %3626 = vmatpush.xpose.msra.mxu0 0.0
    %3627 = vmatpush.xpose.msra.mxu0 0.0
    %3628 = vmatpush.xpose.msra.mxu0 0.0
    %3629 = vmatpush.xpose.msra.mxu0 0.0
    %3630 = vmatpush.xpose.msra.mxu0 0.0
    %3631 = vmatpush.xpose.msra.mxu0 0.0
    %3632 = vmatpush.xpose.msra.mxu0 0.0
    %3633 = vmatpush.xpose.msra.mxu0 0.0
    %3634 = vmatpush.xpose.msra.mxu0 %v2674
    %3635 = vmatmul.f32.gmra.mxu0 %v3617
    %v3636 = vpop.f32.mrf.mxu0
    %v3637 = vadd.f32 0.0, %v3636
    %3638 = vdwg.mxu0
    %v3639 = vsel %vm825, %v3613, 0.0
    %3640 = vadd.xlane.f32.xlu0 %v3639
    %v3641 = vpop.xlane.xlu0 %3640
    %v3642 = vsel %vm825, %v3637, 0.0
    %3643 = vadd.xlane.f32.xlu0 %v3642
    %v3644 = vpop.xlane.xlu0 %3643
    %v3645 = vadd.f32 %v3641, 1e-06
    %v3646 = vadd.f32 %v3644, 1e-06
    %v3647 = vrcp.pop %v3645
    %v3648 = vrcp.pop %v3646
    %v3649 = vmul.f32 %v3613, %v3647
    %v3650 = vmul.f32 %v3637, %v3648
    %v3652 = vsel %vm825, %v3649, 0
    %3654 = vmatpush.msra.mxu0 0.0
    %3655 = vmatpush.msra.mxu0 0.0
    %3656 = vmatpush.msra.mxu0 0.0
    %3657 = vmatpush.msra.mxu0 0.0
    %3658 = vmatpush.msra.mxu0 0.0
    %3659 = vmatpush.msra.mxu0 0.0
    %3660 = vmatpush.msra.mxu0 0.0
    %3661 = vmatpush.msra.mxu0 0.0
    %3662 = vmatpush.msra.mxu0 0.0
    %3663 = vmatpush.msra.mxu0 0.0
    %3664 = vmatpush.msra.mxu0 0.0
    %3665 = vmatpush.msra.mxu0 0.0
    %3666 = vmatpush.msra.mxu0 0.0
    %3667 = vmatpush.msra.mxu0 0.0
    %3668 = vmatpush.msra.mxu0 0.0
    %3669 = vmatpush.msra.mxu0 %v2709
    %3670 = vmatmul.f32.gmra.mxu0 %v3652
    %v3671 = vpop.f32.mrf.mxu0
    %v3672 = vadd.f32 0.0, %v3671
    %3673 = vdwg.mxu0
    %v3675 = vsel %vm825, %v3650, 0
    %3677 = vmatpush.msra.mxu0 0.0
    %3678 = vmatpush.msra.mxu0 0.0
    %3679 = vmatpush.msra.mxu0 0.0
    %3680 = vmatpush.msra.mxu0 0.0
    %3681 = vmatpush.msra.mxu0 0.0
    %3682 = vmatpush.msra.mxu0 0.0
    %3683 = vmatpush.msra.mxu0 0.0
    %3684 = vmatpush.msra.mxu0 0.0
    %3685 = vmatpush.msra.mxu0 0.0
    %3686 = vmatpush.msra.mxu0 0.0
    %3687 = vmatpush.msra.mxu0 0.0
    %3688 = vmatpush.msra.mxu0 0.0
    %3689 = vmatpush.msra.mxu0 0.0
    %3690 = vmatpush.msra.mxu0 0.0
    %3691 = vmatpush.msra.mxu0 0.0
    %3692 = vmatpush.msra.mxu0 %v2735
    %3693 = vmatmul.f32.gmra.mxu0 %v3675
    %v3694 = vpop.f32.mrf.mxu0
    %v3695 = vadd.f32 0.0, %v3694
    %3696 = vdwg.mxu0
    %v3698 = vsel %vm903, %v3672, 0
    %v3701 = vsel %vm903, %v3695, 0
    %3703 = vmatpush.msra.mxu0 0.0
    %3704 = vmatpush.msra.mxu0 0.0
    %3705 = vmatpush.msra.mxu0 0.0
    %3706 = vmatpush.msra.mxu0 0.0
    %3707 = vmatpush.msra.mxu0 0.0
    %3708 = vmatpush.msra.mxu0 0.0
    %3709 = vmatpush.msra.mxu0 0.0
    %3710 = vmatpush.msra.mxu0 0.0
    %3711 = vmatpush.msra.mxu0 0.0
    %3712 = vmatpush.msra.mxu0 0.0
    %3713 = vmatpush.msra.mxu0 0.0
    %3714 = vmatpush.msra.mxu0 0.0
    %3715 = vmatpush.msra.mxu0 0.0
    %3716 = vmatpush.msra.mxu0 0.0
    %3717 = vmatpush.msra.mxu0 %v752
    %3718 = vmatpush.msra.mxu0 %v751
    %3719 = vmatmul.f32.gmra.mxu0 %v3698
    %v3720 = vpop.f32.mrf.mxu0
    %v3721 = vadd.f32 0.0, %v3720
    %3722 = vmatmul.f32.gmra.mxu0 %v3701
    %v3723 = vpop.f32.mrf.mxu0
    %v3724 = vadd.f32 0.0, %v3723
    %3725 = vdwg.mxu0
    %v3727 = vsel %vm903, %v3566, 0
    %v3730 = vsel %vm903, %v3589, 0
    %3732 = vmatpush.msra.mxu0 0.0
    %3733 = vmatpush.msra.mxu0 0.0
    %3734 = vmatpush.msra.mxu0 0.0
    %3735 = vmatpush.msra.mxu0 0.0
    %3736 = vmatpush.msra.mxu0 0.0
    %3737 = vmatpush.msra.mxu0 0.0
    %3738 = vmatpush.msra.mxu0 0.0
    %3739 = vmatpush.msra.mxu0 0.0
    %3740 = vmatpush.msra.mxu0 0.0
    %3741 = vmatpush.msra.mxu0 0.0
    %3742 = vmatpush.msra.mxu0 0.0
    %3743 = vmatpush.msra.mxu0 0.0
    %3744 = vmatpush.msra.mxu0 0.0
    %3745 = vmatpush.msra.mxu0 0.0
    %3746 = vmatpush.msra.mxu0 %v750
    %3747 = vmatpush.msra.mxu0 %v749
    %3748 = vmatmul.f32.gmra.mxu0 %v3727
    %v3749 = vpop.f32.mrf.mxu0
    %v3750 = vadd.f32 %v3721, %v3749
    %3751 = vmatmul.f32.gmra.mxu0 %v3730
    %v3752 = vpop.f32.mrf.mxu0
    %v3753 = vadd.f32 %v3724, %v3752
    %3754 = vdwg.mxu0
    %v3755 = vadd.f32 %v3446, %v3750
    %v3756 = vadd.f32 %v3447, %v3753
    %v3757 = vadd.f32 %v3755, %v2821
    %v3758 = vadd.f32 %v3756, %v2821
    %v3759 = vsel %vm860, %v3757, 0.0
    %3760 = vadd.xlane.f32.xlu0 %v3759
    %v3761 = vpop.xlane.xlu0 %3760
    %v3762 = vsel %vm860, %v3758, 0.0
    %3763 = vadd.xlane.f32.xlu0 %v3762
    %v3764 = vpop.xlane.xlu0 %3763
    %v3765 = vmul.f32 %v3761, %v1218
    %v3766 = vmul.f32 %v3764, %v1218
    %v3767 = vsub.f32 %v3757, %v3765
    %v3768 = vsub.f32 %v3758, %v3766
    %v3769 = vmul.f32 %v3767, %v3767
    %v3770 = vmul.f32 %v3768, %v3768
    %v3771 = vsel %vm860, %v3769, 0.0
    %3772 = vadd.xlane.f32.xlu0 %v3771
    %v3773 = vpop.xlane.xlu0 %3772
    %v3774 = vsel %vm860, %v3770, 0.0
    %3775 = vadd.xlane.f32.xlu0 %v3774
    %v3776 = vpop.xlane.xlu0 %3775
    %v3777 = vmul.f32 %v3773, %v1218
    %v3778 = vmul.f32 %v3776, %v1218
    %v3779 = vadd.f32 %v3777, 1e-05
    %v3780 = vadd.f32 %v3778, 1e-05
    %v3781 = vrsqrt.pop %v3779
    %v3782 = vmul.f32 %v3781, %v3779
    %v3783 = vmul.f32 %v3782, %v3781
    %v3784 = vmul.f32 0.5, %v3783
    %v3785 = vsub.f32 1.5, %v3784
    %v3786 = vmul.f32 %v3781, %v3785
    %vm3787 = vweird.f32 %v3779
    %vm3788 = vweird.f32 %v3781
    %vm3789 = vmor %vm3787, %vm3788
    %v3790 = vsel %vm3789, %v3781, %v3786
    %v3791 = vrsqrt.pop %v3780
    %v3792 = vmul.f32 %v3791, %v3780
    %v3793 = vmul.f32 %v3792, %v3791
    %v3794 = vmul.f32 0.5, %v3793
    %v3795 = vsub.f32 1.5, %v3794
    %v3796 = vmul.f32 %v3791, %v3795
    %vm3797 = vweird.f32 %v3780
    %vm3798 = vweird.f32 %v3791
    %vm3799 = vmor %vm3797, %vm3798
    %v3800 = vsel %vm3799, %v3791, %v3796
    %v3801 = vmul.f32 %v3767, %v3790
    %v3802 = vmul.f32 %v3768, %v3800
    %v3803 = vmul.f32 %v3801, %v2870
    %v3804 = vmul.f32 %v3802, %v2870
    %v3805 = vadd.f32 %v3803, %v2875
    %v3806 = vadd.f32 %v3804, %v2875
    %v3808 = vsel %vm860, %v3805, 0
    %v3811 = vsel %vm860, %v3806, 0
    %3813 = vmatpush.msra.mxu0 0.0
    %3814 = vmatpush.msra.mxu0 0.0
    %3815 = vmatpush.msra.mxu0 0.0
    %3816 = vmatpush.msra.mxu0 0.0
    %3817 = vmatpush.msra.mxu0 0.0
    %3818 = vmatpush.msra.mxu0 0.0
    %3819 = vmatpush.msra.mxu0 0.0
    %3820 = vmatpush.msra.mxu0 0.0
    %3821 = vmatpush.msra.mxu0 0.0
    %3822 = vmatpush.msra.mxu0 0.0
    %3823 = vmatpush.msra.mxu0 0.0
    %3824 = vmatpush.msra.mxu0 0.0
    %3825 = vmatpush.msra.mxu0 %v761
    %3826 = vmatpush.msra.mxu0 %v760
    %3827 = vmatpush.msra.mxu0 %v759
    %3828 = vmatpush.msra.mxu0 %v758
    %3829 = vmatmul.f32.gmra.mxu0 %v3808
    %v3830 = vpop.f32.mrf.mxu0
    %v3831 = vadd.f32 %v2880, %v3830
    %3832 = vmatmul.f32.gmra.mxu0 %v3811
    %v3833 = vpop.f32.mrf.mxu0
    %v3834 = vadd.f32 %v2880, %v3833
    %3835 = vdwg.mxu0
    %v3836 = vmax.f32 %v3831, 0.0
    %v3837 = vmax.f32 %v3834, 0.0
    %v3839 = vsel %vm860, %v3836, 0
    %v3842 = vsel %vm860, %v3837, 0
    %3844 = vmatpush.msra.mxu0 0.0
    %3845 = vmatpush.msra.mxu0 0.0
    %3846 = vmatpush.msra.mxu0 0.0
    %3847 = vmatpush.msra.mxu0 0.0
    %3848 = vmatpush.msra.mxu0 0.0
    %3849 = vmatpush.msra.mxu0 0.0
    %3850 = vmatpush.msra.mxu0 0.0
    %3851 = vmatpush.msra.mxu0 0.0
    %3852 = vmatpush.msra.mxu0 0.0
    %3853 = vmatpush.msra.mxu0 0.0
    %3854 = vmatpush.msra.mxu0 0.0
    %3855 = vmatpush.msra.mxu0 0.0
    %3856 = vmatpush.msra.mxu0 %v766
    %3857 = vmatpush.msra.mxu0 %v765
    %3858 = vmatpush.msra.mxu0 %v764
    %3859 = vmatpush.msra.mxu0 %v763
    %3860 = vmatmul.f32.gmra.mxu0 %v3839
    %v3861 = vpop.f32.mrf.mxu0
    %v3862 = vadd.f32 %v2914, %v3861
    %3863 = vmatmul.f32.gmra.mxu0 %v3842
    %v3864 = vpop.f32.mrf.mxu0
    %v3865 = vadd.f32 %v2914, %v3864
    %3866 = vdwg.mxu0
    %v3867 = vadd.f32 %v3805, %v3862
    %v3868 = vadd.f32 %v3806, %v3865
    %v3869 = vsel %vm860, %v3867, 0.0
    %3870 = vadd.xlane.f32.xlu0 %v3869
    %v3871 = vpop.xlane.xlu0 %3870
    %v3872 = vsel %vm860, %v3868, 0.0
    %3873 = vadd.xlane.f32.xlu0 %v3872
    %v3874 = vpop.xlane.xlu0 %3873
    %v3875 = vmul.f32 %v3871, %v1218
    %v3876 = vmul.f32 %v3874, %v1218
    %v3877 = vsub.f32 %v3867, %v3875
    %v3878 = vsub.f32 %v3868, %v3876
    %v3879 = vmul.f32 %v3877, %v3877
    %v3880 = vmul.f32 %v3878, %v3878
    %v3881 = vsel %vm860, %v3879, 0.0
    %3882 = vadd.xlane.f32.xlu0 %v3881
    %v3883 = vpop.xlane.xlu0 %3882
    %v3884 = vsel %vm860, %v3880, 0.0
    %3885 = vadd.xlane.f32.xlu0 %v3884
    %v3886 = vpop.xlane.xlu0 %3885
    %v3887 = vmul.f32 %v3883, %v1218
    %v3888 = vmul.f32 %v3886, %v1218
    %v3889 = vadd.f32 %v3887, 1e-05
    %v3890 = vadd.f32 %v3888, 1e-05
    %v3891 = vrsqrt.pop %v3889
    %v3892 = vmul.f32 %v3891, %v3889
    %v3893 = vmul.f32 %v3892, %v3891
    %v3894 = vmul.f32 0.5, %v3893
    %v3895 = vsub.f32 1.5, %v3894
    %v3896 = vmul.f32 %v3891, %v3895
    %vm3897 = vweird.f32 %v3889
    %vm3898 = vweird.f32 %v3891
    %vm3899 = vmor %vm3897, %vm3898
    %v3900 = vsel %vm3899, %v3891, %v3896
    %v3901 = vrsqrt.pop %v3890
    %v3902 = vmul.f32 %v3901, %v3890
    %v3903 = vmul.f32 %v3902, %v3901
    %v3904 = vmul.f32 0.5, %v3903
    %v3905 = vsub.f32 1.5, %v3904
    %v3906 = vmul.f32 %v3901, %v3905
    %vm3907 = vweird.f32 %v3890
    %vm3908 = vweird.f32 %v3901
    %vm3909 = vmor %vm3907, %vm3908
    %v3910 = vsel %vm3909, %v3901, %v3906
    %v3911 = vmul.f32 %v3877, %v3900
    %v3912 = vmul.f32 %v3878, %v3910
    %v3913 = vmul.f32 %v3911, %v2992
    %v3914 = vmul.f32 %v3912, %v2992
    %v3915 = vadd.f32 %v3913, %v2997
    %v3916 = vadd.f32 %v3914, %v2997
    %v3917 = vsel %vm860, %v3915, 0.0
    %3918 = vadd.xlane.f32.xlu0 %v3917
    %v3919 = vpop.xlane.xlu0 %3918
    %v3920 = vsel %vm860, %v3916, 0.0
    %3921 = vadd.xlane.f32.xlu0 %v3920
    %v3922 = vpop.xlane.xlu0 %3921
    %v3923 = vmul.f32 %v3919, %v1218
    %v3924 = vmul.f32 %v3922, %v1218
    %v3925 = vsub.f32 %v3915, %v3923
    %v3926 = vsub.f32 %v3916, %v3924
    %v3927 = vmul.f32 %v3925, %v3925
    %v3928 = vmul.f32 %v3926, %v3926
    %v3929 = vsel %vm860, %v3927, 0.0
    %3930 = vadd.xlane.f32.xlu0 %v3929
    %v3931 = vpop.xlane.xlu0 %3930
    %v3932 = vsel %vm860, %v3928, 0.0
    %3933 = vadd.xlane.f32.xlu0 %v3932
    %v3934 = vpop.xlane.xlu0 %3933
    %v3935 = vmul.f32 %v3931, %v1218
    %v3936 = vmul.f32 %v3934, %v1218
    %v3937 = vadd.f32 %v3935, 1e-05
    %v3938 = vadd.f32 %v3936, 1e-05
    %v3939 = vrsqrt.pop %v3937
    %v3940 = vmul.f32 %v3939, %v3937
    %v3941 = vmul.f32 %v3940, %v3939
    %v3942 = vmul.f32 0.5, %v3941
    %v3943 = vsub.f32 1.5, %v3942
    %v3944 = vmul.f32 %v3939, %v3943
    %vm3945 = vweird.f32 %v3937
    %vm3946 = vweird.f32 %v3939
    %vm3947 = vmor %vm3945, %vm3946
    %v3948 = vsel %vm3947, %v3939, %v3944
    %v3949 = vrsqrt.pop %v3938
    %v3950 = vmul.f32 %v3949, %v3938
    %v3951 = vmul.f32 %v3950, %v3949
    %v3952 = vmul.f32 0.5, %v3951
    %v3953 = vsub.f32 1.5, %v3952
    %v3954 = vmul.f32 %v3949, %v3953
    %vm3955 = vweird.f32 %v3938
    %vm3956 = vweird.f32 %v3949
    %vm3957 = vmor %vm3955, %vm3956
    %v3958 = vsel %vm3957, %v3949, %v3954
    %v3959 = vmul.f32 %v3925, %v3948
    %v3960 = vmul.f32 %v3926, %v3958
    %v3961 = vmul.f32 %v3959, %v3046
    %v3962 = vmul.f32 %v3960, %v3046
    %v3963 = vadd.f32 %v3961, %v3051
    %v3964 = vadd.f32 %v3962, %v3051
    %v3966 = vperm.slane %v809, 0
    %v3969 = vsel %vm860, %v3963, 0
    %v3972 = vsel %vm860, %v3964, 0
    %3974 = vmatpush.msra.mxu0 0.0
    %3975 = vmatpush.msra.mxu0 0.0
    %3976 = vmatpush.msra.mxu0 0.0
    %3977 = vmatpush.msra.mxu0 0.0
    %3978 = vmatpush.msra.mxu0 0.0
    %3979 = vmatpush.msra.mxu0 0.0
    %3980 = vmatpush.msra.mxu0 0.0
    %3981 = vmatpush.msra.mxu0 0.0
    %3982 = vmatpush.msra.mxu0 0.0
    %3983 = vmatpush.msra.mxu0 0.0
    %3984 = vmatpush.msra.mxu0 0.0
    %3985 = vmatpush.msra.mxu0 0.0
    %3986 = vmatpush.msra.mxu0 %v813
    %3987 = vmatpush.msra.mxu0 %v812
    %3988 = vmatpush.msra.mxu0 %v811
    %3989 = vmatpush.msra.mxu0 %v810
    %3990 = vmatmul.f32.gmra.mxu0 %v3969
    %v3991 = vpop.f32.mrf.mxu0
    %v3992 = vadd.f32 %v3966, %v3991
    %3993 = vmatmul.f32.gmra.mxu0 %v3972
    %v3994 = vpop.f32.mrf.mxu0
    %v3995 = vadd.f32 %v3966, %v3994
    %3996 = vdwg.mxu0
    %3997 = vst.msk [vmem:[#allocation62] sm:$0xff] %vm825, %v3992
    %3998 = vst.msk [vmem:[#allocation62 + $0x8] sm:$0xff] %vm825, %v3995
    // Predicated region
    $region342: #{_lambda_.1} parent=1 // pred_check
      _
    $region343: #{_lambda_.1} parent=1 // pred_check_branch
      %4000 = sbr.rel (0) target = $region345
    $region344: #{_lambda_.1} parent=1 // pred_region
      %4002 = vsyncadd [#allocation4], 0
      %s4003 = sshll.u32 [#allocation62], 4
      %s4004 = int_to_ptr.vmem [resolvable:$true] %s4003
      %s4005 = sshll.u32 %s93, 4
      %s4006 = int_to_ptr.hbm [resolvable:$true] %s4005
      %4011 = dma.vmem_to_hbm [thread:$0]  %s4004, 256, %s4006, [#allocation4], 128, 128, 8
    $region345: #{_lambda_.1} parent=1 // pred_fallthru
      _
    // Predicated region
    $region346: #{_lambda_.1} parent=1 // pred_check
      _
    $region347: #{_lambda_.1} parent=1 // pred_check_branch
      %4013 = sbr.rel (0) target = $region349
    $region348: #{_lambda_.1} parent=1 // pred_region
      %4015 = dma.done [#allocation4], 256
    $region349: #{_lambda_.1} parent=1 // pred_fallthru
      _
    %4016 = vsyncpa [#allocation3], 1
    %4017 = vsyncpa [#allocation6], 1
    %4018 = vsyncpa [#allocation9], 1
    %4019 = vsyncpa [#allocation12], 1
    %4020 = vsyncpa [#allocation15], 1
    %4021 = vsyncpa [#allocation18], 1
    %4022 = vsyncpa [#allocation21], 1
    %4023 = vsyncpa [#allocation24], 1
    %4024 = vsyncpa [#allocation27], 1
    %4025 = vsyncpa [#allocation30], 1
    %4026 = vsyncpa [#allocation33], 1
    %4027 = vsyncpa [#allocation36], 1
    %4028 = vsyncpa [#allocation39], 1
    %4029 = vsyncpa [#allocation42], 1
    %4030 = vsyncpa [#allocation45], 1
    %4031 = vsyncpa [#allocation48], 1
    %4032 = vsyncpa [#allocation51], 1
    %4033 = vsyncpa [#allocation54], 1
    %4034 = vsyncpa [#allocation57], 1
    %4035 = vsyncpa [#allocation60], 1
    %4036 = vsyncpa [#allocation4], 1

</llo_original>
